<compile_context>
chip_gen: v7x
topology: tpu7x:2x2x1
jax: 0.10.0
libtpu: 0.0.40
codegen_flags: <defaults>
</compile_context>

<pallas_src>
import functools
import math

import jax
import jax.numpy as jnp
from jax.experimental import pallas as pl
from jax.experimental.pallas import tpu as pltpu


def _round_up(x, m):
    return (x + m - 1) // m * m


# ----------------------------------------------------------------------------
# Pallas kernel: fused matmul + bias (+ residual) (+ ReLU)
#   - x/w/residual arrive in bf16, accumulate in f32 on the MXU
#   - bias is f32, epilogue is f32, output stored in out_ref.dtype (bf16)
# ----------------------------------------------------------------------------
def _fused_matmul_kernel(x_ref, w_ref, b_ref, *rest, relu, residual):
    if residual:
        r_ref, o_ref = rest
    else:
        (o_ref,) = rest
    acc = jnp.dot(x_ref[...], w_ref[...], preferred_element_type=jnp.float32)
    out = acc + b_ref[...]
    if residual:
        out = out + r_ref[...].astype(jnp.float32)
    if relu:
        out = jnp.maximum(out, 0.0)
    o_ref[...] = out.astype(o_ref.dtype)


def fused_matmul(x2d, w2d, bias, residual=None, relu=True, out_dtype=jnp.bfloat16):
    """out = relu?( (x2d @ w2d) + bias (+ residual) ), MXU bf16 in / f32 acc."""
    M, K = x2d.shape
    K2, Nc = w2d.shape
    assert K == K2

    # Lane-pad the output channel dim to a multiple of 128 (lane-dense stores,
    # fuller MXU N dimension); pad M up to a multiple of the row tile.
    Np = _round_up(Nc, 128)
    tm = 256 if M >= 256 else _round_up(M, 16)
    Mp = _round_up(M, tm)
    grid = (Mp // tm,)

    xb = x2d.astype(jnp.bfloat16)
    if Mp != M:
        xb = jnp.pad(xb, ((0, Mp - M), (0, 0)))
    wb = jnp.pad(w2d.astype(jnp.float32), ((0, 0), (0, Np - Nc))).astype(jnp.bfloat16)
    bb = jnp.pad(bias.astype(jnp.float32).reshape(1, Nc), ((0, 0), (0, Np - Nc)))

    inputs = [xb, wb, bb]
    in_specs = [
        pl.BlockSpec((tm, K), lambda i: (i, 0)),    # streamed row tiles
        pl.BlockSpec((K, Np), lambda i: (0, 0)),    # resident weights
        pl.BlockSpec((1, Np), lambda i: (0, 0)),    # resident bias
    ]
    if residual is not None:
        rb = residual.astype(jnp.bfloat16)
        rb = jnp.pad(rb, ((0, Mp - M), (0, Np - Nc)))
        inputs.append(rb)
        in_specs.append(pl.BlockSpec((tm, Np), lambda i: (i, 0)))

    kernel = functools.partial(
        _fused_matmul_kernel, relu=relu, residual=residual is not None
    )
    out = pl.pallas_call(
        kernel,
        out_shape=jax.ShapeDtypeStruct((Mp, Np), out_dtype),
        grid=grid,
        in_specs=in_specs,
        out_specs=pl.BlockSpec((tm, Np), lambda i: (i, 0)),
        compiler_params=pltpu.CompilerParams(
            dimension_semantics=("parallel",),
            vmem_limit_bytes=32 * 1024 * 1024,
        ),
    )(*inputs)
    return out[:M, :Nc]


# ----------------------------------------------------------------------------
# Glue: im2col, conv+bn wrapper, BasicBlock, full network
# ----------------------------------------------------------------------------
def im2col(x_nhwc, kh, kw, stride, padding):
    N, H, W, C = x_nhwc.shape
    xp = jnp.pad(x_nhwc, ((0, 0), (padding, padding), (padding, padding), (0, 0)))
    Ho = (H + 2 * padding - kh) // stride + 1
    Wo = (W + 2 * padding - kw) // stride + 1
    cols = []
    for i in range(kh):
        for j in range(kw):
            cols.append(xp[:, i:i + Ho * stride:stride, j:j + Wo * stride:stride, :])
    col = jnp.concatenate(cols, axis=-1)  # (N, Ho, Wo, kh*kw*C), K order = (kh,kw,Cin)
    return col.reshape(N * Ho * Wo, kh * kw * C), (N, Ho, Wo)


def conv_bn(x_nhwc, w_oihw, bn, stride, relu=True, residual=None):
    Cout, Cin, kh, kw = w_oihw.shape
    # OIHW -> (kh, kw, Cin, Cout) -> (kh*kw*Cin, Cout), matching im2col ordering
    w2d = jnp.transpose(w_oihw, (2, 3, 1, 0)).reshape(kh * kw * Cin, Cout)
    gamma, beta, mean, var = bn
    eps = 1e-5
    inv = gamma / jnp.sqrt(var + eps)
    w2d = w2d * inv[None, :]          # fold BN scale into the (tiny) weights
    bias = beta - mean * inv
    x2d, (N, Ho, Wo) = im2col(x_nhwc, kh, kw, stride, padding=1)
    res2d = None
    if residual is not None:
        res2d = residual.reshape(N * Ho * Wo, Cout)
    out = fused_matmul(x2d, w2d, bias, residual=res2d, relu=relu,
                       out_dtype=jnp.bfloat16)
    return out.reshape(N, Ho, Wo, Cout)


def basic_block(x_nhwc, p, stride):
    """BasicBlock (expansion=1, option-A zero-pad shortcut)."""
    in_c = x_nhwc.shape[-1]
    planes = p["conv1_w"].shape[0]
    if stride != 1 or in_c != planes:
        sc = x_nhwc[:, ::2, ::2, :]                      # x[:, :, ::2, ::2] in NCHW
        pad_lo = (planes - in_c) // 2                    # == planes//4 when in_c == planes//2
        pad_hi = planes - in_c - pad_lo
        sc = jnp.pad(sc, ((0, 0), (0, 0), (0, 0), (pad_lo, pad_hi)))
    else:
        sc = x_nhwc
    out = conv_bn(x_nhwc, p["conv1_w"], p["bn1"], stride, relu=True)
    # out = relu(bn2(conv2(out)) + shortcut(x)) — residual fused in the kernel
    out = conv_bn(out, p["conv2_w"], p["bn2"], 1, relu=True, residual=sc)
    return out


def resnet_mvm_forward(x_nchw, params, num_blocks=(1, 1, 1)):
    x = jnp.transpose(x_nchw, (0, 2, 3, 1)).astype(jnp.bfloat16)  # NCHW -> NHWC, bf16
    out = conv_bn(x, params["conv1_w"], params["bn1"], stride=1, relu=True)

    bi = 0
    for layer_idx, (planes, stride0) in enumerate(((16, 1), (32, 2), (64, 2))):
        strides = [stride0] + [1] * (num_blocks[layer_idx] - 1)
        for s in strides:
            out = basic_block(out, params["blocks"][bi], s)
            bi += 1

    # F.avg_pool2d over full spatial extent + flatten + Linear_mvm(64, classes).
    # Kept in plain jnp per perf review: the 2x64x10 matmul is ~1 KFLOP and a
    # pallas_call launch would cost far more than the compute.
    pooled = jnp.mean(out.astype(jnp.float32), axis=(1, 2))      # (N, 64)
    w, b = params["linear_w"], params["linear_b"]
    return pooled @ jnp.transpose(w) + b


# ----------------------------------------------------------------------------
# Deterministic parameter initialization (kaiming-normal, PyTorch-style)
# ----------------------------------------------------------------------------
def _kaiming_conv(key, cout, cin, kh, kw):
    fan_in = cin * kh * kw
    std = math.sqrt(2.0 / fan_in)
    return jax.random.normal(key, (cout, cin, kh, kw), jnp.float32) * std


def _bn_params(key, c):
    k1, k2, k3, k4 = jax.random.split(key, 4)
    gamma = 0.5 + jax.random.uniform(k1, (c,), jnp.float32)
    beta = 0.1 * jax.random.normal(k2, (c,), jnp.float32)
    mean = 0.1 * jax.random.normal(k3, (c,), jnp.float32)
    var = 0.5 + jax.random.uniform(k4, (c,), jnp.float32)
    return (gamma, beta, mean, var)


def init_params(key, num_blocks=(1, 1, 1), num_classes=10):
    keys = iter(jax.random.split(key, 64))
    params = {
        "conv1_w": _kaiming_conv(next(keys), 16, 3, 3, 3),
        "bn1": _bn_params(next(keys), 16),
        "blocks": [],
    }
    in_planes = 16
    for layer_idx, (planes, _) in enumerate(((16, 1), (32, 2), (64, 2))):
        for _ in range(num_blocks[layer_idx]):
            blk = {
                "conv1_w": _kaiming_conv(next(keys), planes, in_planes, 3, 3),
                "bn1": _bn_params(next(keys), planes),
                "conv2_w": _kaiming_conv(next(keys), planes, planes, 3, 3),
                "bn2": _bn_params(next(keys), planes),
            }
            params["blocks"].append(blk)
            in_planes = planes
    kw_, kb_ = next(keys), next(keys)
    params["linear_w"] = jax.random.normal(kw_, (num_classes, 64), jnp.float32) * math.sqrt(2.0 / 64)
    bound = 1.0 / math.sqrt(64)
    params["linear_b"] = jax.random.uniform(kb_, (num_classes,), jnp.float32, -bound, bound)
    return params


# ----------------------------------------------------------------------------
if __name__ == "__main__":
    key = jax.random.PRNGKey(0)
    kx, kp = jax.random.split(key)

    # Small CIFAR-like input: NCHW, 3 input channels as conv1 requires.
    x = jax.random.normal(kx, (2, 3, 16, 16), jnp.float32)
    params = init_params(kp, num_blocks=(1, 1, 1), num_classes=10)

    fwd = jax.jit(functools.partial(resnet_mvm_forward, num_blocks=(1, 1, 1)))
    out = fwd(x, params)
    out = jax.block_until_ready(out)
    assert out.shape == (2, 10), out.shape
    assert bool(jnp.all(jnp.isfinite(out)))
    print("KERNEL_OK")
</pallas_src>

<mosaic_0001>
module attributes {stable_mosaic.version = 11 : i64} {
  func.func @_fused_matmul_kernel(%arg0: i32, %arg1: memref<256x27xbf16, #tpu.memory_space<vmem>>, %arg2: memref<27x128xbf16, #tpu.memory_space<vmem>>, %arg3: memref<1x128xf32, #tpu.memory_space<vmem>>, %arg4: memref<256x128xbf16, #tpu.memory_space<vmem>>) attributes {dimension_semantics = [#tpu.dimension_semantics<parallel>], iteration_bounds = array<i64: 2>, scalar_prefetch = 0 : i64, scratch_operands = 0 : i64, tpu.core_type = #tpu.core_type<tc>, window_params = [{transform_indices = @transform_0, window_bounds = array<i64: 256, 27>}, {pipeline_mode = #tpu.pipeline_mode<synchronous>, transform_indices = @transform_1, window_bounds = array<i64: 27, 128>}, {pipeline_mode = #tpu.pipeline_mode<synchronous>, transform_indices = @transform_2, window_bounds = array<i64: 1, 128>}, {transform_indices = @transform_3, window_bounds = array<i64: 256, 128>}]} {
    %c0 = arith.constant 0 : index
    %c0_0 = arith.constant 0 : index
    %0 = vector.load %arg1[%c0, %c0_0] : memref<256x27xbf16, #tpu.memory_space<vmem>>, vector<256x27xbf16>
    %c0_1 = arith.constant 0 : index
    %c0_2 = arith.constant 0 : index
    %1 = vector.load %arg2[%c0_1, %c0_2] : memref<27x128xbf16, #tpu.memory_space<vmem>>, vector<27x128xbf16>
    %cst = arith.constant dense<0.000000e+00> : vector<256x128xf32>
    %2 = tpu.matmul %0, %1, %cst {dimension_numbers = #tpu.dot_dimension_numbers<[1], [0], [0], [1], [0, 0, 1, 1], [], []>} : vector<256x27xbf16>, vector<27x128xbf16>, vector<256x128xf32> -> vector<256x128xf32>
    %c0_3 = arith.constant 0 : index
    %c0_4 = arith.constant 0 : index
    %3 = vector.load %arg3[%c0_3, %c0_4] : memref<1x128xf32, #tpu.memory_space<vmem>>, vector<1x128xf32>
    %4 = vector.broadcast %3 : vector<1x128xf32> to vector<256x128xf32>
    %5 = arith.addf %2, %4 : vector<256x128xf32>
    %cst_5 = arith.constant 0.000000e+00 : f32
    %6 = vector.broadcast %cst_5 : f32 to vector<256x128xf32>
    %7 = arith.maximumf %5, %6 : vector<256x128xf32>
    %8 = arith.truncf %7 : vector<256x128xf32> to vector<256x128xbf16>
    %c0_6 = arith.constant 0 : index
    %c0_7 = arith.constant 0 : index
    %9 = vector.load %arg4[%c0_6, %c0_7] : memref<256x128xbf16, #tpu.memory_space<vmem>>, vector<256x128xbf16>
    tpu.vector_store %arg4[%c0_6, %c0_7], %8 {strides = array<i32>} : memref<256x128xbf16, #tpu.memory_space<vmem>>, vector<256x128xbf16>,
    return
  }
  func.func @transform_0(%arg0: i32) -> (i32, i32) {
    %c0_i32 = arith.constant 0 : i32
    %c0_i32_0 = arith.constant 0 : i32
    return %arg0, %c0_i32 : i32, i32
  }
  func.func @transform_1(%arg0: i32) -> (i32, i32) {
    %c0_i32 = arith.constant 0 : i32
    %c0_i32_0 = arith.constant 0 : i32
    %c0_i32_1 = arith.constant 0 : i32
    return %c0_i32, %c0_i32_0 : i32, i32
  }
  func.func @transform_2(%arg0: i32) -> (i32, i32) {
    %c0_i32 = arith.constant 0 : i32
    %c0_i32_0 = arith.constant 0 : i32
    %c0_i32_1 = arith.constant 0 : i32
    return %c0_i32, %c0_i32_0 : i32, i32
  }
  func.func @transform_3(%arg0: i32) -> (i32, i32) {
    %c0_i32 = arith.constant 0 : i32
    %c0_i32_0 = arith.constant 0 : i32
    return %arg0, %c0_i32 : i32, i32
  }
}

module attributes {stable_mosaic.version = 11 : i64} {
  func.func @_fused_matmul_kernel(%arg0: i32, %arg1: memref<256x144xbf16, #tpu.memory_space<vmem>>, %arg2: memref<144x128xbf16, #tpu.memory_space<vmem>>, %arg3: memref<1x128xf32, #tpu.memory_space<vmem>>, %arg4: memref<256x128xbf16, #tpu.memory_space<vmem>>) attributes {dimension_semantics = [#tpu.dimension_semantics<parallel>], iteration_bounds = array<i64: 2>, scalar_prefetch = 0 : i64, scratch_operands = 0 : i64, tpu.core_type = #tpu.core_type<tc>, window_params = [{transform_indices = @transform_0, window_bounds = array<i64: 256, 144>}, {pipeline_mode = #tpu.pipeline_mode<synchronous>, transform_indices = @transform_1, window_bounds = array<i64: 144, 128>}, {pipeline_mode = #tpu.pipeline_mode<synchronous>, transform_indices = @transform_2, window_bounds = array<i64: 1, 128>}, {transform_indices = @transform_3, window_bounds = array<i64: 256, 128>}]} {
    %c0 = arith.constant 0 : index
    %c0_0 = arith.constant 0 : index
    %0 = vector.load %arg1[%c0, %c0_0] : memref<256x144xbf16, #tpu.memory_space<vmem>>, vector<256x144xbf16>
    %c0_1 = arith.constant 0 : index
    %c0_2 = arith.constant 0 : index
    %1 = vector.load %arg2[%c0_1, %c0_2] : memref<144x128xbf16, #tpu.memory_space<vmem>>, vector<144x128xbf16>
    %cst = arith.constant dense<0.000000e+00> : vector<256x128xf32>
    %2 = tpu.matmul %0, %1, %cst {dimension_numbers = #tpu.dot_dimension_numbers<[1], [0], [0], [1], [0, 0, 1, 1], [], []>} : vector<256x144xbf16>, vector<144x128xbf16>, vector<256x128xf32> -> vector<256x128xf32>
    %c0_3 = arith.constant 0 : index
    %c0_4 = arith.constant 0 : index
    %3 = vector.load %arg3[%c0_3, %c0_4] : memref<1x128xf32, #tpu.memory_space<vmem>>, vector<1x128xf32>
    %4 = vector.broadcast %3 : vector<1x128xf32> to vector<256x128xf32>
    %5 = arith.addf %2, %4 : vector<256x128xf32>
    %cst_5 = arith.constant 0.000000e+00 : f32
    %6 = vector.broadcast %cst_5 : f32 to vector<256x128xf32>
    %7 = arith.maximumf %5, %6 : vector<256x128xf32>
    %8 = arith.truncf %7 : vector<256x128xf32> to vector<256x128xbf16>
    %c0_6 = arith.constant 0 : index
    %c0_7 = arith.constant 0 : index
    %9 = vector.load %arg4[%c0_6, %c0_7] : memref<256x128xbf16, #tpu.memory_space<vmem>>, vector<256x128xbf16>
    tpu.vector_store %arg4[%c0_6, %c0_7], %8 {strides = array<i32>} : memref<256x128xbf16, #tpu.memory_space<vmem>>, vector<256x128xbf16>,
    return
  }
  func.func @transform_0(%arg0: i32) -> (i32, i32) {
    %c0_i32 = arith.constant 0 : i32
    %c0_i32_0 = arith.constant 0 : i32
    return %arg0, %c0_i32 : i32, i32
  }
  func.func @transform_1(%arg0: i32) -> (i32, i32) {
    %c0_i32 = arith.constant 0 : i32
    %c0_i32_0 = arith.constant 0 : i32
    %c0_i32_1 = arith.constant 0 : i32
    return %c0_i32, %c0_i32_0 : i32, i32
  }
  func.func @transform_2(%arg0: i32) -> (i32, i32) {
    %c0_i32 = arith.constant 0 : i32
    %c0_i32_0 = arith.constant 0 : i32
    %c0_i32_1 = arith.constant 0 : i32
    return %c0_i32, %c0_i32_0 : i32, i32
  }
  func.func @transform_3(%arg0: i32) -> (i32, i32) {
    %c0_i32 = arith.constant 0 : i32
    %c0_i32_0 = arith.constant 0 : i32
    return %arg0, %c0_i32 : i32, i32
  }
}

module attributes {stable_mosaic.version = 11 : i64} {
  func.func @_fused_matmul_kernel(%arg0: i32, %arg1: memref<256x144xbf16, #tpu.memory_space<vmem>>, %arg2: memref<144x128xbf16, #tpu.memory_space<vmem>>, %arg3: memref<1x128xf32, #tpu.memory_space<vmem>>, %arg4: memref<256x128xbf16, #tpu.memory_space<vmem>>, %arg5: memref<256x128xbf16, #tpu.memory_space<vmem>>) attributes {dimension_semantics = [#tpu.dimension_semantics<parallel>], iteration_bounds = array<i64: 2>, scalar_prefetch = 0 : i64, scratch_operands = 0 : i64, tpu.core_type = #tpu.core_type<tc>, window_params = [{transform_indices = @transform_0, window_bounds = array<i64: 256, 144>}, {pipeline_mode = #tpu.pipeline_mode<synchronous>, transform_indices = @transform_1, window_bounds = array<i64: 144, 128>}, {pipeline_mode = #tpu.pipeline_mode<synchronous>, transform_indices = @transform_2, window_bounds = array<i64: 1, 128>}, {transform_indices = @transform_3, window_bounds = array<i64: 256, 128>}, {transform_indices = @transform_4, window_bounds = array<i64: 256, 128>}]} {
    %c0 = arith.constant 0 : index
    %c0_0 = arith.constant 0 : index
    %0 = vector.load %arg1[%c0, %c0_0] : memref<256x144xbf16, #tpu.memory_space<vmem>>, vector<256x144xbf16>
    %c0_1 = arith.constant 0 : index
    %c0_2 = arith.constant 0 : index
    %1 = vector.load %arg2[%c0_1, %c0_2] : memref<144x128xbf16, #tpu.memory_space<vmem>>, vector<144x128xbf16>
    %cst = arith.constant dense<0.000000e+00> : vector<256x128xf32>
    %2 = tpu.matmul %0, %1, %cst {dimension_numbers = #tpu.dot_dimension_numbers<[1], [0], [0], [1], [0, 0, 1, 1], [], []>} : vector<256x144xbf16>, vector<144x128xbf16>, vector<256x128xf32> -> vector<256x128xf32>
    %c0_3 = arith.constant 0 : index
    %c0_4 = arith.constant 0 : index
    %3 = vector.load %arg3[%c0_3, %c0_4] : memref<1x128xf32, #tpu.memory_space<vmem>>, vector<1x128xf32>
    %4 = vector.broadcast %3 : vector<1x128xf32> to vector<256x128xf32>
    %5 = arith.addf %2, %4 : vector<256x128xf32>
    %c0_5 = arith.constant 0 : index
    %c0_6 = arith.constant 0 : index
    %6 = vector.load %arg4[%c0_5, %c0_6] : memref<256x128xbf16, #tpu.memory_space<vmem>>, vector<256x128xbf16>
    %7 = arith.extf %6 : vector<256x128xbf16> to vector<256x128xf32>
    %8 = arith.addf %5, %7 : vector<256x128xf32>
    %cst_7 = arith.constant 0.000000e+00 : f32
    %9 = vector.broadcast %cst_7 : f32 to vector<256x128xf32>
    %10 = arith.maximumf %8, %9 : vector<256x128xf32>
    %11 = arith.truncf %10 : vector<256x128xf32> to vector<256x128xbf16>
    %c0_8 = arith.constant 0 : index
    %c0_9 = arith.constant 0 : index
    %12 = vector.load %arg5[%c0_8, %c0_9] : memref<256x128xbf16, #tpu.memory_space<vmem>>, vector<256x128xbf16>
    tpu.vector_store %arg5[%c0_8, %c0_9], %11 {strides = array<i32>} : memref<256x128xbf16, #tpu.memory_space<vmem>>, vector<256x128xbf16>,
    return
  }
  func.func @transform_0(%arg0: i32) -> (i32, i32) {
    %c0_i32 = arith.constant 0 : i32
    %c0_i32_0 = arith.constant 0 : i32
    return %arg0, %c0_i32 : i32, i32
  }
  func.func @transform_1(%arg0: i32) -> (i32, i32) {
    %c0_i32 = arith.constant 0 : i32
    %c0_i32_0 = arith.constant 0 : i32
    %c0_i32_1 = arith.constant 0 : i32
    return %c0_i32, %c0_i32_0 : i32, i32
  }
  func.func @transform_2(%arg0: i32) -> (i32, i32) {
    %c0_i32 = arith.constant 0 : i32
    %c0_i32_0 = arith.constant 0 : i32
    %c0_i32_1 = arith.constant 0 : i32
    return %c0_i32, %c0_i32_0 : i32, i32
  }
  func.func @transform_3(%arg0: i32) -> (i32, i32) {
    %c0_i32 = arith.constant 0 : i32
    %c0_i32_0 = arith.constant 0 : i32
    return %arg0, %c0_i32 : i32, i32
  }
  func.func @transform_4(%arg0: i32) -> (i32, i32) {
    %c0_i32 = arith.constant 0 : i32
    %c0_i32_0 = arith.constant 0 : i32
    return %arg0, %c0_i32 : i32, i32
  }
}

module attributes {stable_mosaic.version = 11 : i64} {
  func.func @_fused_matmul_kernel(%arg0: i32, %arg1: memref<128x144xbf16, #tpu.memory_space<vmem>>, %arg2: memref<144x128xbf16, #tpu.memory_space<vmem>>, %arg3: memref<1x128xf32, #tpu.memory_space<vmem>>, %arg4: memref<128x128xbf16, #tpu.memory_space<vmem>>) attributes {dimension_semantics = [#tpu.dimension_semantics<parallel>], iteration_bounds = array<i64: 1>, scalar_prefetch = 0 : i64, scratch_operands = 0 : i64, tpu.core_type = #tpu.core_type<tc>, window_params = [{transform_indices = @transform_0, window_bounds = array<i64: 128, 144>}, {pipeline_mode = #tpu.pipeline_mode<synchronous>, transform_indices = @transform_1, window_bounds = array<i64: 144, 128>}, {pipeline_mode = #tpu.pipeline_mode<synchronous>, transform_indices = @transform_2, window_bounds = array<i64: 1, 128>}, {transform_indices = @transform_3, window_bounds = array<i64: 128, 128>}]} {
    %c0 = arith.constant 0 : index
    %c0_0 = arith.constant 0 : index
    %0 = vector.load %arg1[%c0, %c0_0] : memref<128x144xbf16, #tpu.memory_space<vmem>>, vector<128x144xbf16>
    %c0_1 = arith.constant 0 : index
    %c0_2 = arith.constant 0 : index
    %1 = vector.load %arg2[%c0_1, %c0_2] : memref<144x128xbf16, #tpu.memory_space<vmem>>, vector<144x128xbf16>
    %cst = arith.constant dense<0.000000e+00> : vector<128x128xf32>
    %2 = tpu.matmul %0, %1, %cst {dimension_numbers = #tpu.dot_dimension_numbers<[1], [0], [0], [1], [0, 0, 1, 1], [], []>} : vector<128x144xbf16>, vector<144x128xbf16>, vector<128x128xf32> -> vector<128x128xf32>
    %c0_3 = arith.constant 0 : index
    %c0_4 = arith.constant 0 : index
    %3 = vector.load %arg3[%c0_3, %c0_4] : memref<1x128xf32, #tpu.memory_space<vmem>>, vector<1x128xf32>
    %4 = vector.broadcast %3 : vector<1x128xf32> to vector<128x128xf32>
    %5 = arith.addf %2, %4 : vector<128x128xf32>
    %cst_5 = arith.constant 0.000000e+00 : f32
    %6 = vector.broadcast %cst_5 : f32 to vector<128x128xf32>
    %7 = arith.maximumf %5, %6 : vector<128x128xf32>
    %8 = arith.truncf %7 : vector<128x128xf32> to vector<128x128xbf16>
    %c0_6 = arith.constant 0 : index
    %c0_7 = arith.constant 0 : index
    %9 = vector.load %arg4[%c0_6, %c0_7] : memref<128x128xbf16, #tpu.memory_space<vmem>>, vector<128x128xbf16>
    tpu.vector_store %arg4[%c0_6, %c0_7], %8 {strides = array<i32>} : memref<128x128xbf16, #tpu.memory_space<vmem>>, vector<128x128xbf16>,
    return
  }
  func.func @transform_0(%arg0: i32) -> (i32, i32) {
    %c0_i32 = arith.constant 0 : i32
    %c0_i32_0 = arith.constant 0 : i32
    return %arg0, %c0_i32 : i32, i32
  }
  func.func @transform_1(%arg0: i32) -> (i32, i32) {
    %c0_i32 = arith.constant 0 : i32
    %c0_i32_0 = arith.constant 0 : i32
    %c0_i32_1 = arith.constant 0 : i32
    return %c0_i32, %c0_i32_0 : i32, i32
  }
  func.func @transform_2(%arg0: i32) -> (i32, i32) {
    %c0_i32 = arith.constant 0 : i32
    %c0_i32_0 = arith.constant 0 : i32
    %c0_i32_1 = arith.constant 0 : i32
    return %c0_i32, %c0_i32_0 : i32, i32
  }
  func.func @transform_3(%arg0: i32) -> (i32, i32) {
    %c0_i32 = arith.constant 0 : i32
    %c0_i32_0 = arith.constant 0 : i32
    return %arg0, %c0_i32 : i32, i32
  }
}

module attributes {stable_mosaic.version = 11 : i64} {
  func.func @_fused_matmul_kernel(%arg0: i32, %arg1: memref<128x288xbf16, #tpu.memory_space<vmem>>, %arg2: memref<288x128xbf16, #tpu.memory_space<vmem>>, %arg3: memref<1x128xf32, #tpu.memory_space<vmem>>, %arg4: memref<128x128xbf16, #tpu.memory_space<vmem>>, %arg5: memref<128x128xbf16, #tpu.memory_space<vmem>>) attributes {dimension_semantics = [#tpu.dimension_semantics<parallel>], iteration_bounds = array<i64: 1>, scalar_prefetch = 0 : i64, scratch_operands = 0 : i64, tpu.core_type = #tpu.core_type<tc>, window_params = [{transform_indices = @transform_0, window_bounds = array<i64: 128, 288>}, {pipeline_mode = #tpu.pipeline_mode<synchronous>, transform_indices = @transform_1, window_bounds = array<i64: 288, 128>}, {pipeline_mode = #tpu.pipeline_mode<synchronous>, transform_indices = @transform_2, window_bounds = array<i64: 1, 128>}, {transform_indices = @transform_3, window_bounds = array<i64: 128, 128>}, {transform_indices = @transform_4, window_bounds = array<i64: 128, 128>}]} {
    %c0 = arith.constant 0 : index
    %c0_0 = arith.constant 0 : index
    %0 = vector.load %arg1[%c0, %c0_0] : memref<128x288xbf16, #tpu.memory_space<vmem>>, vector<128x288xbf16>
    %c0_1 = arith.constant 0 : index
    %c0_2 = arith.constant 0 : index
    %1 = vector.load %arg2[%c0_1, %c0_2] : memref<288x128xbf16, #tpu.memory_space<vmem>>, vector<288x128xbf16>
    %cst = arith.constant dense<0.000000e+00> : vector<128x128xf32>
    %2 = tpu.matmul %0, %1, %cst {dimension_numbers = #tpu.dot_dimension_numbers<[1], [0], [0], [1], [0, 0, 1, 1], [], []>} : vector<128x288xbf16>, vector<288x128xbf16>, vector<128x128xf32> -> vector<128x128xf32>
    %c0_3 = arith.constant 0 : index
    %c0_4 = arith.constant 0 : index
    %3 = vector.load %arg3[%c0_3, %c0_4] : memref<1x128xf32, #tpu.memory_space<vmem>>, vector<1x128xf32>
    %4 = vector.broadcast %3 : vector<1x128xf32> to vector<128x128xf32>
    %5 = arith.addf %2, %4 : vector<128x128xf32>
    %c0_5 = arith.constant 0 : index
    %c0_6 = arith.constant 0 : index
    %6 = vector.load %arg4[%c0_5, %c0_6] : memref<128x128xbf16, #tpu.memory_space<vmem>>, vector<128x128xbf16>
    %7 = arith.extf %6 : vector<128x128xbf16> to vector<128x128xf32>
    %8 = arith.addf %5, %7 : vector<128x128xf32>
    %cst_7 = arith.constant 0.000000e+00 : f32
    %9 = vector.broadcast %cst_7 : f32 to vector<128x128xf32>
    %10 = arith.maximumf %8, %9 : vector<128x128xf32>
    %11 = arith.truncf %10 : vector<128x128xf32> to vector<128x128xbf16>
    %c0_8 = arith.constant 0 : index
    %c0_9 = arith.constant 0 : index
    %12 = vector.load %arg5[%c0_8, %c0_9] : memref<128x128xbf16, #tpu.memory_space<vmem>>, vector<128x128xbf16>
    tpu.vector_store %arg5[%c0_8, %c0_9], %11 {strides = array<i32>} : memref<128x128xbf16, #tpu.memory_space<vmem>>, vector<128x128xbf16>,
    return
  }
  func.func @transform_0(%arg0: i32) -> (i32, i32) {
    %c0_i32 = arith.constant 0 : i32
    %c0_i32_0 = arith.constant 0 : i32
    return %arg0, %c0_i32 : i32, i32
  }
  func.func @transform_1(%arg0: i32) -> (i32, i32) {
    %c0_i32 = arith.constant 0 : i32
    %c0_i32_0 = arith.constant 0 : i32
    %c0_i32_1 = arith.constant 0 : i32
    return %c0_i32, %c0_i32_0 : i32, i32
  }
  func.func @transform_2(%arg0: i32) -> (i32, i32) {
    %c0_i32 = arith.constant 0 : i32
    %c0_i32_0 = arith.constant 0 : i32
    %c0_i32_1 = arith.constant 0 : i32
    return %c0_i32, %c0_i32_0 : i32, i32
  }
  func.func @transform_3(%arg0: i32) -> (i32, i32) {
    %c0_i32 = arith.constant 0 : i32
    %c0_i32_0 = arith.constant 0 : i32
    return %arg0, %c0_i32 : i32, i32
  }
  func.func @transform_4(%arg0: i32) -> (i32, i32) {
    %c0_i32 = arith.constant 0 : i32
    %c0_i32_0 = arith.constant 0 : i32
    return %arg0, %c0_i32 : i32, i32
  }
}

module attributes {stable_mosaic.version = 11 : i64} {
  func.func @_fused_matmul_kernel(%arg0: i32, %arg1: memref<32x288xbf16, #tpu.memory_space<vmem>>, %arg2: memref<288x128xbf16, #tpu.memory_space<vmem>>, %arg3: memref<1x128xf32, #tpu.memory_space<vmem>>, %arg4: memref<32x128xbf16, #tpu.memory_space<vmem>>) attributes {dimension_semantics = [#tpu.dimension_semantics<parallel>], iteration_bounds = array<i64: 1>, scalar_prefetch = 0 : i64, scratch_operands = 0 : i64, tpu.core_type = #tpu.core_type<tc>, window_params = [{transform_indices = @transform_0, window_bounds = array<i64: 32, 288>}, {pipeline_mode = #tpu.pipeline_mode<synchronous>, transform_indices = @transform_1, window_bounds = array<i64: 288, 128>}, {pipeline_mode = #tpu.pipeline_mode<synchronous>, transform_indices = @transform_2, window_bounds = array<i64: 1, 128>}, {transform_indices = @transform_3, window_bounds = array<i64: 32, 128>}]} {
    %c0 = arith.constant 0 : index
    %c0_0 = arith.constant 0 : index
    %0 = vector.load %arg1[%c0, %c0_0] : memref<32x288xbf16, #tpu.memory_space<vmem>>, vector<32x288xbf16>
    %c0_1 = arith.constant 0 : index
    %c0_2 = arith.constant 0 : index
    %1 = vector.load %arg2[%c0_1, %c0_2] : memref<288x128xbf16, #tpu.memory_space<vmem>>, vector<288x128xbf16>
    %cst = arith.constant dense<0.000000e+00> : vector<32x128xf32>
    %2 = tpu.matmul %0, %1, %cst {dimension_numbers = #tpu.dot_dimension_numbers<[1], [0], [0], [1], [0, 0, 1, 1], [], []>} : vector<32x288xbf16>, vector<288x128xbf16>, vector<32x128xf32> -> vector<32x128xf32>
    %c0_3 = arith.constant 0 : index
    %c0_4 = arith.constant 0 : index
    %3 = vector.load %arg3[%c0_3, %c0_4] : memref<1x128xf32, #tpu.memory_space<vmem>>, vector<1x128xf32>
    %4 = vector.broadcast %3 : vector<1x128xf32> to vector<32x128xf32>
    %5 = arith.addf %2, %4 : vector<32x128xf32>
    %cst_5 = arith.constant 0.000000e+00 : f32
    %6 = vector.broadcast %cst_5 : f32 to vector<32x128xf32>
    %7 = arith.maximumf %5, %6 : vector<32x128xf32>
    %8 = arith.truncf %7 : vector<32x128xf32> to vector<32x128xbf16>
    %c0_6 = arith.constant 0 : index
    %c0_7 = arith.constant 0 : index
    %9 = vector.load %arg4[%c0_6, %c0_7] : memref<32x128xbf16, #tpu.memory_space<vmem>>, vector<32x128xbf16>
    tpu.vector_store %arg4[%c0_6, %c0_7], %8 {strides = array<i32>} : memref<32x128xbf16, #tpu.memory_space<vmem>>, vector<32x128xbf16>,
    return
  }
  func.func @transform_0(%arg0: i32) -> (i32, i32) {
    %c0_i32 = arith.constant 0 : i32
    %c0_i32_0 = arith.constant 0 : i32
    return %arg0, %c0_i32 : i32, i32
  }
  func.func @transform_1(%arg0: i32) -> (i32, i32) {
    %c0_i32 = arith.constant 0 : i32
    %c0_i32_0 = arith.constant 0 : i32
    %c0_i32_1 = arith.constant 0 : i32
    return %c0_i32, %c0_i32_0 : i32, i32
  }
  func.func @transform_2(%arg0: i32) -> (i32, i32) {
    %c0_i32 = arith.constant 0 : i32
    %c0_i32_0 = arith.constant 0 : i32
    %c0_i32_1 = arith.constant 0 : i32
    return %c0_i32, %c0_i32_0 : i32, i32
  }
  func.func @transform_3(%arg0: i32) -> (i32, i32) {
    %c0_i32 = arith.constant 0 : i32
    %c0_i32_0 = arith.constant 0 : i32
    return %arg0, %c0_i32 : i32, i32
  }
}

module attributes {stable_mosaic.version = 11 : i64} {
  func.func @_fused_matmul_kernel(%arg0: i32, %arg1: memref<32x576xbf16, #tpu.memory_space<vmem>>, %arg2: memref<576x128xbf16, #tpu.memory_space<vmem>>, %arg3: memref<1x128xf32, #tpu.memory_space<vmem>>, %arg4: memref<32x128xbf16, #tpu.memory_space<vmem>>, %arg5: memref<32x128xbf16, #tpu.memory_space<vmem>>) attributes {dimension_semantics = [#tpu.dimension_semantics<parallel>], iteration_bounds = array<i64: 1>, scalar_prefetch = 0 : i64, scratch_operands = 0 : i64, tpu.core_type = #tpu.core_type<tc>, window_params = [{transform_indices = @transform_0, window_bounds = array<i64: 32, 576>}, {pipeline_mode = #tpu.pipeline_mode<synchronous>, transform_indices = @transform_1, window_bounds = array<i64: 576, 128>}, {pipeline_mode = #tpu.pipeline_mode<synchronous>, transform_indices = @transform_2, window_bounds = array<i64: 1, 128>}, {transform_indices = @transform_3, window_bounds = array<i64: 32, 128>}, {transform_indices = @transform_4, window_bounds = array<i64: 32, 128>}]} {
    %c0 = arith.constant 0 : index
    %c0_0 = arith.constant 0 : index
    %0 = vector.load %arg1[%c0, %c0_0] : memref<32x576xbf16, #tpu.memory_space<vmem>>, vector<32x576xbf16>
    %c0_1 = arith.constant 0 : index
    %c0_2 = arith.constant 0 : index
    %1 = vector.load %arg2[%c0_1, %c0_2] : memref<576x128xbf16, #tpu.memory_space<vmem>>, vector<576x128xbf16>
    %cst = arith.constant dense<0.000000e+00> : vector<32x128xf32>
    %2 = tpu.matmul %0, %1, %cst {dimension_numbers = #tpu.dot_dimension_numbers<[1], [0], [0], [1], [0, 0, 1, 1], [], []>} : vector<32x576xbf16>, vector<576x128xbf16>, vector<32x128xf32> -> vector<32x128xf32>
    %c0_3 = arith.constant 0 : index
    %c0_4 = arith.constant 0 : index
    %3 = vector.load %arg3[%c0_3, %c0_4] : memref<1x128xf32, #tpu.memory_space<vmem>>, vector<1x128xf32>
    %4 = vector.broadcast %3 : vector<1x128xf32> to vector<32x128xf32>
    %5 = arith.addf %2, %4 : vector<32x128xf32>
    %c0_5 = arith.constant 0 : index
    %c0_6 = arith.constant 0 : index
    %6 = vector.load %arg4[%c0_5, %c0_6] : memref<32x128xbf16, #tpu.memory_space<vmem>>, vector<32x128xbf16>
    %7 = arith.extf %6 : vector<32x128xbf16> to vector<32x128xf32>
    %8 = arith.addf %5, %7 : vector<32x128xf32>
    %cst_7 = arith.constant 0.000000e+00 : f32
    %9 = vector.broadcast %cst_7 : f32 to vector<32x128xf32>
    %10 = arith.maximumf %8, %9 : vector<32x128xf32>
    %11 = arith.truncf %10 : vector<32x128xf32> to vector<32x128xbf16>
    %c0_8 = arith.constant 0 : index
    %c0_9 = arith.constant 0 : index
    %12 = vector.load %arg5[%c0_8, %c0_9] : memref<32x128xbf16, #tpu.memory_space<vmem>>, vector<32x128xbf16>
    tpu.vector_store %arg5[%c0_8, %c0_9], %11 {strides = array<i32>} : memref<32x128xbf16, #tpu.memory_space<vmem>>, vector<32x128xbf16>,
    return
  }
  func.func @transform_0(%arg0: i32) -> (i32, i32) {
    %c0_i32 = arith.constant 0 : i32
    %c0_i32_0 = arith.constant 0 : i32
    return %arg0, %c0_i32 : i32, i32
  }
  func.func @transform_1(%arg0: i32) -> (i32, i32) {
    %c0_i32 = arith.constant 0 : i32
    %c0_i32_0 = arith.constant 0 : i32
    %c0_i32_1 = arith.constant 0 : i32
    return %c0_i32, %c0_i32_0 : i32, i32
  }
  func.func @transform_2(%arg0: i32) -> (i32, i32) {
    %c0_i32 = arith.constant 0 : i32
    %c0_i32_0 = arith.constant 0 : i32
    %c0_i32_1 = arith.constant 0 : i32
    return %c0_i32, %c0_i32_0 : i32, i32
  }
  func.func @transform_3(%arg0: i32) -> (i32, i32) {
    %c0_i32 = arith.constant 0 : i32
    %c0_i32_0 = arith.constant 0 : i32
    return %arg0, %c0_i32 : i32, i32
  }
  func.func @transform_4(%arg0: i32) -> (i32, i32) {
    %c0_i32 = arith.constant 0 : i32
    %c0_i32_0 = arith.constant 0 : i32
    return %arg0, %c0_i32 : i32, i32
  }
}

</mosaic_0001>

<llo_original>
// kernel: resnet_mvm_forward.7
$region0: #{resnet_mvm_forward.7}
  #allocation0 [shape = 'u32[]', space=smem, size = 0x4, offset = 0x4, fixed_abs, tag = 'smem constant byte address 0x4 - core index']
  #allocation1 [shape = 'u32[144,128]{1,0:T(1,128)}', space=vmem, size = 0x12000, scoped, tag = 'internal scratch']
  %s0 = inlined_call_operand.vmem [shape: bf16[512,27], index: 0, kind: input, shape index: {}]
  %s1 = inlined_call_operand.vmem [shape: bf16[27,128], index: 1, kind: input, shape index: {}]
  %s2 = inlined_call_operand.vmem [shape: f32[1,128], index: 2, kind: input, shape index: {}]
  %s3 = inlined_call_operand.vmem [shape: bf16[512,128], index: 3, kind: output, shape index: {}]
  %s4 = sld [smem:[#allocation0]]
  $region45: #{resnet_mvm_forward.7} parent=0
    _
  %s6 = ssub.s32 1, %s4
  %s7 = scalar_select 0, %s6, %s4
  loop: start=0, step=1, limit=4
  $region2: #{resnet_mvm_forward.7} parent=0 // loop_pre_header
    _
  $region3: #{resnet_mvm_forward.7} parent=0 // loop_header
    %s9 = sphi 0, %s13
    %p10 = scmp.ge.s32.totalorder %s9, 4
    %s19 = sphi 0, %s21
    %s22 = sphi 0, %s19
    %s23 = sphi 0, %s22
    %s39 = sphi 0, %s23
    %s43 = sphi 0, %s43
    %s45 = sphi 0, %s43
    %s46 = sphi 0, %s45
    %s60 = sphi 0, %s46
    %s64 = sphi 0, %s64
    %s66 = sphi 0, %s64
    %s67 = sphi 0, %s66
    %s81 = sphi 0, %s67
    %s87 = sphi 0, %s89
    %s90 = sphi 0, %s87
    %s91 = sphi 0, %s90
    %s107 = sphi 0, %s91
  $region4: #{resnet_mvm_forward.7} parent=0 // loop_header_branch
    %12 = sbr.rel (%p10) target = $region8
  $region5: #{resnet_mvm_forward.7} parent=0 // loop_body
    %s14 = ssub.s32 %s9, 1
    %s15 = ssub.s32 %s9, 2
    %s16 = sadd.s32 %s9, 1
    %s17 = ssub.s32 %s9, %s16
    %p18 = scmp.eq.s32.totalorder %s17, 0
    %s20 = sadd.s32 %s19, 1
    %s21 = scalar_select %p18, %s19, %s20
    %p24 = pneg %p18
    %p25 = scmp.eq.s32.totalorder %s9, 1
    %p26 = por %p24, %p25
    %p27 = scmp.ne.s32.totalorder %s19, %s22
    %p28 = scmp.eq.s32.totalorder %s9, 0
    %p29 = por %p27, %p28
    %p30 = scmp.ne.s32.totalorder %s19, %s22
    %p31 = scmp.eq.s32.totalorder %s14, 1
    %p32 = por %p30, %p31
    %p33 = scmp.ne.s32.totalorder %s22, %s23
    %p34 = scmp.eq.s32.totalorder %s14, 0
    %p35 = por %p33, %p34
    %p36 = scmp.ne.s32.totalorder %s22, %s23
    %p37 = scmp.eq.s32.totalorder %s15, 1
    %p38 = por %p36, %p37
    %p40 = scmp.ne.s32.totalorder %s23, %s39
    %p41 = scmp.eq.s32.totalorder %s15, 0
    %p42 = por %p40, %p41
    %s44 = sadd.s32 %s43, 1
    %p47 = scmp.eq.s32.totalorder %s9, 1
    %p48 = scmp.ne.s32.totalorder %s43, %s45
    %p49 = scmp.eq.s32.totalorder %s9, 0
    %p50 = por %p48, %p49
    %p51 = scmp.ne.s32.totalorder %s43, %s45
    %p52 = scmp.eq.s32.totalorder %s14, 1
    %p53 = por %p51, %p52
    %p54 = scmp.ne.s32.totalorder %s45, %s46
    %p55 = scmp.eq.s32.totalorder %s14, 0
    %p56 = por %p54, %p55
    %p57 = scmp.ne.s32.totalorder %s45, %s46
    %p58 = scmp.eq.s32.totalorder %s15, 1
    %p59 = por %p57, %p58
    %p61 = scmp.ne.s32.totalorder %s46, %s60
    %p62 = scmp.eq.s32.totalorder %s15, 0
    %p63 = por %p61, %p62
    %s65 = sadd.s32 %s64, 1
    %p68 = scmp.eq.s32.totalorder %s9, 1
    %p69 = scmp.ne.s32.totalorder %s64, %s66
    %p70 = scmp.eq.s32.totalorder %s9, 0
    %p71 = por %p69, %p70
    %p72 = scmp.ne.s32.totalorder %s64, %s66
    %p73 = scmp.eq.s32.totalorder %s14, 1
    %p74 = por %p72, %p73
    %p75 = scmp.ne.s32.totalorder %s66, %s67
    %p76 = scmp.eq.s32.totalorder %s14, 0
    %p77 = por %p75, %p76
    %p78 = scmp.ne.s32.totalorder %s66, %s67
    %p79 = scmp.eq.s32.totalorder %s15, 1
    %p80 = por %p78, %p79
    %p82 = scmp.ne.s32.totalorder %s67, %s81
    %p83 = scmp.eq.s32.totalorder %s15, 0
    %p84 = por %p82, %p83
    %s85 = ssub.s32 %s9, %s16
    %p86 = scmp.eq.s32.totalorder %s85, 0
    %s88 = sadd.s32 %s87, 1
    %s89 = scalar_select %p86, %s87, %s88
    %p92 = pneg %p86
    %p93 = scmp.eq.s32.totalorder %s9, 1
    %p94 = por %p92, %p93
    %p95 = scmp.ne.s32.totalorder %s87, %s90
    %p96 = scmp.eq.s32.totalorder %s9, 0
    %p97 = por %p95, %p96
    %p98 = scmp.ne.s32.totalorder %s87, %s90
    %p99 = scmp.eq.s32.totalorder %s14, 1
    %p100 = por %p98, %p99
    %p101 = scmp.ne.s32.totalorder %s90, %s91
    %p102 = scmp.eq.s32.totalorder %s14, 0
    %p103 = por %p101, %p102
    %p104 = scmp.ne.s32.totalorder %s90, %s91
    %p105 = scmp.eq.s32.totalorder %s15, 1
    %p106 = por %p104, %p105
    %p108 = scmp.ne.s32.totalorder %s91, %s107
    %p109 = scmp.eq.s32.totalorder %s15, 0
    %p110 = por %p108, %p109
    %p111 = scmp.le.s32.totalorder 1, %s9
    %p112 = scmp.lt.s32.totalorder %s9, 3
    %p113 = pnand %p111, %p112
    %p114 = pneg %p113
    // Predicated region
    $region9: #{resnet_mvm_forward.7} parent=5 // pred_check
      _
    $region10: #{resnet_mvm_forward.7} parent=5 // pred_check_branch
      %116 = sbr.rel (%p113) target = $region12
    $region11: #{resnet_mvm_forward.7} parent=5 // pred_region
      %s117 = ssub.s32 %s9, 1
      // Predicated region
      $region13: #{resnet_mvm_forward.7} parent=11 // pred_check
        %p118 = pneg %p56
      $region14: #{resnet_mvm_forward.7} parent=11 // pred_check_branch
        %120 = sbr.rel (%p118) target = $region16
      $region15: #{resnet_mvm_forward.7} parent=11 // pred_region
        _
      $region16: #{resnet_mvm_forward.7} parent=11 // pred_fallthru
        _
      // Predicated region
      $region17: #{resnet_mvm_forward.7} parent=11 // pred_check
        %p121 = pneg %p77
      $region18: #{resnet_mvm_forward.7} parent=11 // pred_check_branch
        %123 = sbr.rel (%p121) target = $region20
      $region19: #{resnet_mvm_forward.7} parent=11 // pred_region
        _
      $region20: #{resnet_mvm_forward.7} parent=11 // pred_fallthru
        _
    $region12: #{resnet_mvm_forward.7} parent=5 // pred_fallthru
      _
    %p124 = scmp.lt.s32.totalorder %s9, 2
    // Predicated region
    $region21: #{resnet_mvm_forward.7} parent=5 // pred_check
      %p125 = pneg %p124
    $region22: #{resnet_mvm_forward.7} parent=5 // pred_check_branch
      %127 = sbr.rel (%p125) target = $region24
    $region23: #{resnet_mvm_forward.7} parent=5 // pred_region
      // Predicated region
      $region25: #{resnet_mvm_forward.7} parent=23 // pred_check
        %p128 = pneg %p29
      $region26: #{resnet_mvm_forward.7} parent=23 // pred_check_branch
        %130 = sbr.rel (%p128) target = $region28
      $region27: #{resnet_mvm_forward.7} parent=23 // pred_region
        %s131 = smul.u32 32, %s9
        %p132 = scmp.lt.s32.totalorder %s131, 63
        %s133 = scalar_select %p132, %s131, 63
        %s134 = smul.addr %s133, 4
        %s135 = scalar_lea.vmem %s0, %s134
        %s136 = smul.u32 32, %s9
      $region28: #{resnet_mvm_forward.7} parent=23 // pred_fallthru
        _
    $region24: #{resnet_mvm_forward.7} parent=5 // pred_fallthru
      _
    %p137 = scmp.le.s32.totalorder 1, %s9
    %p138 = scmp.lt.s32.totalorder %s9, 3
    %p139 = pnand %p137, %p138
    %p140 = pneg %p139
    // Predicated region
    $region29: #{resnet_mvm_forward.7} parent=5 // pred_check
      _
    $region30: #{resnet_mvm_forward.7} parent=5 // pred_check_branch
      %142 = sbr.rel (%p139) target = $region32
    $region31: #{resnet_mvm_forward.7} parent=5 // pred_region
      %s143 = ssub.s32 %s9, 1
      %s144 = smul.u32 32, %s14
      %p145 = scmp.lt.s32.totalorder %s144, 63
      %s146 = scalar_select %p145, %s144, 63
      %s147 = smul.addr %s146, 4
      %s148 = scalar_lea.vmem %s0, %s147
      %p149 = pneg %p35
      %p150 = pneg %p32
      %p151 = pneg %p56
      %p152 = pneg %p53
      %p153 = pneg %p77
      %p154 = pneg %p74
      %p155 = pneg %p103
      %p156 = pneg %p100
      %s157 = smul.u32 32, %s14
      %p158 = scmp.lt.s32.totalorder %s157, 63
      %s159 = scalar_select %p158, %s157, 63
      %s160 = smul.addr %s159, 4
      %s161 = scalar_lea.vmem %s3, %s160
      %s162 = smul.u32 32, %s14
      %p163 = scmp.lt.s32.totalorder %s162, 63
      %s164 = scalar_select %p163, %s162, 63
      %s165 = smul.addr %s164, 4
      %s166 = scalar_lea.vmem %s0, %s165
      %s167 = smul.u32 32, %s14
      %s168 = smul.u32 32, %s14
      %p169 = scmp.lt.s32.totalorder %s168, 63
      %s170 = scalar_select %p169, %s168, 63
      %s171 = smul.addr %s170, 4
      %s172 = scalar_lea.vmem %s3, %s171
      %s173 = smul.u32 32, %s14
      %v175 = vld [vmem:[%s166] sm:$0xf]
      %v176 = vld [vmem:[%s166 + $0x4] sm:$0xf]
      %v177 = vld [vmem:[%s166 + $0x8] sm:$0xf]
      %v178 = vld [vmem:[%s166 + $0xc] sm:$0xf]
      %v179 = vld [vmem:[%s166 + $0x10] sm:$0xf]
      %v180 = vld [vmem:[%s166 + $0x14] sm:$0xf]
      %v181 = vld [vmem:[%s166 + $0x18] sm:$0xf]
      %v182 = vld [vmem:[%s166 + $0x1c] sm:$0xf]
      %v183 = vld [vmem:[%s166 + $0x20] sm:$0xf]
      %v184 = vld [vmem:[%s166 + $0x24] sm:$0xf]
      %v185 = vld [vmem:[%s166 + $0x28] sm:$0xf]
      %v186 = vld [vmem:[%s166 + $0x2c] sm:$0xf]
      %v187 = vld [vmem:[%s166 + $0x30] sm:$0xf]
      %v188 = vld [vmem:[%s166 + $0x34] sm:$0xf]
      %v189 = vld [vmem:[%s166 + $0x38] sm:$0xf]
      %v190 = vld [vmem:[%s166 + $0x3c] sm:$0xf]
      %v191 = vld [vmem:[%s166 + $0x40] sm:$0xf]
      %v192 = vld [vmem:[%s166 + $0x44] sm:$0xf]
      %v193 = vld [vmem:[%s166 + $0x48] sm:$0xf]
      %v194 = vld [vmem:[%s166 + $0x4c] sm:$0xf]
      %v195 = vld [vmem:[%s166 + $0x50] sm:$0xf]
      %v196 = vld [vmem:[%s166 + $0x54] sm:$0xf]
      %v197 = vld [vmem:[%s166 + $0x58] sm:$0xf]
      %v198 = vld [vmem:[%s166 + $0x5c] sm:$0xf]
      %v199 = vld [vmem:[%s166 + $0x60] sm:$0xf]
      %v200 = vld [vmem:[%s166 + $0x64] sm:$0xf]
      %v201 = vld [vmem:[%s166 + $0x68] sm:$0xf]
      %v202 = vld [vmem:[%s166 + $0x6c] sm:$0xf]
      %v203 = vld [vmem:[%s166 + $0x70] sm:$0xf]
      %v204 = vld [vmem:[%s166 + $0x74] sm:$0xf]
      %v205 = vld [vmem:[%s166 + $0x78] sm:$0xf]
      %v206 = vld [vmem:[%s166 + $0x7c] sm:$0xf]
      %v207 = vld [vmem:[%s1] sm:$0xf]
      %v208 = vld [vmem:[%s1 + $0x4] sm:$0xf]
      %v209 = vld [vmem:[%s1 + $0x8] sm:$0xf]
      %v210 = vld [vmem:[%s1 + $0xc] sm:$0x3]
      %v211 = vld [vmem:[%s2] sm:$0x1]
      %v213 = vlaneseq
      %v214 = vshrl.u32 %v213, 7
      %v215 = vsub.s32 0, %v214
      %v216 = vrot.slane %v211, %v215
      %v250 = vunpack.c.l.b16 %v175
      %v251 = vunpack.c.l.b16 %v176
      %v252 = vunpack.c.l.b16 %v177
      %v253 = vunpack.c.l.b16 %v178
      %v254 = vunpack.c.l.b16 %v179
      %v255 = vunpack.c.l.b16 %v180
      %v256 = vunpack.c.l.b16 %v181
      %v257 = vunpack.c.l.b16 %v182
      %v258 = vunpack.c.l.b16 %v183
      %v259 = vunpack.c.l.b16 %v184
      %v260 = vunpack.c.l.b16 %v185
      %v261 = vunpack.c.l.b16 %v186
      %v262 = vunpack.c.l.b16 %v187
      %v263 = vunpack.c.l.b16 %v188
      %v264 = vunpack.c.l.b16 %v189
      %v265 = vunpack.c.l.b16 %v190
      %v266 = vunpack.c.l.b16 %v191
      %v267 = vunpack.c.l.b16 %v192
      %v268 = vunpack.c.l.b16 %v193
      %v269 = vunpack.c.l.b16 %v194
      %v270 = vunpack.c.l.b16 %v195
      %v271 = vunpack.c.l.b16 %v196
      %v272 = vunpack.c.l.b16 %v197
      %v273 = vunpack.c.l.b16 %v198
      %v274 = vunpack.c.l.b16 %v199
      %v275 = vunpack.c.l.b16 %v200
      %v276 = vunpack.c.l.b16 %v201
      %v277 = vunpack.c.l.b16 %v202
      %v278 = vunpack.c.l.b16 %v203
      %v279 = vunpack.c.l.b16 %v204
      %v280 = vunpack.c.l.b16 %v205
      %v281 = vunpack.c.l.b16 %v206
      %v282 = vpack.c.b16 %v251, %v250
      %v283 = vpack.c.b16 %v253, %v252
      %v284 = vpack.c.b16 %v255, %v254
      %v285 = vpack.c.b16 %v257, %v256
      %v286 = vpack.c.b16 %v259, %v258
      %v287 = vpack.c.b16 %v261, %v260
      %v288 = vpack.c.b16 %v263, %v262
      %v289 = vpack.c.b16 %v265, %v264
      %v290 = vpack.c.b16 %v267, %v266
      %v291 = vpack.c.b16 %v269, %v268
      %v292 = vpack.c.b16 %v271, %v270
      %v293 = vpack.c.b16 %v273, %v272
      %v294 = vpack.c.b16 %v275, %v274
      %v295 = vpack.c.b16 %v277, %v276
      %v296 = vpack.c.b16 %v279, %v278
      %v297 = vpack.c.b16 %v281, %v280
      %v302 = vunpack.c.l.b16 %v207
      %v303 = vunpack.c.l.b16 %v208
      %v304 = vunpack.c.l.b16 %v209
      %v305 = vunpack.c.l.b16 %v210
      %v306 = vpack.c.b16 %v303, %v302
      %v307 = vpack.c.b16 %v305, %v304
      %vm309 = vcmask 220160
      %v311 = vsel %vm309, %v282, 0
      %v314 = vsel %vm309, %v283, 0
      %v317 = vsel %vm309, %v284, 0
      %v320 = vsel %vm309, %v285, 0
      %v323 = vsel %vm309, %v286, 0
      %v326 = vsel %vm309, %v287, 0
      %v329 = vsel %vm309, %v288, 0
      %v332 = vsel %vm309, %v289, 0
      %v335 = vsel %vm309, %v290, 0
      %v338 = vsel %vm309, %v291, 0
      %v341 = vsel %vm309, %v292, 0
      %v344 = vsel %vm309, %v293, 0
      %v347 = vsel %vm309, %v294, 0
      %v350 = vsel %vm309, %v295, 0
      %v353 = vsel %vm309, %v296, 0
      %v356 = vsel %vm309, %v297, 0
      %vm358 = vcmask 1044480
      %vm359 = vcmask 1045504
      %v360 = vsel %vm358, 4294967295, 65535
      %v361 = vsel %vm359, %v360, 0
      %v363 = vand.u32 %v307, %v361
      %365 = vmatprep.subr.bf16.mxu0 0
      %366 = vmatpush1.bf16.msra.mxu0 %v306
      %367 = vmatprep.subr.bf16.mxu0 0
      %368 = vmatpush1.bf16.msra.mxu0 %v363
      %369 = vmatprep.subr.bf16.mxu0 0
      %370 = vmatpush1.bf16.msra.mxu0 0
      %371 = vmatprep.subr.bf16.mxu0 0
      %372 = vmatpush1.bf16.msra.mxu0 0
      %373 = vmatprep.subr.bf16.mxu0 0
      %374 = vmatpush1.bf16.msra.mxu0 0
      %375 = vmatprep.subr.bf16.mxu0 0
      %376 = vmatpush1.bf16.msra.mxu0 0
      %377 = vmatprep.subr.bf16.mxu0 0
      %378 = vmatpush1.bf16.msra.mxu0 0
      %379 = vmatprep.subr.bf16.mxu0 0
      %380 = vmatpush1.bf16.msra.mxu0 0
      %381 = vmatprep.subr.bf16.mxu0 0
      %382 = vmatpush1.bf16.msra.mxu0 0
      %383 = vmatprep.subr.bf16.mxu0 0
      %384 = vmatpush1.bf16.msra.mxu0 0
      %385 = vmatprep.subr.bf16.mxu0 0
      %386 = vmatpush1.bf16.msra.mxu0 0
      %387 = vmatprep.subr.bf16.mxu0 0
      %388 = vmatpush1.bf16.msra.mxu0 0
      %389 = vmatprep.subr.bf16.mxu0 0
      %390 = vmatpush1.bf16.msra.mxu0 0
      %391 = vmatprep.subr.bf16.mxu0 0
      %392 = vmatpush1.bf16.msra.mxu0 0
      %393 = vmatprep.subr.bf16.mxu0 0
      %394 = vmatpush1.bf16.msra.mxu0 0
      %395 = vmatprep.subr.bf16.mxu0 0
      %396 = vmatpush1.bf16.msra.mxu0 0
      %397 = vmatprep.mubr.bf16.mxu0 0
      %398 = vmatmul.mubr.bf16.gmra.mrb[0].mxu0 %v311
      %v399 = vpop.f32.mrb[0].mxu0
      %v400 = vadd.f32 %v216, %v399
      %v401 = vpop.f32.mrb[0].mxu0
      %v402 = vpop.f32.mrb[0].mxu0
      %v403 = vadd.f32 %v216, %v402
      %v404 = vpop.f32.mrb[0].mxu0
      %405 = vmatprep.mubr.bf16.mxu0 0
      %406 = vmatmul.mubr.bf16.gmra.mrb[0].mxu0 %v314
      %v407 = vpop.f32.mrb[0].mxu0
      %v408 = vadd.f32 %v216, %v407
      %v409 = vpop.f32.mrb[0].mxu0
      %v410 = vpop.f32.mrb[0].mxu0
      %v411 = vadd.f32 %v216, %v410
      %v412 = vpop.f32.mrb[0].mxu0
      %413 = vmatprep.mubr.bf16.mxu0 0
      %414 = vmatmul.mubr.bf16.gmra.mrb[0].mxu0 %v317
      %v415 = vpop.f32.mrb[0].mxu0
      %v416 = vadd.f32 %v216, %v415
      %v417 = vpop.f32.mrb[0].mxu0
      %v418 = vpop.f32.mrb[0].mxu0
      %v419 = vadd.f32 %v216, %v418
      %v420 = vpop.f32.mrb[0].mxu0
      %421 = vmatprep.mubr.bf16.mxu0 0
      %422 = vmatmul.mubr.bf16.gmra.mrb[0].mxu0 %v320
      %v423 = vpop.f32.mrb[0].mxu0
      %v424 = vadd.f32 %v216, %v423
      %v425 = vpop.f32.mrb[0].mxu0
      %v426 = vpop.f32.mrb[0].mxu0
      %v427 = vadd.f32 %v216, %v426
      %v428 = vpop.f32.mrb[0].mxu0
      %429 = vmatprep.mubr.bf16.mxu0 0
      %430 = vmatmul.mubr.bf16.gmra.mrb[0].mxu0 %v323
      %v431 = vpop.f32.mrb[0].mxu0
      %v432 = vadd.f32 %v216, %v431
      %v433 = vpop.f32.mrb[0].mxu0
      %v434 = vpop.f32.mrb[0].mxu0
      %v435 = vadd.f32 %v216, %v434
      %v436 = vpop.f32.mrb[0].mxu0
      %437 = vmatprep.mubr.bf16.mxu0 0
      %438 = vmatmul.mubr.bf16.gmra.mrb[0].mxu0 %v326
      %v439 = vpop.f32.mrb[0].mxu0
      %v440 = vadd.f32 %v216, %v439
      %v441 = vpop.f32.mrb[0].mxu0
      %v442 = vpop.f32.mrb[0].mxu0
      %v443 = vadd.f32 %v216, %v442
      %v444 = vpop.f32.mrb[0].mxu0
      %445 = vmatprep.mubr.bf16.mxu0 0
      %446 = vmatmul.mubr.bf16.gmra.mrb[0].mxu0 %v329
      %v447 = vpop.f32.mrb[0].mxu0
      %v448 = vadd.f32 %v216, %v447
      %v449 = vpop.f32.mrb[0].mxu0
      %v450 = vpop.f32.mrb[0].mxu0
      %v451 = vadd.f32 %v216, %v450
      %v452 = vpop.f32.mrb[0].mxu0
      %453 = vmatprep.mubr.bf16.mxu0 0
      %454 = vmatmul.mubr.bf16.gmra.mrb[0].mxu0 %v332
      %v455 = vpop.f32.mrb[0].mxu0
      %v456 = vadd.f32 %v216, %v455
      %v457 = vpop.f32.mrb[0].mxu0
      %v458 = vpop.f32.mrb[0].mxu0
      %v459 = vadd.f32 %v216, %v458
      %v460 = vpop.f32.mrb[0].mxu0
      %461 = vmatprep.mubr.bf16.mxu0 0
      %462 = vmatmul.mubr.bf16.gmra.mrb[0].mxu0 %v335
      %v463 = vpop.f32.mrb[0].mxu0
      %v464 = vadd.f32 %v216, %v463
      %v465 = vpop.f32.mrb[0].mxu0
      %v466 = vpop.f32.mrb[0].mxu0
      %v467 = vadd.f32 %v216, %v466
      %v468 = vpop.f32.mrb[0].mxu0
      %469 = vmatprep.mubr.bf16.mxu0 0
      %470 = vmatmul.mubr.bf16.gmra.mrb[0].mxu0 %v338
      %v471 = vpop.f32.mrb[0].mxu0
      %v472 = vadd.f32 %v216, %v471
      %v473 = vpop.f32.mrb[0].mxu0
      %v474 = vpop.f32.mrb[0].mxu0
      %v475 = vadd.f32 %v216, %v474
      %v476 = vpop.f32.mrb[0].mxu0
      %477 = vmatprep.mubr.bf16.mxu0 0
      %478 = vmatmul.mubr.bf16.gmra.mrb[0].mxu0 %v341
      %v479 = vpop.f32.mrb[0].mxu0
      %v480 = vadd.f32 %v216, %v479
      %v481 = vpop.f32.mrb[0].mxu0
      %v482 = vpop.f32.mrb[0].mxu0
      %v483 = vadd.f32 %v216, %v482
      %v484 = vpop.f32.mrb[0].mxu0
      %485 = vmatprep.mubr.bf16.mxu0 0
      %486 = vmatmul.mubr.bf16.gmra.mrb[0].mxu0 %v344
      %v487 = vpop.f32.mrb[0].mxu0
      %v488 = vadd.f32 %v216, %v487
      %v489 = vpop.f32.mrb[0].mxu0
      %v490 = vpop.f32.mrb[0].mxu0
      %v491 = vadd.f32 %v216, %v490
      %v492 = vpop.f32.mrb[0].mxu0
      %493 = vmatprep.mubr.bf16.mxu0 0
      %494 = vmatmul.mubr.bf16.gmra.mrb[0].mxu0 %v347
      %v495 = vpop.f32.mrb[0].mxu0
      %v496 = vadd.f32 %v216, %v495
      %v497 = vpop.f32.mrb[0].mxu0
      %v498 = vpop.f32.mrb[0].mxu0
      %v499 = vadd.f32 %v216, %v498
      %v500 = vpop.f32.mrb[0].mxu0
      %501 = vmatprep.mubr.bf16.mxu0 0
      %502 = vmatmul.mubr.bf16.gmra.mrb[0].mxu0 %v350
      %v503 = vpop.f32.mrb[0].mxu0
      %v504 = vadd.f32 %v216, %v503
      %v505 = vpop.f32.mrb[0].mxu0
      %v506 = vpop.f32.mrb[0].mxu0
      %v507 = vadd.f32 %v216, %v506
      %v508 = vpop.f32.mrb[0].mxu0
      %509 = vmatprep.mubr.bf16.mxu0 0
      %510 = vmatmul.mubr.bf16.gmra.mrb[0].mxu0 %v353
      %v511 = vpop.f32.mrb[0].mxu0
      %v512 = vadd.f32 %v216, %v511
      %v513 = vpop.f32.mrb[0].mxu0
      %v514 = vpop.f32.mrb[0].mxu0
      %v515 = vadd.f32 %v216, %v514
      %v516 = vpop.f32.mrb[0].mxu0
      %517 = vmatprep.mubr.bf16.mxu0 0
      %518 = vmatmul.mubr.bf16.gmra.mrb[0].mxu0 %v356
      %v519 = vpop.f32.mrb[0].mxu0
      %v520 = vadd.f32 %v216, %v519
      %v521 = vpop.f32.mrb[0].mxu0
      %v522 = vpop.f32.mrb[0].mxu0
      %v523 = vadd.f32 %v216, %v522
      %v524 = vpop.f32.mrb[0].mxu0
      %525 = vdwg.mxu0
      %v526 = vmax.f32 %v400, 0.0
      %v527 = vmax.f32 %v403, 0.0
      %v528 = vmax.f32 %v408, 0.0
      %v529 = vmax.f32 %v411, 0.0
      %v530 = vmax.f32 %v416, 0.0
      %v531 = vmax.f32 %v419, 0.0
      %v532 = vmax.f32 %v424, 0.0
      %v533 = vmax.f32 %v427, 0.0
      %v534 = vmax.f32 %v432, 0.0
      %v535 = vmax.f32 %v435, 0.0
      %v536 = vmax.f32 %v440, 0.0
      %v537 = vmax.f32 %v443, 0.0
      %v538 = vmax.f32 %v448, 0.0
      %v539 = vmax.f32 %v451, 0.0
      %v540 = vmax.f32 %v456, 0.0
      %v541 = vmax.f32 %v459, 0.0
      %v542 = vmax.f32 %v464, 0.0
      %v543 = vmax.f32 %v467, 0.0
      %v544 = vmax.f32 %v472, 0.0
      %v545 = vmax.f32 %v475, 0.0
      %v546 = vmax.f32 %v480, 0.0
      %v547 = vmax.f32 %v483, 0.0
      %v548 = vmax.f32 %v488, 0.0
      %v549 = vmax.f32 %v491, 0.0
      %v550 = vmax.f32 %v496, 0.0
      %v551 = vmax.f32 %v499, 0.0
      %v552 = vmax.f32 %v504, 0.0
      %v553 = vmax.f32 %v507, 0.0
      %v554 = vmax.f32 %v512, 0.0
      %v555 = vmax.f32 %v515, 0.0
      %v556 = vmax.f32 %v520, 0.0
      %v557 = vmax.f32 %v523, 0.0
      %v558 = vpack.c.bf16 %v527, %v526
      %v559 = vpack.c.bf16 %v529, %v528
      %v560 = vpack.c.bf16 %v531, %v530
      %v561 = vpack.c.bf16 %v533, %v532
      %v562 = vpack.c.bf16 %v535, %v534
      %v563 = vpack.c.bf16 %v537, %v536
      %v564 = vpack.c.bf16 %v539, %v538
      %v565 = vpack.c.bf16 %v541, %v540
      %v566 = vpack.c.bf16 %v543, %v542
      %v567 = vpack.c.bf16 %v545, %v544
      %v568 = vpack.c.bf16 %v547, %v546
      %v569 = vpack.c.bf16 %v549, %v548
      %v570 = vpack.c.bf16 %v551, %v550
      %v571 = vpack.c.bf16 %v553, %v552
      %v572 = vpack.c.bf16 %v555, %v554
      %v573 = vpack.c.bf16 %v557, %v556
      %v590 = vunpack.c.l.b16 %v558
      %v591 = vunpack.c.h.b16 %v558
      %v592 = vunpack.c.l.b16 %v559
      %v593 = vunpack.c.h.b16 %v559
      %v594 = vunpack.c.l.b16 %v560
      %v595 = vunpack.c.h.b16 %v560
      %v596 = vunpack.c.l.b16 %v561
      %v597 = vunpack.c.h.b16 %v561
      %v598 = vunpack.c.l.b16 %v562
      %v599 = vunpack.c.h.b16 %v562
      %v600 = vunpack.c.l.b16 %v563
      %v601 = vunpack.c.h.b16 %v563
      %v602 = vunpack.c.l.b16 %v564
      %v603 = vunpack.c.h.b16 %v564
      %v604 = vunpack.c.l.b16 %v565
      %v605 = vunpack.c.h.b16 %v565
      %v606 = vunpack.c.l.b16 %v566
      %v607 = vunpack.c.h.b16 %v566
      %v608 = vunpack.c.l.b16 %v567
      %v609 = vunpack.c.h.b16 %v567
      %v610 = vunpack.c.l.b16 %v568
      %v611 = vunpack.c.h.b16 %v568
      %v612 = vunpack.c.l.b16 %v569
      %v613 = vunpack.c.h.b16 %v569
      %v614 = vunpack.c.l.b16 %v570
      %v615 = vunpack.c.h.b16 %v570
      %v616 = vunpack.c.l.b16 %v571
      %v617 = vunpack.c.h.b16 %v571
      %v618 = vunpack.c.l.b16 %v572
      %v619 = vunpack.c.h.b16 %v572
      %v620 = vunpack.c.l.b16 %v573
      %v621 = vunpack.c.h.b16 %v573
      %v622 = vpack.c.b16 %v590, %v590
      %v623 = vpack.c.b16 %v591, %v591
      %v624 = vpack.c.b16 %v592, %v592
      %v625 = vpack.c.b16 %v593, %v593
      %v626 = vpack.c.b16 %v594, %v594
      %v627 = vpack.c.b16 %v595, %v595
      %v628 = vpack.c.b16 %v596, %v596
      %v629 = vpack.c.b16 %v597, %v597
      %v630 = vpack.c.b16 %v598, %v598
      %v631 = vpack.c.b16 %v599, %v599
      %v632 = vpack.c.b16 %v600, %v600
      %v633 = vpack.c.b16 %v601, %v601
      %v634 = vpack.c.b16 %v602, %v602
      %v635 = vpack.c.b16 %v603, %v603
      %v636 = vpack.c.b16 %v604, %v604
      %v637 = vpack.c.b16 %v605, %v605
      %v638 = vpack.c.b16 %v606, %v606
      %v639 = vpack.c.b16 %v607, %v607
      %v640 = vpack.c.b16 %v608, %v608
      %v641 = vpack.c.b16 %v609, %v609
      %v642 = vpack.c.b16 %v610, %v610
      %v643 = vpack.c.b16 %v611, %v611
      %v644 = vpack.c.b16 %v612, %v612
      %v645 = vpack.c.b16 %v613, %v613
      %v646 = vpack.c.b16 %v614, %v614
      %v647 = vpack.c.b16 %v615, %v615
      %v648 = vpack.c.b16 %v616, %v616
      %v649 = vpack.c.b16 %v617, %v617
      %v650 = vpack.c.b16 %v618, %v618
      %v651 = vpack.c.b16 %v619, %v619
      %v652 = vpack.c.b16 %v620, %v620
      %v653 = vpack.c.b16 %v621, %v621
      %686 = vst [vmem:[%s172] sm:$0xf] %v622
      %687 = vst [vmem:[%s172 + $0x4] sm:$0xf] %v623
      %688 = vst [vmem:[%s172 + $0x8] sm:$0xf] %v624
      %689 = vst [vmem:[%s172 + $0xc] sm:$0xf] %v625
      %690 = vst [vmem:[%s172 + $0x10] sm:$0xf] %v626
      %691 = vst [vmem:[%s172 + $0x14] sm:$0xf] %v627
      %692 = vst [vmem:[%s172 + $0x18] sm:$0xf] %v628
      %693 = vst [vmem:[%s172 + $0x1c] sm:$0xf] %v629
      %694 = vst [vmem:[%s172 + $0x20] sm:$0xf] %v630
      %695 = vst [vmem:[%s172 + $0x24] sm:$0xf] %v631
      %696 = vst [vmem:[%s172 + $0x28] sm:$0xf] %v632
      %697 = vst [vmem:[%s172 + $0x2c] sm:$0xf] %v633
      %698 = vst [vmem:[%s172 + $0x30] sm:$0xf] %v634
      %699 = vst [vmem:[%s172 + $0x34] sm:$0xf] %v635
      %700 = vst [vmem:[%s172 + $0x38] sm:$0xf] %v636
      %701 = vst [vmem:[%s172 + $0x3c] sm:$0xf] %v637
      %702 = vst [vmem:[%s172 + $0x40] sm:$0xf] %v638
      %703 = vst [vmem:[%s172 + $0x44] sm:$0xf] %v639
      %704 = vst [vmem:[%s172 + $0x48] sm:$0xf] %v640
      %705 = vst [vmem:[%s172 + $0x4c] sm:$0xf] %v641
      %706 = vst [vmem:[%s172 + $0x50] sm:$0xf] %v642
      %707 = vst [vmem:[%s172 + $0x54] sm:$0xf] %v643
      %708 = vst [vmem:[%s172 + $0x58] sm:$0xf] %v644
      %709 = vst [vmem:[%s172 + $0x5c] sm:$0xf] %v645
      %710 = vst [vmem:[%s172 + $0x60] sm:$0xf] %v646
      %711 = vst [vmem:[%s172 + $0x64] sm:$0xf] %v647
      %712 = vst [vmem:[%s172 + $0x68] sm:$0xf] %v648
      %713 = vst [vmem:[%s172 + $0x6c] sm:$0xf] %v649
      %714 = vst [vmem:[%s172 + $0x70] sm:$0xf] %v650
      %715 = vst [vmem:[%s172 + $0x74] sm:$0xf] %v651
      %716 = vst [vmem:[%s172 + $0x78] sm:$0xf] %v652
      %717 = vst [vmem:[%s172 + $0x7c] sm:$0xf] %v653
      %s718 = smul.u32 32, %s14
      %p719 = scmp.lt.s32.totalorder %s718, 63
      %s720 = scalar_select %p719, %s718, 63
      %s721 = smul.addr %s720, 4
      %s722 = scalar_lea.vmem %s3, %s721
      // Predicated region
      $region33: #{resnet_mvm_forward.7} parent=31 // pred_check
        %p723 = pneg %p100
      $region34: #{resnet_mvm_forward.7} parent=31 // pred_check_branch
        %725 = sbr.rel (%p723) target = $region36
      $region35: #{resnet_mvm_forward.7} parent=31 // pred_region
        %s726 = smul.u32 32, %s14
      $region36: #{resnet_mvm_forward.7} parent=31 // pred_fallthru
        _
    $region32: #{resnet_mvm_forward.7} parent=5 // pred_fallthru
      _
    %p727 = scmp.le.s32.totalorder 2, %s9
    // Predicated region
    $region37: #{resnet_mvm_forward.7} parent=5 // pred_check
      %p728 = pneg %p727
    $region38: #{resnet_mvm_forward.7} parent=5 // pred_check_branch
      %730 = sbr.rel (%p728) target = $region40
    $region39: #{resnet_mvm_forward.7} parent=5 // pred_region
      %s731 = ssub.s32 %s9, 2
      // Predicated region
      $region41: #{resnet_mvm_forward.7} parent=39 // pred_check
        %p732 = pneg %p106
      $region42: #{resnet_mvm_forward.7} parent=39 // pred_check_branch
        %734 = sbr.rel (%p732) target = $region44
      $region43: #{resnet_mvm_forward.7} parent=39 // pred_region
        %s735 = smul.u32 32, %s15
        %p736 = scmp.lt.s32.totalorder %s735, 63
        %s737 = scalar_select %p736, %s735, 63
        %s738 = smul.addr %s737, 4
        %s739 = scalar_lea.vmem %s3, %s738
      $region44: #{resnet_mvm_forward.7} parent=39 // pred_fallthru
        _
    $region40: #{resnet_mvm_forward.7} parent=5 // pred_fallthru
      _
  $region6: #{resnet_mvm_forward.7} parent=0 // loop_footer
    %s13 = sadd.s32 1, %s9
  $region7: #{resnet_mvm_forward.7} parent=0 // loop_footer_branch
    %8 = sbr.rel target = $region3
  $region8: #{resnet_mvm_forward.7} parent=0 // loop_exit
    _

// kernel: resnet_mvm_forward.8
$region0: #{resnet_mvm_forward.8}
  #allocation0 [shape = 'u32[]', space=smem, size = 0x4, offset = 0x4, fixed_abs, tag = 'smem constant byte address 0x4 - core index']
  #allocation1 [shape = 'u32[144,128]{1,0:T(1,128)}', space=vmem, size = 0x12000, scoped, tag = 'internal scratch']
  %s0 = inlined_call_operand.vmem [shape: bf16[512,144], index: 0, kind: input, shape index: {}]
  %s1 = inlined_call_operand.vmem [shape: bf16[144,128], index: 1, kind: input, shape index: {}]
  %s2 = inlined_call_operand.vmem [shape: f32[1,128], index: 2, kind: input, shape index: {}]
  %s3 = inlined_call_operand.vmem [shape: bf16[512,128], index: 3, kind: output, shape index: {}]
  %s4 = sld [smem:[#allocation0]]
  $region45: #{resnet_mvm_forward.8} parent=0
    _
  %s6 = ssub.s32 1, %s4
  %s7 = scalar_select 0, %s6, %s4
  loop: start=0, step=1, limit=4
  $region2: #{resnet_mvm_forward.8} parent=0 // loop_pre_header
    _
  $region3: #{resnet_mvm_forward.8} parent=0 // loop_header
    %s9 = sphi 0, %s13
    %p10 = scmp.ge.s32.totalorder %s9, 4
    %s19 = sphi 0, %s21
    %s22 = sphi 0, %s19
    %s23 = sphi 0, %s22
    %s39 = sphi 0, %s23
    %s43 = sphi 0, %s43
    %s45 = sphi 0, %s43
    %s46 = sphi 0, %s45
    %s60 = sphi 0, %s46
    %s64 = sphi 0, %s64
    %s66 = sphi 0, %s64
    %s67 = sphi 0, %s66
    %s81 = sphi 0, %s67
    %s87 = sphi 0, %s89
    %s90 = sphi 0, %s87
    %s91 = sphi 0, %s90
    %s107 = sphi 0, %s91
  $region4: #{resnet_mvm_forward.8} parent=0 // loop_header_branch
    %12 = sbr.rel (%p10) target = $region8
  $region5: #{resnet_mvm_forward.8} parent=0 // loop_body
    %s14 = ssub.s32 %s9, 1
    %s15 = ssub.s32 %s9, 2
    %s16 = sadd.s32 %s9, 1
    %s17 = ssub.s32 %s9, %s16
    %p18 = scmp.eq.s32.totalorder %s17, 0
    %s20 = sadd.s32 %s19, 1
    %s21 = scalar_select %p18, %s19, %s20
    %p24 = pneg %p18
    %p25 = scmp.eq.s32.totalorder %s9, 1
    %p26 = por %p24, %p25
    %p27 = scmp.ne.s32.totalorder %s19, %s22
    %p28 = scmp.eq.s32.totalorder %s9, 0
    %p29 = por %p27, %p28
    %p30 = scmp.ne.s32.totalorder %s19, %s22
    %p31 = scmp.eq.s32.totalorder %s14, 1
    %p32 = por %p30, %p31
    %p33 = scmp.ne.s32.totalorder %s22, %s23
    %p34 = scmp.eq.s32.totalorder %s14, 0
    %p35 = por %p33, %p34
    %p36 = scmp.ne.s32.totalorder %s22, %s23
    %p37 = scmp.eq.s32.totalorder %s15, 1
    %p38 = por %p36, %p37
    %p40 = scmp.ne.s32.totalorder %s23, %s39
    %p41 = scmp.eq.s32.totalorder %s15, 0
    %p42 = por %p40, %p41
    %s44 = sadd.s32 %s43, 1
    %p47 = scmp.eq.s32.totalorder %s9, 1
    %p48 = scmp.ne.s32.totalorder %s43, %s45
    %p49 = scmp.eq.s32.totalorder %s9, 0
    %p50 = por %p48, %p49
    %p51 = scmp.ne.s32.totalorder %s43, %s45
    %p52 = scmp.eq.s32.totalorder %s14, 1
    %p53 = por %p51, %p52
    %p54 = scmp.ne.s32.totalorder %s45, %s46
    %p55 = scmp.eq.s32.totalorder %s14, 0
    %p56 = por %p54, %p55
    %p57 = scmp.ne.s32.totalorder %s45, %s46
    %p58 = scmp.eq.s32.totalorder %s15, 1
    %p59 = por %p57, %p58
    %p61 = scmp.ne.s32.totalorder %s46, %s60
    %p62 = scmp.eq.s32.totalorder %s15, 0
    %p63 = por %p61, %p62
    %s65 = sadd.s32 %s64, 1
    %p68 = scmp.eq.s32.totalorder %s9, 1
    %p69 = scmp.ne.s32.totalorder %s64, %s66
    %p70 = scmp.eq.s32.totalorder %s9, 0
    %p71 = por %p69, %p70
    %p72 = scmp.ne.s32.totalorder %s64, %s66
    %p73 = scmp.eq.s32.totalorder %s14, 1
    %p74 = por %p72, %p73
    %p75 = scmp.ne.s32.totalorder %s66, %s67
    %p76 = scmp.eq.s32.totalorder %s14, 0
    %p77 = por %p75, %p76
    %p78 = scmp.ne.s32.totalorder %s66, %s67
    %p79 = scmp.eq.s32.totalorder %s15, 1
    %p80 = por %p78, %p79
    %p82 = scmp.ne.s32.totalorder %s67, %s81
    %p83 = scmp.eq.s32.totalorder %s15, 0
    %p84 = por %p82, %p83
    %s85 = ssub.s32 %s9, %s16
    %p86 = scmp.eq.s32.totalorder %s85, 0
    %s88 = sadd.s32 %s87, 1
    %s89 = scalar_select %p86, %s87, %s88
    %p92 = pneg %p86
    %p93 = scmp.eq.s32.totalorder %s9, 1
    %p94 = por %p92, %p93
    %p95 = scmp.ne.s32.totalorder %s87, %s90
    %p96 = scmp.eq.s32.totalorder %s9, 0
    %p97 = por %p95, %p96
    %p98 = scmp.ne.s32.totalorder %s87, %s90
    %p99 = scmp.eq.s32.totalorder %s14, 1
    %p100 = por %p98, %p99
    %p101 = scmp.ne.s32.totalorder %s90, %s91
    %p102 = scmp.eq.s32.totalorder %s14, 0
    %p103 = por %p101, %p102
    %p104 = scmp.ne.s32.totalorder %s90, %s91
    %p105 = scmp.eq.s32.totalorder %s15, 1
    %p106 = por %p104, %p105
    %p108 = scmp.ne.s32.totalorder %s91, %s107
    %p109 = scmp.eq.s32.totalorder %s15, 0
    %p110 = por %p108, %p109
    %p111 = scmp.le.s32.totalorder 1, %s9
    %p112 = scmp.lt.s32.totalorder %s9, 3
    %p113 = pnand %p111, %p112
    %p114 = pneg %p113
    // Predicated region
    $region9: #{resnet_mvm_forward.8} parent=5 // pred_check
      _
    $region10: #{resnet_mvm_forward.8} parent=5 // pred_check_branch
      %116 = sbr.rel (%p113) target = $region12
    $region11: #{resnet_mvm_forward.8} parent=5 // pred_region
      %s117 = ssub.s32 %s9, 1
      // Predicated region
      $region13: #{resnet_mvm_forward.8} parent=11 // pred_check
        %p118 = pneg %p56
      $region14: #{resnet_mvm_forward.8} parent=11 // pred_check_branch
        %120 = sbr.rel (%p118) target = $region16
      $region15: #{resnet_mvm_forward.8} parent=11 // pred_region
        _
      $region16: #{resnet_mvm_forward.8} parent=11 // pred_fallthru
        _
      // Predicated region
      $region17: #{resnet_mvm_forward.8} parent=11 // pred_check
        %p121 = pneg %p77
      $region18: #{resnet_mvm_forward.8} parent=11 // pred_check_branch
        %123 = sbr.rel (%p121) target = $region20
      $region19: #{resnet_mvm_forward.8} parent=11 // pred_region
        _
      $region20: #{resnet_mvm_forward.8} parent=11 // pred_fallthru
        _
    $region12: #{resnet_mvm_forward.8} parent=5 // pred_fallthru
      _
    %p124 = scmp.lt.s32.totalorder %s9, 2
    // Predicated region
    $region21: #{resnet_mvm_forward.8} parent=5 // pred_check
      %p125 = pneg %p124
    $region22: #{resnet_mvm_forward.8} parent=5 // pred_check_branch
      %127 = sbr.rel (%p125) target = $region24
    $region23: #{resnet_mvm_forward.8} parent=5 // pred_region
      // Predicated region
      $region25: #{resnet_mvm_forward.8} parent=23 // pred_check
        %p128 = pneg %p29
      $region26: #{resnet_mvm_forward.8} parent=23 // pred_check_branch
        %130 = sbr.rel (%p128) target = $region28
      $region27: #{resnet_mvm_forward.8} parent=23 // pred_region
        %s131 = smul.u32 32, %s9
        %p132 = scmp.lt.s32.totalorder %s131, 63
        %s133 = scalar_select %p132, %s131, 63
        %s134 = smul.addr %s133, 2
        %s135 = smul.addr %s134, 4
        %s136 = scalar_lea.vmem %s0, %s135
        %s137 = smul.u32 32, %s9
      $region28: #{resnet_mvm_forward.8} parent=23 // pred_fallthru
        _
    $region24: #{resnet_mvm_forward.8} parent=5 // pred_fallthru
      _
    %p138 = scmp.le.s32.totalorder 1, %s9
    %p139 = scmp.lt.s32.totalorder %s9, 3
    %p140 = pnand %p138, %p139
    %p141 = pneg %p140
    // Predicated region
    $region29: #{resnet_mvm_forward.8} parent=5 // pred_check
      _
    $region30: #{resnet_mvm_forward.8} parent=5 // pred_check_branch
      %143 = sbr.rel (%p140) target = $region32
    $region31: #{resnet_mvm_forward.8} parent=5 // pred_region
      %s144 = ssub.s32 %s9, 1
      %s145 = smul.u32 32, %s14
      %p146 = scmp.lt.s32.totalorder %s145, 63
      %s147 = scalar_select %p146, %s145, 63
      %s148 = smul.addr %s147, 2
      %s149 = smul.addr %s148, 4
      %s150 = scalar_lea.vmem %s0, %s149
      %p151 = pneg %p35
      %p152 = pneg %p32
      %p153 = pneg %p56
      %p154 = pneg %p53
      %p155 = pneg %p77
      %p156 = pneg %p74
      %p157 = pneg %p103
      %p158 = pneg %p100
      %s159 = smul.u32 32, %s14
      %p160 = scmp.lt.s32.totalorder %s159, 63
      %s161 = scalar_select %p160, %s159, 63
      %s162 = smul.addr %s161, 4
      %s163 = scalar_lea.vmem %s3, %s162
      %s164 = smul.u32 32, %s14
      %p165 = scmp.lt.s32.totalorder %s164, 63
      %s166 = scalar_select %p165, %s164, 63
      %s167 = smul.addr %s166, 2
      %s168 = smul.addr %s167, 4
      %s169 = scalar_lea.vmem %s0, %s168
      %s170 = smul.u32 32, %s14
      %s171 = smul.u32 32, %s14
      %p172 = scmp.lt.s32.totalorder %s171, 63
      %s173 = scalar_select %p172, %s171, 63
      %s174 = smul.addr %s173, 4
      %s175 = scalar_lea.vmem %s3, %s174
      %s176 = smul.u32 32, %s14
      %v178 = vld [vmem:[%s169] sm:$0xff]
      %v179 = vld [vmem:[%s169 + $0x8] sm:$0xff]
      %v180 = vld [vmem:[%s169 + $0x10] sm:$0xff]
      %v181 = vld [vmem:[%s169 + $0x18] sm:$0xff]
      %v182 = vld [vmem:[%s169 + $0x20] sm:$0xff]
      %v183 = vld [vmem:[%s169 + $0x28] sm:$0xff]
      %v184 = vld [vmem:[%s169 + $0x30] sm:$0xff]
      %v185 = vld [vmem:[%s169 + $0x38] sm:$0xff]
      %v186 = vld [vmem:[%s169 + $0x40] sm:$0xff]
      %v187 = vld [vmem:[%s169 + $0x48] sm:$0xff]
      %v188 = vld [vmem:[%s169 + $0x50] sm:$0xff]
      %v189 = vld [vmem:[%s169 + $0x58] sm:$0xff]
      %v190 = vld [vmem:[%s169 + $0x60] sm:$0xff]
      %v191 = vld [vmem:[%s169 + $0x68] sm:$0xff]
      %v192 = vld [vmem:[%s169 + $0x70] sm:$0xff]
      %v193 = vld [vmem:[%s169 + $0x78] sm:$0xff]
      %v194 = vld [vmem:[%s169 + $0x80] sm:$0xff]
      %v195 = vld [vmem:[%s169 + $0x88] sm:$0xff]
      %v196 = vld [vmem:[%s169 + $0x90] sm:$0xff]
      %v197 = vld [vmem:[%s169 + $0x98] sm:$0xff]
      %v198 = vld [vmem:[%s169 + $0xa0] sm:$0xff]
      %v199 = vld [vmem:[%s169 + $0xa8] sm:$0xff]
      %v200 = vld [vmem:[%s169 + $0xb0] sm:$0xff]
      %v201 = vld [vmem:[%s169 + $0xb8] sm:$0xff]
      %v202 = vld [vmem:[%s169 + $0xc0] sm:$0xff]
      %v203 = vld [vmem:[%s169 + $0xc8] sm:$0xff]
      %v204 = vld [vmem:[%s169 + $0xd0] sm:$0xff]
      %v205 = vld [vmem:[%s169 + $0xd8] sm:$0xff]
      %v206 = vld [vmem:[%s169 + $0xe0] sm:$0xff]
      %v207 = vld [vmem:[%s169 + $0xe8] sm:$0xff]
      %v208 = vld [vmem:[%s169 + $0xf0] sm:$0xff]
      %v209 = vld [vmem:[%s169 + $0xf8] sm:$0xff]
      %v210 = vld [vmem:[%s1] sm:$0xf]
      %v211 = vld [vmem:[%s1 + $0x4] sm:$0xf]
      %v212 = vld [vmem:[%s1 + $0x8] sm:$0xf]
      %v213 = vld [vmem:[%s1 + $0xc] sm:$0xf]
      %v214 = vld [vmem:[%s1 + $0x10] sm:$0xf]
      %v215 = vld [vmem:[%s1 + $0x14] sm:$0xf]
      %v216 = vld [vmem:[%s1 + $0x18] sm:$0xf]
      %v217 = vld [vmem:[%s1 + $0x1c] sm:$0xf]
      %v218 = vld [vmem:[%s1 + $0x20] sm:$0xf]
      %v219 = vld [vmem:[%s1 + $0x24] sm:$0xf]
      %v220 = vld [vmem:[%s1 + $0x28] sm:$0xf]
      %v221 = vld [vmem:[%s1 + $0x2c] sm:$0xf]
      %v222 = vld [vmem:[%s1 + $0x30] sm:$0xf]
      %v223 = vld [vmem:[%s1 + $0x34] sm:$0xf]
      %v224 = vld [vmem:[%s1 + $0x38] sm:$0xf]
      %v225 = vld [vmem:[%s1 + $0x3c] sm:$0xf]
      %v226 = vld [vmem:[%s1 + $0x40] sm:$0xf]
      %v227 = vld [vmem:[%s1 + $0x44] sm:$0xf]
      %v228 = vld [vmem:[%s2] sm:$0x1]
      %v230 = vlaneseq
      %v231 = vshrl.u32 %v230, 7
      %v232 = vsub.s32 0, %v231
      %v233 = vrot.slane %v228, %v232
      %v267 = vunpack.c.l.b16 %v178
      %v268 = vunpack.c.h.b16 %v178
      %v269 = vunpack.c.l.b16 %v179
      %v270 = vunpack.c.h.b16 %v179
      %v271 = vunpack.c.l.b16 %v180
      %v272 = vunpack.c.h.b16 %v180
      %v273 = vunpack.c.l.b16 %v181
      %v274 = vunpack.c.h.b16 %v181
      %v275 = vunpack.c.l.b16 %v182
      %v276 = vunpack.c.h.b16 %v182
      %v277 = vunpack.c.l.b16 %v183
      %v278 = vunpack.c.h.b16 %v183
      %v279 = vunpack.c.l.b16 %v184
      %v280 = vunpack.c.h.b16 %v184
      %v281 = vunpack.c.l.b16 %v185
      %v282 = vunpack.c.h.b16 %v185
      %v283 = vunpack.c.l.b16 %v186
      %v284 = vunpack.c.h.b16 %v186
      %v285 = vunpack.c.l.b16 %v187
      %v286 = vunpack.c.h.b16 %v187
      %v287 = vunpack.c.l.b16 %v188
      %v288 = vunpack.c.h.b16 %v188
      %v289 = vunpack.c.l.b16 %v189
      %v290 = vunpack.c.h.b16 %v189
      %v291 = vunpack.c.l.b16 %v190
      %v292 = vunpack.c.h.b16 %v190
      %v293 = vunpack.c.l.b16 %v191
      %v294 = vunpack.c.h.b16 %v191
      %v295 = vunpack.c.l.b16 %v192
      %v296 = vunpack.c.h.b16 %v192
      %v297 = vunpack.c.l.b16 %v193
      %v298 = vunpack.c.h.b16 %v193
      %v299 = vunpack.c.l.b16 %v194
      %v300 = vunpack.c.h.b16 %v194
      %v301 = vunpack.c.l.b16 %v195
      %v302 = vunpack.c.h.b16 %v195
      %v303 = vunpack.c.l.b16 %v196
      %v304 = vunpack.c.h.b16 %v196
      %v305 = vunpack.c.l.b16 %v197
      %v306 = vunpack.c.h.b16 %v197
      %v307 = vunpack.c.l.b16 %v198
      %v308 = vunpack.c.h.b16 %v198
      %v309 = vunpack.c.l.b16 %v199
      %v310 = vunpack.c.h.b16 %v199
      %v311 = vunpack.c.l.b16 %v200
      %v312 = vunpack.c.h.b16 %v200
      %v313 = vunpack.c.l.b16 %v201
      %v314 = vunpack.c.h.b16 %v201
      %v315 = vunpack.c.l.b16 %v202
      %v316 = vunpack.c.h.b16 %v202
      %v317 = vunpack.c.l.b16 %v203
      %v318 = vunpack.c.h.b16 %v203
      %v319 = vunpack.c.l.b16 %v204
      %v320 = vunpack.c.h.b16 %v204
      %v321 = vunpack.c.l.b16 %v205
      %v322 = vunpack.c.h.b16 %v205
      %v323 = vunpack.c.l.b16 %v206
      %v324 = vunpack.c.h.b16 %v206
      %v325 = vunpack.c.l.b16 %v207
      %v326 = vunpack.c.h.b16 %v207
      %v327 = vunpack.c.l.b16 %v208
      %v328 = vunpack.c.h.b16 %v208
      %v329 = vunpack.c.l.b16 %v209
      %v330 = vunpack.c.h.b16 %v209
      %v331 = vpack.c.b16 %v269, %v267
      %v332 = vpack.c.b16 %v270, %v268
      %v333 = vpack.c.b16 %v273, %v271
      %v334 = vpack.c.b16 %v274, %v272
      %v335 = vpack.c.b16 %v277, %v275
      %v336 = vpack.c.b16 %v278, %v276
      %v337 = vpack.c.b16 %v281, %v279
      %v338 = vpack.c.b16 %v282, %v280
      %v339 = vpack.c.b16 %v285, %v283
      %v340 = vpack.c.b16 %v286, %v284
      %v341 = vpack.c.b16 %v289, %v287
      %v342 = vpack.c.b16 %v290, %v288
      %v343 = vpack.c.b16 %v293, %v291
      %v344 = vpack.c.b16 %v294, %v292
      %v345 = vpack.c.b16 %v297, %v295
      %v346 = vpack.c.b16 %v298, %v296
      %v347 = vpack.c.b16 %v301, %v299
      %v348 = vpack.c.b16 %v302, %v300
      %v349 = vpack.c.b16 %v305, %v303
      %v350 = vpack.c.b16 %v306, %v304
      %v351 = vpack.c.b16 %v309, %v307
      %v352 = vpack.c.b16 %v310, %v308
      %v353 = vpack.c.b16 %v313, %v311
      %v354 = vpack.c.b16 %v314, %v312
      %v355 = vpack.c.b16 %v317, %v315
      %v356 = vpack.c.b16 %v318, %v316
      %v357 = vpack.c.b16 %v321, %v319
      %v358 = vpack.c.b16 %v322, %v320
      %v359 = vpack.c.b16 %v325, %v323
      %v360 = vpack.c.b16 %v326, %v324
      %v361 = vpack.c.b16 %v329, %v327
      %v362 = vpack.c.b16 %v330, %v328
      %v397 = vunpack.c.l.b16 %v210
      %v398 = vunpack.c.l.b16 %v211
      %v399 = vunpack.c.l.b16 %v212
      %v400 = vunpack.c.l.b16 %v213
      %v401 = vunpack.c.l.b16 %v214
      %v402 = vunpack.c.l.b16 %v215
      %v403 = vunpack.c.l.b16 %v216
      %v404 = vunpack.c.l.b16 %v217
      %v405 = vunpack.c.l.b16 %v218
      %v406 = vunpack.c.l.b16 %v219
      %v407 = vunpack.c.l.b16 %v220
      %v408 = vunpack.c.l.b16 %v221
      %v409 = vunpack.c.l.b16 %v222
      %v410 = vunpack.c.l.b16 %v223
      %v411 = vunpack.c.l.b16 %v224
      %v412 = vunpack.c.l.b16 %v225
      %v413 = vunpack.c.l.b16 %v226
      %v414 = vunpack.c.l.b16 %v227
      %v415 = vpack.c.b16 %v398, %v397
      %v416 = vpack.c.b16 %v400, %v399
      %v417 = vpack.c.b16 %v402, %v401
      %v418 = vpack.c.b16 %v404, %v403
      %v419 = vpack.c.b16 %v406, %v405
      %v420 = vpack.c.b16 %v408, %v407
      %v421 = vpack.c.b16 %v410, %v409
      %v422 = vpack.c.b16 %v412, %v411
      %v423 = vpack.c.b16 %v414, %v413
      %vm433 = vcmask 130048
      %v435 = vsel %vm433, %v332, 0
      %v438 = vsel %vm433, %v334, 0
      %v441 = vsel %vm433, %v336, 0
      %v444 = vsel %vm433, %v338, 0
      %v447 = vsel %vm433, %v340, 0
      %v450 = vsel %vm433, %v342, 0
      %v453 = vsel %vm433, %v344, 0
      %v456 = vsel %vm433, %v346, 0
      %v459 = vsel %vm433, %v348, 0
      %v462 = vsel %vm433, %v350, 0
      %v465 = vsel %vm433, %v352, 0
      %v468 = vsel %vm433, %v354, 0
      %v471 = vsel %vm433, %v356, 0
      %v474 = vsel %vm433, %v358, 0
      %v477 = vsel %vm433, %v360, 0
      %v480 = vsel %vm433, %v362, 0
      %482 = vmatprep.subr.bf16.mxu0 0
      %483 = vmatpush1.bf16.msra.mxu0 %v415
      %484 = vmatprep.subr.bf16.mxu0 0
      %485 = vmatpush1.bf16.msra.mxu0 %v416
      %486 = vmatprep.subr.bf16.mxu0 0
      %487 = vmatpush1.bf16.msra.mxu0 %v417
      %488 = vmatprep.subr.bf16.mxu0 0
      %489 = vmatpush1.bf16.msra.mxu0 %v418
      %490 = vmatprep.subr.bf16.mxu0 0
      %491 = vmatpush1.bf16.msra.mxu0 %v419
      %492 = vmatprep.subr.bf16.mxu0 0
      %493 = vmatpush1.bf16.msra.mxu0 %v420
      %494 = vmatprep.subr.bf16.mxu0 0
      %495 = vmatpush1.bf16.msra.mxu0 %v421
      %496 = vmatprep.subr.bf16.mxu0 0
      %497 = vmatpush1.bf16.msra.mxu0 %v422
      %498 = vmatprep.subr.bf16.mxu0 0
      %499 = vmatpush1.bf16.msra.mxu0 %v423
      %500 = vmatprep.subr.bf16.mxu0 0
      %501 = vmatpush1.bf16.msra.mxu0 0
      %502 = vmatprep.subr.bf16.mxu0 0
      %503 = vmatpush1.bf16.msra.mxu0 0
      %504 = vmatprep.subr.bf16.mxu0 0
      %505 = vmatpush1.bf16.msra.mxu0 0
      %506 = vmatprep.subr.bf16.mxu0 0
      %507 = vmatpush1.bf16.msra.mxu0 0
      %508 = vmatprep.subr.bf16.mxu0 0
      %509 = vmatpush1.bf16.msra.mxu0 0
      %510 = vmatprep.subr.bf16.mxu0 0
      %511 = vmatpush1.bf16.msra.mxu0 0
      %512 = vmatprep.subr.bf16.mxu0 0
      %513 = vmatpush1.bf16.msra.mxu0 0
      %514 = vmatprep.mubr.bf16.mxu0 %v435
      %515 = vmatmul.mubr.bf16.gmra.mrb[0].mxu0 %v331
      %v516 = vpop.f32.mrb[0].mxu0
      %v517 = vadd.f32 %v233, %v516
      %v518 = vpop.f32.mrb[0].mxu0
      %v519 = vpop.f32.mrb[0].mxu0
      %v520 = vadd.f32 %v233, %v519
      %v521 = vpop.f32.mrb[0].mxu0
      %522 = vmatprep.mubr.bf16.mxu0 %v438
      %523 = vmatmul.mubr.bf16.gmra.mrb[0].mxu0 %v333
      %v524 = vpop.f32.mrb[0].mxu0
      %v525 = vadd.f32 %v233, %v524
      %v526 = vpop.f32.mrb[0].mxu0
      %v527 = vpop.f32.mrb[0].mxu0
      %v528 = vadd.f32 %v233, %v527
      %v529 = vpop.f32.mrb[0].mxu0
      %530 = vmatprep.mubr.bf16.mxu0 %v441
      %531 = vmatmul.mubr.bf16.gmra.mrb[0].mxu0 %v335
      %v532 = vpop.f32.mrb[0].mxu0
      %v533 = vadd.f32 %v233, %v532
      %v534 = vpop.f32.mrb[0].mxu0
      %v535 = vpop.f32.mrb[0].mxu0
      %v536 = vadd.f32 %v233, %v535
      %v537 = vpop.f32.mrb[0].mxu0
      %538 = vmatprep.mubr.bf16.mxu0 %v444
      %539 = vmatmul.mubr.bf16.gmra.mrb[0].mxu0 %v337
      %v540 = vpop.f32.mrb[0].mxu0
      %v541 = vadd.f32 %v233, %v540
      %v542 = vpop.f32.mrb[0].mxu0
      %v543 = vpop.f32.mrb[0].mxu0
      %v544 = vadd.f32 %v233, %v543
      %v545 = vpop.f32.mrb[0].mxu0
      %546 = vmatprep.mubr.bf16.mxu0 %v447
      %547 = vmatmul.mubr.bf16.gmra.mrb[0].mxu0 %v339
      %v548 = vpop.f32.mrb[0].mxu0
      %v549 = vadd.f32 %v233, %v548
      %v550 = vpop.f32.mrb[0].mxu0
      %v551 = vpop.f32.mrb[0].mxu0
      %v552 = vadd.f32 %v233, %v551
      %v553 = vpop.f32.mrb[0].mxu0
      %554 = vmatprep.mubr.bf16.mxu0 %v450
      %555 = vmatmul.mubr.bf16.gmra.mrb[0].mxu0 %v341
      %v556 = vpop.f32.mrb[0].mxu0
      %v557 = vadd.f32 %v233, %v556
      %v558 = vpop.f32.mrb[0].mxu0
      %v559 = vpop.f32.mrb[0].mxu0
      %v560 = vadd.f32 %v233, %v559
      %v561 = vpop.f32.mrb[0].mxu0
      %562 = vmatprep.mubr.bf16.mxu0 %v453
      %563 = vmatmul.mubr.bf16.gmra.mrb[0].mxu0 %v343
      %v564 = vpop.f32.mrb[0].mxu0
      %v565 = vadd.f32 %v233, %v564
      %v566 = vpop.f32.mrb[0].mxu0
      %v567 = vpop.f32.mrb[0].mxu0
      %v568 = vadd.f32 %v233, %v567
      %v569 = vpop.f32.mrb[0].mxu0
      %570 = vmatprep.mubr.bf16.mxu0 %v456
      %571 = vmatmul.mubr.bf16.gmra.mrb[0].mxu0 %v345
      %v572 = vpop.f32.mrb[0].mxu0
      %v573 = vadd.f32 %v233, %v572
      %v574 = vpop.f32.mrb[0].mxu0
      %v575 = vpop.f32.mrb[0].mxu0
      %v576 = vadd.f32 %v233, %v575
      %v577 = vpop.f32.mrb[0].mxu0
      %578 = vmatprep.mubr.bf16.mxu0 %v459
      %579 = vmatmul.mubr.bf16.gmra.mrb[0].mxu0 %v347
      %v580 = vpop.f32.mrb[0].mxu0
      %v581 = vadd.f32 %v233, %v580
      %v582 = vpop.f32.mrb[0].mxu0
      %v583 = vpop.f32.mrb[0].mxu0
      %v584 = vadd.f32 %v233, %v583
      %v585 = vpop.f32.mrb[0].mxu0
      %586 = vmatprep.mubr.bf16.mxu0 %v462
      %587 = vmatmul.mubr.bf16.gmra.mrb[0].mxu0 %v349
      %v588 = vpop.f32.mrb[0].mxu0
      %v589 = vadd.f32 %v233, %v588
      %v590 = vpop.f32.mrb[0].mxu0
      %v591 = vpop.f32.mrb[0].mxu0
      %v592 = vadd.f32 %v233, %v591
      %v593 = vpop.f32.mrb[0].mxu0
      %594 = vmatprep.mubr.bf16.mxu0 %v465
      %595 = vmatmul.mubr.bf16.gmra.mrb[0].mxu0 %v351
      %v596 = vpop.f32.mrb[0].mxu0
      %v597 = vadd.f32 %v233, %v596
      %v598 = vpop.f32.mrb[0].mxu0
      %v599 = vpop.f32.mrb[0].mxu0
      %v600 = vadd.f32 %v233, %v599
      %v601 = vpop.f32.mrb[0].mxu0
      %602 = vmatprep.mubr.bf16.mxu0 %v468
      %603 = vmatmul.mubr.bf16.gmra.mrb[0].mxu0 %v353
      %v604 = vpop.f32.mrb[0].mxu0
      %v605 = vadd.f32 %v233, %v604
      %v606 = vpop.f32.mrb[0].mxu0
      %v607 = vpop.f32.mrb[0].mxu0
      %v608 = vadd.f32 %v233, %v607
      %v609 = vpop.f32.mrb[0].mxu0
      %610 = vmatprep.mubr.bf16.mxu0 %v471
      %611 = vmatmul.mubr.bf16.gmra.mrb[0].mxu0 %v355
      %v612 = vpop.f32.mrb[0].mxu0
      %v613 = vadd.f32 %v233, %v612
      %v614 = vpop.f32.mrb[0].mxu0
      %v615 = vpop.f32.mrb[0].mxu0
      %v616 = vadd.f32 %v233, %v615
      %v617 = vpop.f32.mrb[0].mxu0
      %618 = vmatprep.mubr.bf16.mxu0 %v474
      %619 = vmatmul.mubr.bf16.gmra.mrb[0].mxu0 %v357
      %v620 = vpop.f32.mrb[0].mxu0
      %v621 = vadd.f32 %v233, %v620
      %v622 = vpop.f32.mrb[0].mxu0
      %v623 = vpop.f32.mrb[0].mxu0
      %v624 = vadd.f32 %v233, %v623
      %v625 = vpop.f32.mrb[0].mxu0
      %626 = vmatprep.mubr.bf16.mxu0 %v477
      %627 = vmatmul.mubr.bf16.gmra.mrb[0].mxu0 %v359
      %v628 = vpop.f32.mrb[0].mxu0
      %v629 = vadd.f32 %v233, %v628
      %v630 = vpop.f32.mrb[0].mxu0
      %v631 = vpop.f32.mrb[0].mxu0
      %v632 = vadd.f32 %v233, %v631
      %v633 = vpop.f32.mrb[0].mxu0
      %634 = vmatprep.mubr.bf16.mxu0 %v480
      %635 = vmatmul.mubr.bf16.gmra.mrb[0].mxu0 %v361
      %v636 = vpop.f32.mrb[0].mxu0
      %v637 = vadd.f32 %v233, %v636
      %v638 = vpop.f32.mrb[0].mxu0
      %v639 = vpop.f32.mrb[0].mxu0
      %v640 = vadd.f32 %v233, %v639
      %v641 = vpop.f32.mrb[0].mxu0
      %642 = vdwg.mxu0
      %v643 = vmax.f32 %v517, 0.0
      %v644 = vmax.f32 %v520, 0.0
      %v645 = vmax.f32 %v525, 0.0
      %v646 = vmax.f32 %v528, 0.0
      %v647 = vmax.f32 %v533, 0.0
      %v648 = vmax.f32 %v536, 0.0
      %v649 = vmax.f32 %v541, 0.0
      %v650 = vmax.f32 %v544, 0.0
      %v651 = vmax.f32 %v549, 0.0
      %v652 = vmax.f32 %v552, 0.0
      %v653 = vmax.f32 %v557, 0.0
      %v654 = vmax.f32 %v560, 0.0
      %v655 = vmax.f32 %v565, 0.0
      %v656 = vmax.f32 %v568, 0.0
      %v657 = vmax.f32 %v573, 0.0
      %v658 = vmax.f32 %v576, 0.0
      %v659 = vmax.f32 %v581, 0.0
      %v660 = vmax.f32 %v584, 0.0
      %v661 = vmax.f32 %v589, 0.0
      %v662 = vmax.f32 %v592, 0.0
      %v663 = vmax.f32 %v597, 0.0
      %v664 = vmax.f32 %v600, 0.0
      %v665 = vmax.f32 %v605, 0.0
      %v666 = vmax.f32 %v608, 0.0
      %v667 = vmax.f32 %v613, 0.0
      %v668 = vmax.f32 %v616, 0.0
      %v669 = vmax.f32 %v621, 0.0
      %v670 = vmax.f32 %v624, 0.0
      %v671 = vmax.f32 %v629, 0.0
      %v672 = vmax.f32 %v632, 0.0
      %v673 = vmax.f32 %v637, 0.0
      %v674 = vmax.f32 %v640, 0.0
      %v675 = vpack.c.bf16 %v644, %v643
      %v676 = vpack.c.bf16 %v646, %v645
      %v677 = vpack.c.bf16 %v648, %v647
      %v678 = vpack.c.bf16 %v650, %v649
      %v679 = vpack.c.bf16 %v652, %v651
      %v680 = vpack.c.bf16 %v654, %v653
      %v681 = vpack.c.bf16 %v656, %v655
      %v682 = vpack.c.bf16 %v658, %v657
      %v683 = vpack.c.bf16 %v660, %v659
      %v684 = vpack.c.bf16 %v662, %v661
      %v685 = vpack.c.bf16 %v664, %v663
      %v686 = vpack.c.bf16 %v666, %v665
      %v687 = vpack.c.bf16 %v668, %v667
      %v688 = vpack.c.bf16 %v670, %v669
      %v689 = vpack.c.bf16 %v672, %v671
      %v690 = vpack.c.bf16 %v674, %v673
      %v707 = vunpack.c.l.b16 %v675
      %v708 = vunpack.c.h.b16 %v675
      %v709 = vunpack.c.l.b16 %v676
      %v710 = vunpack.c.h.b16 %v676
      %v711 = vunpack.c.l.b16 %v677
      %v712 = vunpack.c.h.b16 %v677
      %v713 = vunpack.c.l.b16 %v678
      %v714 = vunpack.c.h.b16 %v678
      %v715 = vunpack.c.l.b16 %v679
      %v716 = vunpack.c.h.b16 %v679
      %v717 = vunpack.c.l.b16 %v680
      %v718 = vunpack.c.h.b16 %v680
      %v719 = vunpack.c.l.b16 %v681
      %v720 = vunpack.c.h.b16 %v681
      %v721 = vunpack.c.l.b16 %v682
      %v722 = vunpack.c.h.b16 %v682
      %v723 = vunpack.c.l.b16 %v683
      %v724 = vunpack.c.h.b16 %v683
      %v725 = vunpack.c.l.b16 %v684
      %v726 = vunpack.c.h.b16 %v684
      %v727 = vunpack.c.l.b16 %v685
      %v728 = vunpack.c.h.b16 %v685
      %v729 = vunpack.c.l.b16 %v686
      %v730 = vunpack.c.h.b16 %v686
      %v731 = vunpack.c.l.b16 %v687
      %v732 = vunpack.c.h.b16 %v687
      %v733 = vunpack.c.l.b16 %v688
      %v734 = vunpack.c.h.b16 %v688
      %v735 = vunpack.c.l.b16 %v689
      %v736 = vunpack.c.h.b16 %v689
      %v737 = vunpack.c.l.b16 %v690
      %v738 = vunpack.c.h.b16 %v690
      %v739 = vpack.c.b16 %v707, %v707
      %v740 = vpack.c.b16 %v708, %v708
      %v741 = vpack.c.b16 %v709, %v709
      %v742 = vpack.c.b16 %v710, %v710
      %v743 = vpack.c.b16 %v711, %v711
      %v744 = vpack.c.b16 %v712, %v712
      %v745 = vpack.c.b16 %v713, %v713
      %v746 = vpack.c.b16 %v714, %v714
      %v747 = vpack.c.b16 %v715, %v715
      %v748 = vpack.c.b16 %v716, %v716
      %v749 = vpack.c.b16 %v717, %v717
      %v750 = vpack.c.b16 %v718, %v718
      %v751 = vpack.c.b16 %v719, %v719
      %v752 = vpack.c.b16 %v720, %v720
      %v753 = vpack.c.b16 %v721, %v721
      %v754 = vpack.c.b16 %v722, %v722
      %v755 = vpack.c.b16 %v723, %v723
      %v756 = vpack.c.b16 %v724, %v724
      %v757 = vpack.c.b16 %v725, %v725
      %v758 = vpack.c.b16 %v726, %v726
      %v759 = vpack.c.b16 %v727, %v727
      %v760 = vpack.c.b16 %v728, %v728
      %v761 = vpack.c.b16 %v729, %v729
      %v762 = vpack.c.b16 %v730, %v730
      %v763 = vpack.c.b16 %v731, %v731
      %v764 = vpack.c.b16 %v732, %v732
      %v765 = vpack.c.b16 %v733, %v733
      %v766 = vpack.c.b16 %v734, %v734
      %v767 = vpack.c.b16 %v735, %v735
      %v768 = vpack.c.b16 %v736, %v736
      %v769 = vpack.c.b16 %v737, %v737
      %v770 = vpack.c.b16 %v738, %v738
      %803 = vst [vmem:[%s175] sm:$0xf] %v739
      %804 = vst [vmem:[%s175 + $0x4] sm:$0xf] %v740
      %805 = vst [vmem:[%s175 + $0x8] sm:$0xf] %v741
      %806 = vst [vmem:[%s175 + $0xc] sm:$0xf] %v742
      %807 = vst [vmem:[%s175 + $0x10] sm:$0xf] %v743
      %808 = vst [vmem:[%s175 + $0x14] sm:$0xf] %v744
      %809 = vst [vmem:[%s175 + $0x18] sm:$0xf] %v745
      %810 = vst [vmem:[%s175 + $0x1c] sm:$0xf] %v746
      %811 = vst [vmem:[%s175 + $0x20] sm:$0xf] %v747
      %812 = vst [vmem:[%s175 + $0x24] sm:$0xf] %v748
      %813 = vst [vmem:[%s175 + $0x28] sm:$0xf] %v749
      %814 = vst [vmem:[%s175 + $0x2c] sm:$0xf] %v750
      %815 = vst [vmem:[%s175 + $0x30] sm:$0xf] %v751
      %816 = vst [vmem:[%s175 + $0x34] sm:$0xf] %v752
      %817 = vst [vmem:[%s175 + $0x38] sm:$0xf] %v753
      %818 = vst [vmem:[%s175 + $0x3c] sm:$0xf] %v754
      %819 = vst [vmem:[%s175 + $0x40] sm:$0xf] %v755
      %820 = vst [vmem:[%s175 + $0x44] sm:$0xf] %v756
      %821 = vst [vmem:[%s175 + $0x48] sm:$0xf] %v757
      %822 = vst [vmem:[%s175 + $0x4c] sm:$0xf] %v758
      %823 = vst [vmem:[%s175 + $0x50] sm:$0xf] %v759
      %824 = vst [vmem:[%s175 + $0x54] sm:$0xf] %v760
      %825 = vst [vmem:[%s175 + $0x58] sm:$0xf] %v761
      %826 = vst [vmem:[%s175 + $0x5c] sm:$0xf] %v762
      %827 = vst [vmem:[%s175 + $0x60] sm:$0xf] %v763
      %828 = vst [vmem:[%s175 + $0x64] sm:$0xf] %v764
      %829 = vst [vmem:[%s175 + $0x68] sm:$0xf] %v765
      %830 = vst [vmem:[%s175 + $0x6c] sm:$0xf] %v766
      %831 = vst [vmem:[%s175 + $0x70] sm:$0xf] %v767
      %832 = vst [vmem:[%s175 + $0x74] sm:$0xf] %v768
      %833 = vst [vmem:[%s175 + $0x78] sm:$0xf] %v769
      %834 = vst [vmem:[%s175 + $0x7c] sm:$0xf] %v770
      %s835 = smul.u32 32, %s14
      %p836 = scmp.lt.s32.totalorder %s835, 63
      %s837 = scalar_select %p836, %s835, 63
      %s838 = smul.addr %s837, 4
      %s839 = scalar_lea.vmem %s3, %s838
      // Predicated region
      $region33: #{resnet_mvm_forward.8} parent=31 // pred_check
        %p840 = pneg %p100
      $region34: #{resnet_mvm_forward.8} parent=31 // pred_check_branch
        %842 = sbr.rel (%p840) target = $region36
      $region35: #{resnet_mvm_forward.8} parent=31 // pred_region
        %s843 = smul.u32 32, %s14
      $region36: #{resnet_mvm_forward.8} parent=31 // pred_fallthru
        _
    $region32: #{resnet_mvm_forward.8} parent=5 // pred_fallthru
      _
    %p844 = scmp.le.s32.totalorder 2, %s9
    // Predicated region
    $region37: #{resnet_mvm_forward.8} parent=5 // pred_check
      %p845 = pneg %p844
    $region38: #{resnet_mvm_forward.8} parent=5 // pred_check_branch
      %847 = sbr.rel (%p845) target = $region40
    $region39: #{resnet_mvm_forward.8} parent=5 // pred_region
      %s848 = ssub.s32 %s9, 2
      // Predicated region
      $region41: #{resnet_mvm_forward.8} parent=39 // pred_check
        %p849 = pneg %p106
      $region42: #{resnet_mvm_forward.8} parent=39 // pred_check_branch
        %851 = sbr.rel (%p849) target = $region44
      $region43: #{resnet_mvm_forward.8} parent=39 // pred_region
        %s852 = smul.u32 32, %s15
        %p853 = scmp.lt.s32.totalorder %s852, 63
        %s854 = scalar_select %p853, %s852, 63
        %s855 = smul.addr %s854, 4
        %s856 = scalar_lea.vmem %s3, %s855
      $region44: #{resnet_mvm_forward.8} parent=39 // pred_fallthru
        _
    $region40: #{resnet_mvm_forward.8} parent=5 // pred_fallthru
      _
  $region6: #{resnet_mvm_forward.8} parent=0 // loop_footer
    %s13 = sadd.s32 1, %s9
  $region7: #{resnet_mvm_forward.8} parent=0 // loop_footer_branch
    %8 = sbr.rel target = $region3
  $region8: #{resnet_mvm_forward.8} parent=0 // loop_exit
    _

// kernel: resnet_mvm_forward.9
$region0: #{resnet_mvm_forward.9}
  #allocation0 [shape = 'u32[]', space=smem, size = 0x4, offset = 0x4, fixed_abs, tag = 'smem constant byte address 0x4 - core index']
  #allocation1 [shape = 'u32[144,128]{1,0:T(1,128)}', space=vmem, size = 0x12000, scoped, tag = 'internal scratch']
  %s0 = inlined_call_operand.vmem [shape: bf16[512,144], index: 0, kind: input, shape index: {}]
  %s1 = inlined_call_operand.vmem [shape: bf16[144,128], index: 1, kind: input, shape index: {}]
  %s2 = inlined_call_operand.vmem [shape: f32[1,128], index: 2, kind: input, shape index: {}]
  %s3 = inlined_call_operand.vmem [shape: bf16[512,128], index: 3, kind: input, shape index: {}]
  %s4 = inlined_call_operand.vmem [shape: bf16[512,128], index: 4, kind: output, shape index: {}]
  %s5 = sld [smem:[#allocation0]]
  $region49: #{resnet_mvm_forward.9} parent=0
    _
  %s7 = ssub.s32 1, %s5
  %s8 = scalar_select 0, %s7, %s5
  loop: start=0, step=1, limit=4
  $region2: #{resnet_mvm_forward.9} parent=0 // loop_pre_header
    _
  $region3: #{resnet_mvm_forward.9} parent=0 // loop_header
    %s10 = sphi 0, %s14
    %p11 = scmp.ge.s32.totalorder %s10, 4
    %s20 = sphi 0, %s22
    %s23 = sphi 0, %s20
    %s24 = sphi 0, %s23
    %s40 = sphi 0, %s24
    %s44 = sphi 0, %s44
    %s46 = sphi 0, %s44
    %s47 = sphi 0, %s46
    %s61 = sphi 0, %s47
    %s65 = sphi 0, %s65
    %s67 = sphi 0, %s65
    %s68 = sphi 0, %s67
    %s82 = sphi 0, %s68
    %s88 = sphi 0, %s90
    %s91 = sphi 0, %s88
    %s92 = sphi 0, %s91
    %s108 = sphi 0, %s92
    %s114 = sphi 0, %s116
    %s117 = sphi 0, %s114
    %s118 = sphi 0, %s117
    %s134 = sphi 0, %s118
  $region4: #{resnet_mvm_forward.9} parent=0 // loop_header_branch
    %13 = sbr.rel (%p11) target = $region8
  $region5: #{resnet_mvm_forward.9} parent=0 // loop_body
    %s15 = ssub.s32 %s10, 1
    %s16 = ssub.s32 %s10, 2
    %s17 = sadd.s32 %s10, 1
    %s18 = ssub.s32 %s10, %s17
    %p19 = scmp.eq.s32.totalorder %s18, 0
    %s21 = sadd.s32 %s20, 1
    %s22 = scalar_select %p19, %s20, %s21
    %p25 = pneg %p19
    %p26 = scmp.eq.s32.totalorder %s10, 1
    %p27 = por %p25, %p26
    %p28 = scmp.ne.s32.totalorder %s20, %s23
    %p29 = scmp.eq.s32.totalorder %s10, 0
    %p30 = por %p28, %p29
    %p31 = scmp.ne.s32.totalorder %s20, %s23
    %p32 = scmp.eq.s32.totalorder %s15, 1
    %p33 = por %p31, %p32
    %p34 = scmp.ne.s32.totalorder %s23, %s24
    %p35 = scmp.eq.s32.totalorder %s15, 0
    %p36 = por %p34, %p35
    %p37 = scmp.ne.s32.totalorder %s23, %s24
    %p38 = scmp.eq.s32.totalorder %s16, 1
    %p39 = por %p37, %p38
    %p41 = scmp.ne.s32.totalorder %s24, %s40
    %p42 = scmp.eq.s32.totalorder %s16, 0
    %p43 = por %p41, %p42
    %s45 = sadd.s32 %s44, 1
    %p48 = scmp.eq.s32.totalorder %s10, 1
    %p49 = scmp.ne.s32.totalorder %s44, %s46
    %p50 = scmp.eq.s32.totalorder %s10, 0
    %p51 = por %p49, %p50
    %p52 = scmp.ne.s32.totalorder %s44, %s46
    %p53 = scmp.eq.s32.totalorder %s15, 1
    %p54 = por %p52, %p53
    %p55 = scmp.ne.s32.totalorder %s46, %s47
    %p56 = scmp.eq.s32.totalorder %s15, 0
    %p57 = por %p55, %p56
    %p58 = scmp.ne.s32.totalorder %s46, %s47
    %p59 = scmp.eq.s32.totalorder %s16, 1
    %p60 = por %p58, %p59
    %p62 = scmp.ne.s32.totalorder %s47, %s61
    %p63 = scmp.eq.s32.totalorder %s16, 0
    %p64 = por %p62, %p63
    %s66 = sadd.s32 %s65, 1
    %p69 = scmp.eq.s32.totalorder %s10, 1
    %p70 = scmp.ne.s32.totalorder %s65, %s67
    %p71 = scmp.eq.s32.totalorder %s10, 0
    %p72 = por %p70, %p71
    %p73 = scmp.ne.s32.totalorder %s65, %s67
    %p74 = scmp.eq.s32.totalorder %s15, 1
    %p75 = por %p73, %p74
    %p76 = scmp.ne.s32.totalorder %s67, %s68
    %p77 = scmp.eq.s32.totalorder %s15, 0
    %p78 = por %p76, %p77
    %p79 = scmp.ne.s32.totalorder %s67, %s68
    %p80 = scmp.eq.s32.totalorder %s16, 1
    %p81 = por %p79, %p80
    %p83 = scmp.ne.s32.totalorder %s68, %s82
    %p84 = scmp.eq.s32.totalorder %s16, 0
    %p85 = por %p83, %p84
    %s86 = ssub.s32 %s10, %s17
    %p87 = scmp.eq.s32.totalorder %s86, 0
    %s89 = sadd.s32 %s88, 1
    %s90 = scalar_select %p87, %s88, %s89
    %p93 = pneg %p87
    %p94 = scmp.eq.s32.totalorder %s10, 1
    %p95 = por %p93, %p94
    %p96 = scmp.ne.s32.totalorder %s88, %s91
    %p97 = scmp.eq.s32.totalorder %s10, 0
    %p98 = por %p96, %p97
    %p99 = scmp.ne.s32.totalorder %s88, %s91
    %p100 = scmp.eq.s32.totalorder %s15, 1
    %p101 = por %p99, %p100
    %p102 = scmp.ne.s32.totalorder %s91, %s92
    %p103 = scmp.eq.s32.totalorder %s15, 0
    %p104 = por %p102, %p103
    %p105 = scmp.ne.s32.totalorder %s91, %s92
    %p106 = scmp.eq.s32.totalorder %s16, 1
    %p107 = por %p105, %p106
    %p109 = scmp.ne.s32.totalorder %s92, %s108
    %p110 = scmp.eq.s32.totalorder %s16, 0
    %p111 = por %p109, %p110
    %s112 = ssub.s32 %s10, %s17
    %p113 = scmp.eq.s32.totalorder %s112, 0
    %s115 = sadd.s32 %s114, 1
    %s116 = scalar_select %p113, %s114, %s115
    %p119 = pneg %p113
    %p120 = scmp.eq.s32.totalorder %s10, 1
    %p121 = por %p119, %p120
    %p122 = scmp.ne.s32.totalorder %s114, %s117
    %p123 = scmp.eq.s32.totalorder %s10, 0
    %p124 = por %p122, %p123
    %p125 = scmp.ne.s32.totalorder %s114, %s117
    %p126 = scmp.eq.s32.totalorder %s15, 1
    %p127 = por %p125, %p126
    %p128 = scmp.ne.s32.totalorder %s117, %s118
    %p129 = scmp.eq.s32.totalorder %s15, 0
    %p130 = por %p128, %p129
    %p131 = scmp.ne.s32.totalorder %s117, %s118
    %p132 = scmp.eq.s32.totalorder %s16, 1
    %p133 = por %p131, %p132
    %p135 = scmp.ne.s32.totalorder %s118, %s134
    %p136 = scmp.eq.s32.totalorder %s16, 0
    %p137 = por %p135, %p136
    %p138 = scmp.le.s32.totalorder 1, %s10
    %p139 = scmp.lt.s32.totalorder %s10, 3
    %p140 = pnand %p138, %p139
    %p141 = pneg %p140
    // Predicated region
    $region9: #{resnet_mvm_forward.9} parent=5 // pred_check
      _
    $region10: #{resnet_mvm_forward.9} parent=5 // pred_check_branch
      %143 = sbr.rel (%p140) target = $region12
    $region11: #{resnet_mvm_forward.9} parent=5 // pred_region
      %s144 = ssub.s32 %s10, 1
      // Predicated region
      $region13: #{resnet_mvm_forward.9} parent=11 // pred_check
        %p145 = pneg %p57
      $region14: #{resnet_mvm_forward.9} parent=11 // pred_check_branch
        %147 = sbr.rel (%p145) target = $region16
      $region15: #{resnet_mvm_forward.9} parent=11 // pred_region
        _
      $region16: #{resnet_mvm_forward.9} parent=11 // pred_fallthru
        _
      // Predicated region
      $region17: #{resnet_mvm_forward.9} parent=11 // pred_check
        %p148 = pneg %p78
      $region18: #{resnet_mvm_forward.9} parent=11 // pred_check_branch
        %150 = sbr.rel (%p148) target = $region20
      $region19: #{resnet_mvm_forward.9} parent=11 // pred_region
        _
      $region20: #{resnet_mvm_forward.9} parent=11 // pred_fallthru
        _
    $region12: #{resnet_mvm_forward.9} parent=5 // pred_fallthru
      _
    %p151 = scmp.lt.s32.totalorder %s10, 2
    // Predicated region
    $region21: #{resnet_mvm_forward.9} parent=5 // pred_check
      %p152 = pneg %p151
    $region22: #{resnet_mvm_forward.9} parent=5 // pred_check_branch
      %154 = sbr.rel (%p152) target = $region24
    $region23: #{resnet_mvm_forward.9} parent=5 // pred_region
      // Predicated region
      $region25: #{resnet_mvm_forward.9} parent=23 // pred_check
        %p155 = pneg %p30
      $region26: #{resnet_mvm_forward.9} parent=23 // pred_check_branch
        %157 = sbr.rel (%p155) target = $region28
      $region27: #{resnet_mvm_forward.9} parent=23 // pred_region
        %s158 = smul.u32 32, %s10
        %p159 = scmp.lt.s32.totalorder %s158, 63
        %s160 = scalar_select %p159, %s158, 63
        %s161 = smul.addr %s160, 2
        %s162 = smul.addr %s161, 4
        %s163 = scalar_lea.vmem %s0, %s162
        %s164 = smul.u32 32, %s10
      $region28: #{resnet_mvm_forward.9} parent=23 // pred_fallthru
        _
      // Predicated region
      $region29: #{resnet_mvm_forward.9} parent=23 // pred_check
        %p165 = pneg %p98
      $region30: #{resnet_mvm_forward.9} parent=23 // pred_check_branch
        %167 = sbr.rel (%p165) target = $region32
      $region31: #{resnet_mvm_forward.9} parent=23 // pred_region
        %s168 = smul.u32 32, %s10
        %p169 = scmp.lt.s32.totalorder %s168, 63
        %s170 = scalar_select %p169, %s168, 63
        %s171 = smul.addr %s170, 4
        %s172 = scalar_lea.vmem %s3, %s171
        %s173 = smul.u32 32, %s10
      $region32: #{resnet_mvm_forward.9} parent=23 // pred_fallthru
        _
    $region24: #{resnet_mvm_forward.9} parent=5 // pred_fallthru
      _
    %p174 = scmp.le.s32.totalorder 1, %s10
    %p175 = scmp.lt.s32.totalorder %s10, 3
    %p176 = pnand %p174, %p175
    %p177 = pneg %p176
    // Predicated region
    $region33: #{resnet_mvm_forward.9} parent=5 // pred_check
      _
    $region34: #{resnet_mvm_forward.9} parent=5 // pred_check_branch
      %179 = sbr.rel (%p176) target = $region36
    $region35: #{resnet_mvm_forward.9} parent=5 // pred_region
      %s180 = ssub.s32 %s10, 1
      %s181 = smul.u32 32, %s15
      %p182 = scmp.lt.s32.totalorder %s181, 63
      %s183 = scalar_select %p182, %s181, 63
      %s184 = smul.addr %s183, 2
      %s185 = smul.addr %s184, 4
      %s186 = scalar_lea.vmem %s0, %s185
      %p187 = pneg %p36
      %p188 = pneg %p33
      %p189 = pneg %p57
      %p190 = pneg %p54
      %p191 = pneg %p78
      %p192 = pneg %p75
      %s193 = smul.u32 32, %s15
      %p194 = scmp.lt.s32.totalorder %s193, 63
      %s195 = scalar_select %p194, %s193, 63
      %s196 = smul.addr %s195, 4
      %s197 = scalar_lea.vmem %s3, %s196
      %p198 = pneg %p104
      %p199 = pneg %p101
      %p200 = pneg %p130
      %p201 = pneg %p127
      %s202 = smul.u32 32, %s15
      %p203 = scmp.lt.s32.totalorder %s202, 63
      %s204 = scalar_select %p203, %s202, 63
      %s205 = smul.addr %s204, 4
      %s206 = scalar_lea.vmem %s4, %s205
      %s207 = smul.u32 32, %s15
      %p208 = scmp.lt.s32.totalorder %s207, 63
      %s209 = scalar_select %p208, %s207, 63
      %s210 = smul.addr %s209, 2
      %s211 = smul.addr %s210, 4
      %s212 = scalar_lea.vmem %s0, %s211
      %s213 = smul.u32 32, %s15
      %s214 = smul.u32 32, %s15
      %p215 = scmp.lt.s32.totalorder %s214, 63
      %s216 = scalar_select %p215, %s214, 63
      %s217 = smul.addr %s216, 4
      %s218 = scalar_lea.vmem %s3, %s217
      %s219 = smul.u32 32, %s15
      %s220 = smul.u32 32, %s15
      %p221 = scmp.lt.s32.totalorder %s220, 63
      %s222 = scalar_select %p221, %s220, 63
      %s223 = smul.addr %s222, 4
      %s224 = scalar_lea.vmem %s4, %s223
      %s225 = smul.u32 32, %s15
      %v227 = vld [vmem:[%s212] sm:$0xff]
      %v228 = vld [vmem:[%s212 + $0x8] sm:$0xff]
      %v229 = vld [vmem:[%s212 + $0x10] sm:$0xff]
      %v230 = vld [vmem:[%s212 + $0x18] sm:$0xff]
      %v231 = vld [vmem:[%s212 + $0x20] sm:$0xff]
      %v232 = vld [vmem:[%s212 + $0x28] sm:$0xff]
      %v233 = vld [vmem:[%s212 + $0x30] sm:$0xff]
      %v234 = vld [vmem:[%s212 + $0x38] sm:$0xff]
      %v235 = vld [vmem:[%s212 + $0x40] sm:$0xff]
      %v236 = vld [vmem:[%s212 + $0x48] sm:$0xff]
      %v237 = vld [vmem:[%s212 + $0x50] sm:$0xff]
      %v238 = vld [vmem:[%s212 + $0x58] sm:$0xff]
      %v239 = vld [vmem:[%s212 + $0x60] sm:$0xff]
      %v240 = vld [vmem:[%s212 + $0x68] sm:$0xff]
      %v241 = vld [vmem:[%s212 + $0x70] sm:$0xff]
      %v242 = vld [vmem:[%s212 + $0x78] sm:$0xff]
      %v243 = vld [vmem:[%s212 + $0x80] sm:$0xff]
      %v244 = vld [vmem:[%s212 + $0x88] sm:$0xff]
      %v245 = vld [vmem:[%s212 + $0x90] sm:$0xff]
      %v246 = vld [vmem:[%s212 + $0x98] sm:$0xff]
      %v247 = vld [vmem:[%s212 + $0xa0] sm:$0xff]
      %v248 = vld [vmem:[%s212 + $0xa8] sm:$0xff]
      %v249 = vld [vmem:[%s212 + $0xb0] sm:$0xff]
      %v250 = vld [vmem:[%s212 + $0xb8] sm:$0xff]
      %v251 = vld [vmem:[%s212 + $0xc0] sm:$0xff]
      %v252 = vld [vmem:[%s212 + $0xc8] sm:$0xff]
      %v253 = vld [vmem:[%s212 + $0xd0] sm:$0xff]
      %v254 = vld [vmem:[%s212 + $0xd8] sm:$0xff]
      %v255 = vld [vmem:[%s212 + $0xe0] sm:$0xff]
      %v256 = vld [vmem:[%s212 + $0xe8] sm:$0xff]
      %v257 = vld [vmem:[%s212 + $0xf0] sm:$0xff]
      %v258 = vld [vmem:[%s212 + $0xf8] sm:$0xff]
      %v259 = vld [vmem:[%s1] sm:$0xf]
      %v260 = vld [vmem:[%s1 + $0x4] sm:$0xf]
      %v261 = vld [vmem:[%s1 + $0x8] sm:$0xf]
      %v262 = vld [vmem:[%s1 + $0xc] sm:$0xf]
      %v263 = vld [vmem:[%s1 + $0x10] sm:$0xf]
      %v264 = vld [vmem:[%s1 + $0x14] sm:$0xf]
      %v265 = vld [vmem:[%s1 + $0x18] sm:$0xf]
      %v266 = vld [vmem:[%s1 + $0x1c] sm:$0xf]
      %v267 = vld [vmem:[%s1 + $0x20] sm:$0xf]
      %v268 = vld [vmem:[%s1 + $0x24] sm:$0xf]
      %v269 = vld [vmem:[%s1 + $0x28] sm:$0xf]
      %v270 = vld [vmem:[%s1 + $0x2c] sm:$0xf]
      %v271 = vld [vmem:[%s1 + $0x30] sm:$0xf]
      %v272 = vld [vmem:[%s1 + $0x34] sm:$0xf]
      %v273 = vld [vmem:[%s1 + $0x38] sm:$0xf]
      %v274 = vld [vmem:[%s1 + $0x3c] sm:$0xf]
      %v275 = vld [vmem:[%s1 + $0x40] sm:$0xf]
      %v276 = vld [vmem:[%s1 + $0x44] sm:$0xf]
      %v277 = vld [vmem:[%s2] sm:$0x1]
      %v279 = vlaneseq
      %v280 = vshrl.u32 %v279, 7
      %v281 = vsub.s32 0, %v280
      %v282 = vrot.slane %v277, %v281
      %v316 = vunpack.c.l.b16 %v227
      %v317 = vunpack.c.h.b16 %v227
      %v318 = vunpack.c.l.b16 %v228
      %v319 = vunpack.c.h.b16 %v228
      %v320 = vunpack.c.l.b16 %v229
      %v321 = vunpack.c.h.b16 %v229
      %v322 = vunpack.c.l.b16 %v230
      %v323 = vunpack.c.h.b16 %v230
      %v324 = vunpack.c.l.b16 %v231
      %v325 = vunpack.c.h.b16 %v231
      %v326 = vunpack.c.l.b16 %v232
      %v327 = vunpack.c.h.b16 %v232
      %v328 = vunpack.c.l.b16 %v233
      %v329 = vunpack.c.h.b16 %v233
      %v330 = vunpack.c.l.b16 %v234
      %v331 = vunpack.c.h.b16 %v234
      %v332 = vunpack.c.l.b16 %v235
      %v333 = vunpack.c.h.b16 %v235
      %v334 = vunpack.c.l.b16 %v236
      %v335 = vunpack.c.h.b16 %v236
      %v336 = vunpack.c.l.b16 %v237
      %v337 = vunpack.c.h.b16 %v237
      %v338 = vunpack.c.l.b16 %v238
      %v339 = vunpack.c.h.b16 %v238
      %v340 = vunpack.c.l.b16 %v239
      %v341 = vunpack.c.h.b16 %v239
      %v342 = vunpack.c.l.b16 %v240
      %v343 = vunpack.c.h.b16 %v240
      %v344 = vunpack.c.l.b16 %v241
      %v345 = vunpack.c.h.b16 %v241
      %v346 = vunpack.c.l.b16 %v242
      %v347 = vunpack.c.h.b16 %v242
      %v348 = vunpack.c.l.b16 %v243
      %v349 = vunpack.c.h.b16 %v243
      %v350 = vunpack.c.l.b16 %v244
      %v351 = vunpack.c.h.b16 %v244
      %v352 = vunpack.c.l.b16 %v245
      %v353 = vunpack.c.h.b16 %v245
      %v354 = vunpack.c.l.b16 %v246
      %v355 = vunpack.c.h.b16 %v246
      %v356 = vunpack.c.l.b16 %v247
      %v357 = vunpack.c.h.b16 %v247
      %v358 = vunpack.c.l.b16 %v248
      %v359 = vunpack.c.h.b16 %v248
      %v360 = vunpack.c.l.b16 %v249
      %v361 = vunpack.c.h.b16 %v249
      %v362 = vunpack.c.l.b16 %v250
      %v363 = vunpack.c.h.b16 %v250
      %v364 = vunpack.c.l.b16 %v251
      %v365 = vunpack.c.h.b16 %v251
      %v366 = vunpack.c.l.b16 %v252
      %v367 = vunpack.c.h.b16 %v252
      %v368 = vunpack.c.l.b16 %v253
      %v369 = vunpack.c.h.b16 %v253
      %v370 = vunpack.c.l.b16 %v254
      %v371 = vunpack.c.h.b16 %v254
      %v372 = vunpack.c.l.b16 %v255
      %v373 = vunpack.c.h.b16 %v255
      %v374 = vunpack.c.l.b16 %v256
      %v375 = vunpack.c.h.b16 %v256
      %v376 = vunpack.c.l.b16 %v257
      %v377 = vunpack.c.h.b16 %v257
      %v378 = vunpack.c.l.b16 %v258
      %v379 = vunpack.c.h.b16 %v258
      %v380 = vpack.c.b16 %v318, %v316
      %v381 = vpack.c.b16 %v319, %v317
      %v382 = vpack.c.b16 %v322, %v320
      %v383 = vpack.c.b16 %v323, %v321
      %v384 = vpack.c.b16 %v326, %v324
      %v385 = vpack.c.b16 %v327, %v325
      %v386 = vpack.c.b16 %v330, %v328
      %v387 = vpack.c.b16 %v331, %v329
      %v388 = vpack.c.b16 %v334, %v332
      %v389 = vpack.c.b16 %v335, %v333
      %v390 = vpack.c.b16 %v338, %v336
      %v391 = vpack.c.b16 %v339, %v337
      %v392 = vpack.c.b16 %v342, %v340
      %v393 = vpack.c.b16 %v343, %v341
      %v394 = vpack.c.b16 %v346, %v344
      %v395 = vpack.c.b16 %v347, %v345
      %v396 = vpack.c.b16 %v350, %v348
      %v397 = vpack.c.b16 %v351, %v349
      %v398 = vpack.c.b16 %v354, %v352
      %v399 = vpack.c.b16 %v355, %v353
      %v400 = vpack.c.b16 %v358, %v356
      %v401 = vpack.c.b16 %v359, %v357
      %v402 = vpack.c.b16 %v362, %v360
      %v403 = vpack.c.b16 %v363, %v361
      %v404 = vpack.c.b16 %v366, %v364
      %v405 = vpack.c.b16 %v367, %v365
      %v406 = vpack.c.b16 %v370, %v368
      %v407 = vpack.c.b16 %v371, %v369
      %v408 = vpack.c.b16 %v374, %v372
      %v409 = vpack.c.b16 %v375, %v373
      %v410 = vpack.c.b16 %v378, %v376
      %v411 = vpack.c.b16 %v379, %v377
      %v446 = vunpack.c.l.b16 %v259
      %v447 = vunpack.c.l.b16 %v260
      %v448 = vunpack.c.l.b16 %v261
      %v449 = vunpack.c.l.b16 %v262
      %v450 = vunpack.c.l.b16 %v263
      %v451 = vunpack.c.l.b16 %v264
      %v452 = vunpack.c.l.b16 %v265
      %v453 = vunpack.c.l.b16 %v266
      %v454 = vunpack.c.l.b16 %v267
      %v455 = vunpack.c.l.b16 %v268
      %v456 = vunpack.c.l.b16 %v269
      %v457 = vunpack.c.l.b16 %v270
      %v458 = vunpack.c.l.b16 %v271
      %v459 = vunpack.c.l.b16 %v272
      %v460 = vunpack.c.l.b16 %v273
      %v461 = vunpack.c.l.b16 %v274
      %v462 = vunpack.c.l.b16 %v275
      %v463 = vunpack.c.l.b16 %v276
      %v464 = vpack.c.b16 %v447, %v446
      %v465 = vpack.c.b16 %v449, %v448
      %v466 = vpack.c.b16 %v451, %v450
      %v467 = vpack.c.b16 %v453, %v452
      %v468 = vpack.c.b16 %v455, %v454
      %v469 = vpack.c.b16 %v457, %v456
      %v470 = vpack.c.b16 %v459, %v458
      %v471 = vpack.c.b16 %v461, %v460
      %v472 = vpack.c.b16 %v463, %v462
      %vm482 = vcmask 130048
      %v484 = vsel %vm482, %v381, 0
      %v487 = vsel %vm482, %v383, 0
      %v490 = vsel %vm482, %v385, 0
      %v493 = vsel %vm482, %v387, 0
      %v496 = vsel %vm482, %v389, 0
      %v499 = vsel %vm482, %v391, 0
      %v502 = vsel %vm482, %v393, 0
      %v505 = vsel %vm482, %v395, 0
      %v508 = vsel %vm482, %v397, 0
      %v511 = vsel %vm482, %v399, 0
      %v514 = vsel %vm482, %v401, 0
      %v517 = vsel %vm482, %v403, 0
      %v520 = vsel %vm482, %v405, 0
      %v523 = vsel %vm482, %v407, 0
      %v526 = vsel %vm482, %v409, 0
      %v529 = vsel %vm482, %v411, 0
      %531 = vmatprep.subr.bf16.mxu0 0
      %532 = vmatpush1.bf16.msra.mxu0 %v464
      %533 = vmatprep.subr.bf16.mxu0 0
      %534 = vmatpush1.bf16.msra.mxu0 %v465
      %535 = vmatprep.subr.bf16.mxu0 0
      %536 = vmatpush1.bf16.msra.mxu0 %v466
      %537 = vmatprep.subr.bf16.mxu0 0
      %538 = vmatpush1.bf16.msra.mxu0 %v467
      %539 = vmatprep.subr.bf16.mxu0 0
      %540 = vmatpush1.bf16.msra.mxu0 %v468
      %541 = vmatprep.subr.bf16.mxu0 0
      %542 = vmatpush1.bf16.msra.mxu0 %v469
      %543 = vmatprep.subr.bf16.mxu0 0
      %544 = vmatpush1.bf16.msra.mxu0 %v470
      %545 = vmatprep.subr.bf16.mxu0 0
      %546 = vmatpush1.bf16.msra.mxu0 %v471
      %547 = vmatprep.subr.bf16.mxu0 0
      %548 = vmatpush1.bf16.msra.mxu0 %v472
      %549 = vmatprep.subr.bf16.mxu0 0
      %550 = vmatpush1.bf16.msra.mxu0 0
      %551 = vmatprep.subr.bf16.mxu0 0
      %552 = vmatpush1.bf16.msra.mxu0 0
      %553 = vmatprep.subr.bf16.mxu0 0
      %554 = vmatpush1.bf16.msra.mxu0 0
      %555 = vmatprep.subr.bf16.mxu0 0
      %556 = vmatpush1.bf16.msra.mxu0 0
      %557 = vmatprep.subr.bf16.mxu0 0
      %558 = vmatpush1.bf16.msra.mxu0 0
      %559 = vmatprep.subr.bf16.mxu0 0
      %560 = vmatpush1.bf16.msra.mxu0 0
      %561 = vmatprep.subr.bf16.mxu0 0
      %562 = vmatpush1.bf16.msra.mxu0 0
      %563 = vmatprep.mubr.bf16.mxu0 %v484
      %564 = vmatmul.mubr.bf16.gmra.mrb[0].mxu0 %v380
      %v565 = vpop.f32.mrb[0].mxu0
      %v566 = vadd.f32 %v282, %v565
      %v567 = vpop.f32.mrb[0].mxu0
      %v568 = vpop.f32.mrb[0].mxu0
      %v569 = vadd.f32 %v282, %v568
      %v570 = vpop.f32.mrb[0].mxu0
      %571 = vmatprep.mubr.bf16.mxu0 %v487
      %572 = vmatmul.mubr.bf16.gmra.mrb[0].mxu0 %v382
      %v573 = vpop.f32.mrb[0].mxu0
      %v574 = vadd.f32 %v282, %v573
      %v575 = vpop.f32.mrb[0].mxu0
      %v576 = vpop.f32.mrb[0].mxu0
      %v577 = vadd.f32 %v282, %v576
      %v578 = vpop.f32.mrb[0].mxu0
      %579 = vmatprep.mubr.bf16.mxu0 %v490
      %580 = vmatmul.mubr.bf16.gmra.mrb[0].mxu0 %v384
      %v581 = vpop.f32.mrb[0].mxu0
      %v582 = vadd.f32 %v282, %v581
      %v583 = vpop.f32.mrb[0].mxu0
      %v584 = vpop.f32.mrb[0].mxu0
      %v585 = vadd.f32 %v282, %v584
      %v586 = vpop.f32.mrb[0].mxu0
      %587 = vmatprep.mubr.bf16.mxu0 %v493
      %588 = vmatmul.mubr.bf16.gmra.mrb[0].mxu0 %v386
      %v589 = vpop.f32.mrb[0].mxu0
      %v590 = vadd.f32 %v282, %v589
      %v591 = vpop.f32.mrb[0].mxu0
      %v592 = vpop.f32.mrb[0].mxu0
      %v593 = vadd.f32 %v282, %v592
      %v594 = vpop.f32.mrb[0].mxu0
      %595 = vmatprep.mubr.bf16.mxu0 %v496
      %596 = vmatmul.mubr.bf16.gmra.mrb[0].mxu0 %v388
      %v597 = vpop.f32.mrb[0].mxu0
      %v598 = vadd.f32 %v282, %v597
      %v599 = vpop.f32.mrb[0].mxu0
      %v600 = vpop.f32.mrb[0].mxu0
      %v601 = vadd.f32 %v282, %v600
      %v602 = vpop.f32.mrb[0].mxu0
      %603 = vmatprep.mubr.bf16.mxu0 %v499
      %604 = vmatmul.mubr.bf16.gmra.mrb[0].mxu0 %v390
      %v605 = vpop.f32.mrb[0].mxu0
      %v606 = vadd.f32 %v282, %v605
      %v607 = vpop.f32.mrb[0].mxu0
      %v608 = vpop.f32.mrb[0].mxu0
      %v609 = vadd.f32 %v282, %v608
      %v610 = vpop.f32.mrb[0].mxu0
      %611 = vmatprep.mubr.bf16.mxu0 %v502
      %612 = vmatmul.mubr.bf16.gmra.mrb[0].mxu0 %v392
      %v613 = vpop.f32.mrb[0].mxu0
      %v614 = vadd.f32 %v282, %v613
      %v615 = vpop.f32.mrb[0].mxu0
      %v616 = vpop.f32.mrb[0].mxu0
      %v617 = vadd.f32 %v282, %v616
      %v618 = vpop.f32.mrb[0].mxu0
      %619 = vmatprep.mubr.bf16.mxu0 %v505
      %620 = vmatmul.mubr.bf16.gmra.mrb[0].mxu0 %v394
      %v621 = vpop.f32.mrb[0].mxu0
      %v622 = vadd.f32 %v282, %v621
      %v623 = vpop.f32.mrb[0].mxu0
      %v624 = vpop.f32.mrb[0].mxu0
      %v625 = vadd.f32 %v282, %v624
      %v626 = vpop.f32.mrb[0].mxu0
      %627 = vmatprep.mubr.bf16.mxu0 %v508
      %628 = vmatmul.mubr.bf16.gmra.mrb[0].mxu0 %v396
      %v629 = vpop.f32.mrb[0].mxu0
      %v630 = vadd.f32 %v282, %v629
      %v631 = vpop.f32.mrb[0].mxu0
      %v632 = vpop.f32.mrb[0].mxu0
      %v633 = vadd.f32 %v282, %v632
      %v634 = vpop.f32.mrb[0].mxu0
      %635 = vmatprep.mubr.bf16.mxu0 %v511
      %636 = vmatmul.mubr.bf16.gmra.mrb[0].mxu0 %v398
      %v637 = vpop.f32.mrb[0].mxu0
      %v638 = vadd.f32 %v282, %v637
      %v639 = vpop.f32.mrb[0].mxu0
      %v640 = vpop.f32.mrb[0].mxu0
      %v641 = vadd.f32 %v282, %v640
      %v642 = vpop.f32.mrb[0].mxu0
      %643 = vmatprep.mubr.bf16.mxu0 %v514
      %644 = vmatmul.mubr.bf16.gmra.mrb[0].mxu0 %v400
      %v645 = vpop.f32.mrb[0].mxu0
      %v646 = vadd.f32 %v282, %v645
      %v647 = vpop.f32.mrb[0].mxu0
      %v648 = vpop.f32.mrb[0].mxu0
      %v649 = vadd.f32 %v282, %v648
      %v650 = vpop.f32.mrb[0].mxu0
      %651 = vmatprep.mubr.bf16.mxu0 %v517
      %652 = vmatmul.mubr.bf16.gmra.mrb[0].mxu0 %v402
      %v653 = vpop.f32.mrb[0].mxu0
      %v654 = vadd.f32 %v282, %v653
      %v655 = vpop.f32.mrb[0].mxu0
      %v656 = vpop.f32.mrb[0].mxu0
      %v657 = vadd.f32 %v282, %v656
      %v658 = vpop.f32.mrb[0].mxu0
      %659 = vmatprep.mubr.bf16.mxu0 %v520
      %660 = vmatmul.mubr.bf16.gmra.mrb[0].mxu0 %v404
      %v661 = vpop.f32.mrb[0].mxu0
      %v662 = vadd.f32 %v282, %v661
      %v663 = vpop.f32.mrb[0].mxu0
      %v664 = vpop.f32.mrb[0].mxu0
      %v665 = vadd.f32 %v282, %v664
      %v666 = vpop.f32.mrb[0].mxu0
      %667 = vmatprep.mubr.bf16.mxu0 %v523
      %668 = vmatmul.mubr.bf16.gmra.mrb[0].mxu0 %v406
      %v669 = vpop.f32.mrb[0].mxu0
      %v670 = vadd.f32 %v282, %v669
      %v671 = vpop.f32.mrb[0].mxu0
      %v672 = vpop.f32.mrb[0].mxu0
      %v673 = vadd.f32 %v282, %v672
      %v674 = vpop.f32.mrb[0].mxu0
      %675 = vmatprep.mubr.bf16.mxu0 %v526
      %676 = vmatmul.mubr.bf16.gmra.mrb[0].mxu0 %v408
      %v677 = vpop.f32.mrb[0].mxu0
      %v678 = vadd.f32 %v282, %v677
      %v679 = vpop.f32.mrb[0].mxu0
      %v680 = vpop.f32.mrb[0].mxu0
      %v681 = vadd.f32 %v282, %v680
      %v682 = vpop.f32.mrb[0].mxu0
      %683 = vmatprep.mubr.bf16.mxu0 %v529
      %684 = vmatmul.mubr.bf16.gmra.mrb[0].mxu0 %v410
      %v685 = vpop.f32.mrb[0].mxu0
      %v686 = vadd.f32 %v282, %v685
      %v687 = vpop.f32.mrb[0].mxu0
      %v688 = vpop.f32.mrb[0].mxu0
      %v689 = vadd.f32 %v282, %v688
      %v690 = vpop.f32.mrb[0].mxu0
      %691 = vdwg.mxu0
      %v692 = vld [vmem:[%s218] sm:$0xf]
      %v693 = vld [vmem:[%s218 + $0x4] sm:$0xf]
      %v694 = vld [vmem:[%s218 + $0x8] sm:$0xf]
      %v695 = vld [vmem:[%s218 + $0xc] sm:$0xf]
      %v696 = vld [vmem:[%s218 + $0x10] sm:$0xf]
      %v697 = vld [vmem:[%s218 + $0x14] sm:$0xf]
      %v698 = vld [vmem:[%s218 + $0x18] sm:$0xf]
      %v699 = vld [vmem:[%s218 + $0x1c] sm:$0xf]
      %v700 = vld [vmem:[%s218 + $0x20] sm:$0xf]
      %v701 = vld [vmem:[%s218 + $0x24] sm:$0xf]
      %v702 = vld [vmem:[%s218 + $0x28] sm:$0xf]
      %v703 = vld [vmem:[%s218 + $0x2c] sm:$0xf]
      %v704 = vld [vmem:[%s218 + $0x30] sm:$0xf]
      %v705 = vld [vmem:[%s218 + $0x34] sm:$0xf]
      %v706 = vld [vmem:[%s218 + $0x38] sm:$0xf]
      %v707 = vld [vmem:[%s218 + $0x3c] sm:$0xf]
      %v708 = vld [vmem:[%s218 + $0x40] sm:$0xf]
      %v709 = vld [vmem:[%s218 + $0x44] sm:$0xf]
      %v710 = vld [vmem:[%s218 + $0x48] sm:$0xf]
      %v711 = vld [vmem:[%s218 + $0x4c] sm:$0xf]
      %v712 = vld [vmem:[%s218 + $0x50] sm:$0xf]
      %v713 = vld [vmem:[%s218 + $0x54] sm:$0xf]
      %v714 = vld [vmem:[%s218 + $0x58] sm:$0xf]
      %v715 = vld [vmem:[%s218 + $0x5c] sm:$0xf]
      %v716 = vld [vmem:[%s218 + $0x60] sm:$0xf]
      %v717 = vld [vmem:[%s218 + $0x64] sm:$0xf]
      %v718 = vld [vmem:[%s218 + $0x68] sm:$0xf]
      %v719 = vld [vmem:[%s218 + $0x6c] sm:$0xf]
      %v720 = vld [vmem:[%s218 + $0x70] sm:$0xf]
      %v721 = vld [vmem:[%s218 + $0x74] sm:$0xf]
      %v722 = vld [vmem:[%s218 + $0x78] sm:$0xf]
      %v723 = vld [vmem:[%s218 + $0x7c] sm:$0xf]
      %v724 = vunpack.c.l.bf16 %v692
      %v725 = vunpack.c.l.bf16 %v693
      %v726 = vunpack.c.l.bf16 %v694
      %v727 = vunpack.c.l.bf16 %v695
      %v728 = vunpack.c.l.bf16 %v696
      %v729 = vunpack.c.l.bf16 %v697
      %v730 = vunpack.c.l.bf16 %v698
      %v731 = vunpack.c.l.bf16 %v699
      %v732 = vunpack.c.l.bf16 %v700
      %v733 = vunpack.c.l.bf16 %v701
      %v734 = vunpack.c.l.bf16 %v702
      %v735 = vunpack.c.l.bf16 %v703
      %v736 = vunpack.c.l.bf16 %v704
      %v737 = vunpack.c.l.bf16 %v705
      %v738 = vunpack.c.l.bf16 %v706
      %v739 = vunpack.c.l.bf16 %v707
      %v740 = vunpack.c.l.bf16 %v708
      %v741 = vunpack.c.l.bf16 %v709
      %v742 = vunpack.c.l.bf16 %v710
      %v743 = vunpack.c.l.bf16 %v711
      %v744 = vunpack.c.l.bf16 %v712
      %v745 = vunpack.c.l.bf16 %v713
      %v746 = vunpack.c.l.bf16 %v714
      %v747 = vunpack.c.l.bf16 %v715
      %v748 = vunpack.c.l.bf16 %v716
      %v749 = vunpack.c.l.bf16 %v717
      %v750 = vunpack.c.l.bf16 %v718
      %v751 = vunpack.c.l.bf16 %v719
      %v752 = vunpack.c.l.bf16 %v720
      %v753 = vunpack.c.l.bf16 %v721
      %v754 = vunpack.c.l.bf16 %v722
      %v755 = vunpack.c.l.bf16 %v723
      %v756 = vadd.f32 %v566, %v724
      %v757 = vadd.f32 %v569, %v725
      %v758 = vadd.f32 %v574, %v726
      %v759 = vadd.f32 %v577, %v727
      %v760 = vadd.f32 %v582, %v728
      %v761 = vadd.f32 %v585, %v729
      %v762 = vadd.f32 %v590, %v730
      %v763 = vadd.f32 %v593, %v731
      %v764 = vadd.f32 %v598, %v732
      %v765 = vadd.f32 %v601, %v733
      %v766 = vadd.f32 %v606, %v734
      %v767 = vadd.f32 %v609, %v735
      %v768 = vadd.f32 %v614, %v736
      %v769 = vadd.f32 %v617, %v737
      %v770 = vadd.f32 %v622, %v738
      %v771 = vadd.f32 %v625, %v739
      %v772 = vadd.f32 %v630, %v740
      %v773 = vadd.f32 %v633, %v741
      %v774 = vadd.f32 %v638, %v742
      %v775 = vadd.f32 %v641, %v743
      %v776 = vadd.f32 %v646, %v744
      %v777 = vadd.f32 %v649, %v745
      %v778 = vadd.f32 %v654, %v746
      %v779 = vadd.f32 %v657, %v747
      %v780 = vadd.f32 %v662, %v748
      %v781 = vadd.f32 %v665, %v749
      %v782 = vadd.f32 %v670, %v750
      %v783 = vadd.f32 %v673, %v751
      %v784 = vadd.f32 %v678, %v752
      %v785 = vadd.f32 %v681, %v753
      %v786 = vadd.f32 %v686, %v754
      %v787 = vadd.f32 %v689, %v755
      %v788 = vmax.f32 %v756, 0.0
      %v789 = vmax.f32 %v757, 0.0
      %v790 = vmax.f32 %v758, 0.0
      %v791 = vmax.f32 %v759, 0.0
      %v792 = vmax.f32 %v760, 0.0
      %v793 = vmax.f32 %v761, 0.0
      %v794 = vmax.f32 %v762, 0.0
      %v795 = vmax.f32 %v763, 0.0
      %v796 = vmax.f32 %v764, 0.0
      %v797 = vmax.f32 %v765, 0.0
      %v798 = vmax.f32 %v766, 0.0
      %v799 = vmax.f32 %v767, 0.0
      %v800 = vmax.f32 %v768, 0.0
      %v801 = vmax.f32 %v769, 0.0
      %v802 = vmax.f32 %v770, 0.0
      %v803 = vmax.f32 %v771, 0.0
      %v804 = vmax.f32 %v772, 0.0
      %v805 = vmax.f32 %v773, 0.0
      %v806 = vmax.f32 %v774, 0.0
      %v807 = vmax.f32 %v775, 0.0
      %v808 = vmax.f32 %v776, 0.0
      %v809 = vmax.f32 %v777, 0.0
      %v810 = vmax.f32 %v778, 0.0
      %v811 = vmax.f32 %v779, 0.0
      %v812 = vmax.f32 %v780, 0.0
      %v813 = vmax.f32 %v781, 0.0
      %v814 = vmax.f32 %v782, 0.0
      %v815 = vmax.f32 %v783, 0.0
      %v816 = vmax.f32 %v784, 0.0
      %v817 = vmax.f32 %v785, 0.0
      %v818 = vmax.f32 %v786, 0.0
      %v819 = vmax.f32 %v787, 0.0
      %v820 = vpack.c.bf16 %v789, %v788
      %v821 = vpack.c.bf16 %v791, %v790
      %v822 = vpack.c.bf16 %v793, %v792
      %v823 = vpack.c.bf16 %v795, %v794
      %v824 = vpack.c.bf16 %v797, %v796
      %v825 = vpack.c.bf16 %v799, %v798
      %v826 = vpack.c.bf16 %v801, %v800
      %v827 = vpack.c.bf16 %v803, %v802
      %v828 = vpack.c.bf16 %v805, %v804
      %v829 = vpack.c.bf16 %v807, %v806
      %v830 = vpack.c.bf16 %v809, %v808
      %v831 = vpack.c.bf16 %v811, %v810
      %v832 = vpack.c.bf16 %v813, %v812
      %v833 = vpack.c.bf16 %v815, %v814
      %v834 = vpack.c.bf16 %v817, %v816
      %v835 = vpack.c.bf16 %v819, %v818
      %v852 = vunpack.c.l.b16 %v820
      %v853 = vunpack.c.h.b16 %v820
      %v854 = vunpack.c.l.b16 %v821
      %v855 = vunpack.c.h.b16 %v821
      %v856 = vunpack.c.l.b16 %v822
      %v857 = vunpack.c.h.b16 %v822
      %v858 = vunpack.c.l.b16 %v823
      %v859 = vunpack.c.h.b16 %v823
      %v860 = vunpack.c.l.b16 %v824
      %v861 = vunpack.c.h.b16 %v824
      %v862 = vunpack.c.l.b16 %v825
      %v863 = vunpack.c.h.b16 %v825
      %v864 = vunpack.c.l.b16 %v826
      %v865 = vunpack.c.h.b16 %v826
      %v866 = vunpack.c.l.b16 %v827
      %v867 = vunpack.c.h.b16 %v827
      %v868 = vunpack.c.l.b16 %v828
      %v869 = vunpack.c.h.b16 %v828
      %v870 = vunpack.c.l.b16 %v829
      %v871 = vunpack.c.h.b16 %v829
      %v872 = vunpack.c.l.b16 %v830
      %v873 = vunpack.c.h.b16 %v830
      %v874 = vunpack.c.l.b16 %v831
      %v875 = vunpack.c.h.b16 %v831
      %v876 = vunpack.c.l.b16 %v832
      %v877 = vunpack.c.h.b16 %v832
      %v878 = vunpack.c.l.b16 %v833
      %v879 = vunpack.c.h.b16 %v833
      %v880 = vunpack.c.l.b16 %v834
      %v881 = vunpack.c.h.b16 %v834
      %v882 = vunpack.c.l.b16 %v835
      %v883 = vunpack.c.h.b16 %v835
      %v884 = vpack.c.b16 %v852, %v852
      %v885 = vpack.c.b16 %v853, %v853
      %v886 = vpack.c.b16 %v854, %v854
      %v887 = vpack.c.b16 %v855, %v855
      %v888 = vpack.c.b16 %v856, %v856
      %v889 = vpack.c.b16 %v857, %v857
      %v890 = vpack.c.b16 %v858, %v858
      %v891 = vpack.c.b16 %v859, %v859
      %v892 = vpack.c.b16 %v860, %v860
      %v893 = vpack.c.b16 %v861, %v861
      %v894 = vpack.c.b16 %v862, %v862
      %v895 = vpack.c.b16 %v863, %v863
      %v896 = vpack.c.b16 %v864, %v864
      %v897 = vpack.c.b16 %v865, %v865
      %v898 = vpack.c.b16 %v866, %v866
      %v899 = vpack.c.b16 %v867, %v867
      %v900 = vpack.c.b16 %v868, %v868
      %v901 = vpack.c.b16 %v869, %v869
      %v902 = vpack.c.b16 %v870, %v870
      %v903 = vpack.c.b16 %v871, %v871
      %v904 = vpack.c.b16 %v872, %v872
      %v905 = vpack.c.b16 %v873, %v873
      %v906 = vpack.c.b16 %v874, %v874
      %v907 = vpack.c.b16 %v875, %v875
      %v908 = vpack.c.b16 %v876, %v876
      %v909 = vpack.c.b16 %v877, %v877
      %v910 = vpack.c.b16 %v878, %v878
      %v911 = vpack.c.b16 %v879, %v879
      %v912 = vpack.c.b16 %v880, %v880
      %v913 = vpack.c.b16 %v881, %v881
      %v914 = vpack.c.b16 %v882, %v882
      %v915 = vpack.c.b16 %v883, %v883
      %948 = vst [vmem:[%s224] sm:$0xf] %v884
      %949 = vst [vmem:[%s224 + $0x4] sm:$0xf] %v885
      %950 = vst [vmem:[%s224 + $0x8] sm:$0xf] %v886
      %951 = vst [vmem:[%s224 + $0xc] sm:$0xf] %v887
      %952 = vst [vmem:[%s224 + $0x10] sm:$0xf] %v888
      %953 = vst [vmem:[%s224 + $0x14] sm:$0xf] %v889
      %954 = vst [vmem:[%s224 + $0x18] sm:$0xf] %v890
      %955 = vst [vmem:[%s224 + $0x1c] sm:$0xf] %v891
      %956 = vst [vmem:[%s224 + $0x20] sm:$0xf] %v892
      %957 = vst [vmem:[%s224 + $0x24] sm:$0xf] %v893
      %958 = vst [vmem:[%s224 + $0x28] sm:$0xf] %v894
      %959 = vst [vmem:[%s224 + $0x2c] sm:$0xf] %v895
      %960 = vst [vmem:[%s224 + $0x30] sm:$0xf] %v896
      %961 = vst [vmem:[%s224 + $0x34] sm:$0xf] %v897
      %962 = vst [vmem:[%s224 + $0x38] sm:$0xf] %v898
      %963 = vst [vmem:[%s224 + $0x3c] sm:$0xf] %v899
      %964 = vst [vmem:[%s224 + $0x40] sm:$0xf] %v900
      %965 = vst [vmem:[%s224 + $0x44] sm:$0xf] %v901
      %966 = vst [vmem:[%s224 + $0x48] sm:$0xf] %v902
      %967 = vst [vmem:[%s224 + $0x4c] sm:$0xf] %v903
      %968 = vst [vmem:[%s224 + $0x50] sm:$0xf] %v904
      %969 = vst [vmem:[%s224 + $0x54] sm:$0xf] %v905
      %970 = vst [vmem:[%s224 + $0x58] sm:$0xf] %v906
      %971 = vst [vmem:[%s224 + $0x5c] sm:$0xf] %v907
      %972 = vst [vmem:[%s224 + $0x60] sm:$0xf] %v908
      %973 = vst [vmem:[%s224 + $0x64] sm:$0xf] %v909
      %974 = vst [vmem:[%s224 + $0x68] sm:$0xf] %v910
      %975 = vst [vmem:[%s224 + $0x6c] sm:$0xf] %v911
      %976 = vst [vmem:[%s224 + $0x70] sm:$0xf] %v912
      %977 = vst [vmem:[%s224 + $0x74] sm:$0xf] %v913
      %978 = vst [vmem:[%s224 + $0x78] sm:$0xf] %v914
      %979 = vst [vmem:[%s224 + $0x7c] sm:$0xf] %v915
      %s980 = smul.u32 32, %s15
      %p981 = scmp.lt.s32.totalorder %s980, 63
      %s982 = scalar_select %p981, %s980, 63
      %s983 = smul.addr %s982, 4
      %s984 = scalar_lea.vmem %s4, %s983
      // Predicated region
      $region37: #{resnet_mvm_forward.9} parent=35 // pred_check
        %p985 = pneg %p127
      $region38: #{resnet_mvm_forward.9} parent=35 // pred_check_branch
        %987 = sbr.rel (%p985) target = $region40
      $region39: #{resnet_mvm_forward.9} parent=35 // pred_region
        %s988 = smul.u32 32, %s15
      $region40: #{resnet_mvm_forward.9} parent=35 // pred_fallthru
        _
    $region36: #{resnet_mvm_forward.9} parent=5 // pred_fallthru
      _
    %p989 = scmp.le.s32.totalorder 2, %s10
    // Predicated region
    $region41: #{resnet_mvm_forward.9} parent=5 // pred_check
      %p990 = pneg %p989
    $region42: #{resnet_mvm_forward.9} parent=5 // pred_check_branch
      %992 = sbr.rel (%p990) target = $region44
    $region43: #{resnet_mvm_forward.9} parent=5 // pred_region
      %s993 = ssub.s32 %s10, 2
      // Predicated region
      $region45: #{resnet_mvm_forward.9} parent=43 // pred_check
        %p994 = pneg %p133
      $region46: #{resnet_mvm_forward.9} parent=43 // pred_check_branch
        %996 = sbr.rel (%p994) target = $region48
      $region47: #{resnet_mvm_forward.9} parent=43 // pred_region
        %s997 = smul.u32 32, %s16
        %p998 = scmp.lt.s32.totalorder %s997, 63
        %s999 = scalar_select %p998, %s997, 63
        %s1000 = smul.addr %s999, 4
        %s1001 = scalar_lea.vmem %s4, %s1000
      $region48: #{resnet_mvm_forward.9} parent=43 // pred_fallthru
        _
    $region44: #{resnet_mvm_forward.9} parent=5 // pred_fallthru
      _
  $region6: #{resnet_mvm_forward.9} parent=0 // loop_footer
    %s14 = sadd.s32 1, %s10
  $region7: #{resnet_mvm_forward.9} parent=0 // loop_footer_branch
    %9 = sbr.rel target = $region3
  $region8: #{resnet_mvm_forward.9} parent=0 // loop_exit
    _

// kernel: resnet_mvm_forward.10
$region0: #{resnet_mvm_forward.10}
  #allocation0 [shape = 'u32[]', space=smem, size = 0x4, offset = 0x4, fixed_abs, tag = 'smem constant byte address 0x4 - core index']
  #allocation1 [shape = 'u32[144,128]{1,0:T(1,128)}', space=vmem, size = 0x12000, scoped, tag = 'internal scratch']
  %s0 = inlined_call_operand.vmem [shape: bf16[128,144], index: 0, kind: input, shape index: {}]
  %s1 = inlined_call_operand.vmem [shape: bf16[144,128], index: 1, kind: input, shape index: {}]
  %s2 = inlined_call_operand.vmem [shape: f32[1,128], index: 2, kind: input, shape index: {}]
  %s3 = inlined_call_operand.vmem [shape: bf16[128,128], index: 3, kind: output, shape index: {}]
  %s4 = sld [smem:[#allocation0]]
  $region22: #{resnet_mvm_forward.10} parent=0
    _
  %s6 = ssub.s32 1, %s4
  %s7 = scalar_select 0, %s6, %s4
  // Predicated region
  $region2: #{resnet_mvm_forward.10} parent=0 // pred_check
    _
  $region3: #{resnet_mvm_forward.10} parent=0 // pred_check_branch
    %9 = sbr.rel (0) target = $region5
  $region4: #{resnet_mvm_forward.10} parent=0 // pred_region
    _
  $region5: #{resnet_mvm_forward.10} parent=0 // pred_fallthru
    _
  // Predicated region
  $region6: #{resnet_mvm_forward.10} parent=0 // pred_check
    _
  $region7: #{resnet_mvm_forward.10} parent=0 // pred_check_branch
    %11 = sbr.rel (0) target = $region9
  $region8: #{resnet_mvm_forward.10} parent=0 // pred_region
    _
  $region9: #{resnet_mvm_forward.10} parent=0 // pred_fallthru
    _
  // Predicated region
  $region10: #{resnet_mvm_forward.10} parent=0 // pred_check
    _
  $region11: #{resnet_mvm_forward.10} parent=0 // pred_check_branch
    %13 = sbr.rel (0) target = $region13
  $region12: #{resnet_mvm_forward.10} parent=0 // pred_region
    _
  $region13: #{resnet_mvm_forward.10} parent=0 // pred_fallthru
    _
  %v15 = vld [vmem:[%s0] sm:$0xff]
  %v16 = vld [vmem:[%s0 + $0x8] sm:$0xff]
  %v17 = vld [vmem:[%s0 + $0x10] sm:$0xff]
  %v18 = vld [vmem:[%s0 + $0x18] sm:$0xff]
  %v19 = vld [vmem:[%s0 + $0x20] sm:$0xff]
  %v20 = vld [vmem:[%s0 + $0x28] sm:$0xff]
  %v21 = vld [vmem:[%s0 + $0x30] sm:$0xff]
  %v22 = vld [vmem:[%s0 + $0x38] sm:$0xff]
  %v23 = vld [vmem:[%s0 + $0x40] sm:$0xff]
  %v24 = vld [vmem:[%s0 + $0x48] sm:$0xff]
  %v25 = vld [vmem:[%s0 + $0x50] sm:$0xff]
  %v26 = vld [vmem:[%s0 + $0x58] sm:$0xff]
  %v27 = vld [vmem:[%s0 + $0x60] sm:$0xff]
  %v28 = vld [vmem:[%s0 + $0x68] sm:$0xff]
  %v29 = vld [vmem:[%s0 + $0x70] sm:$0xff]
  %v30 = vld [vmem:[%s0 + $0x78] sm:$0xff]
  %v31 = vld [vmem:[%s1] sm:$0xf]
  %v32 = vld [vmem:[%s1 + $0x4] sm:$0xf]
  %v33 = vld [vmem:[%s1 + $0x8] sm:$0xf]
  %v34 = vld [vmem:[%s1 + $0xc] sm:$0xf]
  %v35 = vld [vmem:[%s1 + $0x10] sm:$0xf]
  %v36 = vld [vmem:[%s1 + $0x14] sm:$0xf]
  %v37 = vld [vmem:[%s1 + $0x18] sm:$0xf]
  %v38 = vld [vmem:[%s1 + $0x1c] sm:$0xf]
  %v39 = vld [vmem:[%s1 + $0x20] sm:$0xf]
  %v40 = vld [vmem:[%s1 + $0x24] sm:$0xf]
  %v41 = vld [vmem:[%s1 + $0x28] sm:$0xf]
  %v42 = vld [vmem:[%s1 + $0x2c] sm:$0xf]
  %v43 = vld [vmem:[%s1 + $0x30] sm:$0xf]
  %v44 = vld [vmem:[%s1 + $0x34] sm:$0xf]
  %v45 = vld [vmem:[%s1 + $0x38] sm:$0xf]
  %v46 = vld [vmem:[%s1 + $0x3c] sm:$0xf]
  %v47 = vld [vmem:[%s1 + $0x40] sm:$0xf]
  %v48 = vld [vmem:[%s1 + $0x44] sm:$0xf]
  %v49 = vld [vmem:[%s2] sm:$0x1]
  %v51 = vlaneseq
  %v52 = vshrl.u32 %v51, 7
  %v53 = vsub.s32 0, %v52
  %v54 = vrot.slane %v49, %v53
  %v72 = vunpack.c.l.b16 %v15
  %v73 = vunpack.c.h.b16 %v15
  %v74 = vunpack.c.l.b16 %v16
  %v75 = vunpack.c.h.b16 %v16
  %v76 = vunpack.c.l.b16 %v17
  %v77 = vunpack.c.h.b16 %v17
  %v78 = vunpack.c.l.b16 %v18
  %v79 = vunpack.c.h.b16 %v18
  %v80 = vunpack.c.l.b16 %v19
  %v81 = vunpack.c.h.b16 %v19
  %v82 = vunpack.c.l.b16 %v20
  %v83 = vunpack.c.h.b16 %v20
  %v84 = vunpack.c.l.b16 %v21
  %v85 = vunpack.c.h.b16 %v21
  %v86 = vunpack.c.l.b16 %v22
  %v87 = vunpack.c.h.b16 %v22
  %v88 = vunpack.c.l.b16 %v23
  %v89 = vunpack.c.h.b16 %v23
  %v90 = vunpack.c.l.b16 %v24
  %v91 = vunpack.c.h.b16 %v24
  %v92 = vunpack.c.l.b16 %v25
  %v93 = vunpack.c.h.b16 %v25
  %v94 = vunpack.c.l.b16 %v26
  %v95 = vunpack.c.h.b16 %v26
  %v96 = vunpack.c.l.b16 %v27
  %v97 = vunpack.c.h.b16 %v27
  %v98 = vunpack.c.l.b16 %v28
  %v99 = vunpack.c.h.b16 %v28
  %v100 = vunpack.c.l.b16 %v29
  %v101 = vunpack.c.h.b16 %v29
  %v102 = vunpack.c.l.b16 %v30
  %v103 = vunpack.c.h.b16 %v30
  %v104 = vpack.c.b16 %v74, %v72
  %v105 = vpack.c.b16 %v75, %v73
  %v106 = vpack.c.b16 %v78, %v76
  %v107 = vpack.c.b16 %v79, %v77
  %v108 = vpack.c.b16 %v82, %v80
  %v109 = vpack.c.b16 %v83, %v81
  %v110 = vpack.c.b16 %v86, %v84
  %v111 = vpack.c.b16 %v87, %v85
  %v112 = vpack.c.b16 %v90, %v88
  %v113 = vpack.c.b16 %v91, %v89
  %v114 = vpack.c.b16 %v94, %v92
  %v115 = vpack.c.b16 %v95, %v93
  %v116 = vpack.c.b16 %v98, %v96
  %v117 = vpack.c.b16 %v99, %v97
  %v118 = vpack.c.b16 %v102, %v100
  %v119 = vpack.c.b16 %v103, %v101
  %v146 = vunpack.c.l.b16 %v31
  %v147 = vunpack.c.l.b16 %v32
  %v148 = vunpack.c.l.b16 %v33
  %v149 = vunpack.c.l.b16 %v34
  %v150 = vunpack.c.l.b16 %v35
  %v151 = vunpack.c.l.b16 %v36
  %v152 = vunpack.c.l.b16 %v37
  %v153 = vunpack.c.l.b16 %v38
  %v154 = vunpack.c.l.b16 %v39
  %v155 = vunpack.c.l.b16 %v40
  %v156 = vunpack.c.l.b16 %v41
  %v157 = vunpack.c.l.b16 %v42
  %v158 = vunpack.c.l.b16 %v43
  %v159 = vunpack.c.l.b16 %v44
  %v160 = vunpack.c.l.b16 %v45
  %v161 = vunpack.c.l.b16 %v46
  %v162 = vunpack.c.l.b16 %v47
  %v163 = vunpack.c.l.b16 %v48
  %v164 = vpack.c.b16 %v147, %v146
  %v165 = vpack.c.b16 %v149, %v148
  %v166 = vpack.c.b16 %v151, %v150
  %v167 = vpack.c.b16 %v153, %v152
  %v168 = vpack.c.b16 %v155, %v154
  %v169 = vpack.c.b16 %v157, %v156
  %v170 = vpack.c.b16 %v159, %v158
  %v171 = vpack.c.b16 %v161, %v160
  %v172 = vpack.c.b16 %v163, %v162
  %vm182 = vcmask 130048
  %v184 = vsel %vm182, %v105, 0
  %v187 = vsel %vm182, %v107, 0
  %v190 = vsel %vm182, %v109, 0
  %v193 = vsel %vm182, %v111, 0
  %v196 = vsel %vm182, %v113, 0
  %v199 = vsel %vm182, %v115, 0
  %v202 = vsel %vm182, %v117, 0
  %v205 = vsel %vm182, %v119, 0
  %207 = vmatprep.subr.bf16.mxu0 0
  %208 = vmatpush1.bf16.msra.mxu0 %v164
  %209 = vmatprep.subr.bf16.mxu0 0
  %210 = vmatpush1.bf16.msra.mxu0 %v165
  %211 = vmatprep.subr.bf16.mxu0 0
  %212 = vmatpush1.bf16.msra.mxu0 %v166
  %213 = vmatprep.subr.bf16.mxu0 0
  %214 = vmatpush1.bf16.msra.mxu0 %v167
  %215 = vmatprep.subr.bf16.mxu0 0
  %216 = vmatpush1.bf16.msra.mxu0 %v168
  %217 = vmatprep.subr.bf16.mxu0 0
  %218 = vmatpush1.bf16.msra.mxu0 %v169
  %219 = vmatprep.subr.bf16.mxu0 0
  %220 = vmatpush1.bf16.msra.mxu0 %v170
  %221 = vmatprep.subr.bf16.mxu0 0
  %222 = vmatpush1.bf16.msra.mxu0 %v171
  %223 = vmatprep.subr.bf16.mxu0 0
  %224 = vmatpush1.bf16.msra.mxu0 %v172
  %225 = vmatprep.subr.bf16.mxu0 0
  %226 = vmatpush1.bf16.msra.mxu0 0
  %227 = vmatprep.subr.bf16.mxu0 0
  %228 = vmatpush1.bf16.msra.mxu0 0
  %229 = vmatprep.subr.bf16.mxu0 0
  %230 = vmatpush1.bf16.msra.mxu0 0
  %231 = vmatprep.subr.bf16.mxu0 0
  %232 = vmatpush1.bf16.msra.mxu0 0
  %233 = vmatprep.subr.bf16.mxu0 0
  %234 = vmatpush1.bf16.msra.mxu0 0
  %235 = vmatprep.subr.bf16.mxu0 0
  %236 = vmatpush1.bf16.msra.mxu0 0
  %237 = vmatprep.subr.bf16.mxu0 0
  %238 = vmatpush1.bf16.msra.mxu0 0
  %239 = vmatprep.mubr.bf16.mxu0 %v184
  %240 = vmatmul.mubr.bf16.gmra.mrb[0].mxu0 %v104
  %v241 = vpop.f32.mrb[0].mxu0
  %v242 = vadd.f32 %v54, %v241
  %v243 = vpop.f32.mrb[0].mxu0
  %v244 = vpop.f32.mrb[0].mxu0
  %v245 = vadd.f32 %v54, %v244
  %v246 = vpop.f32.mrb[0].mxu0
  %247 = vmatprep.mubr.bf16.mxu0 %v187
  %248 = vmatmul.mubr.bf16.gmra.mrb[0].mxu0 %v106
  %v249 = vpop.f32.mrb[0].mxu0
  %v250 = vadd.f32 %v54, %v249
  %v251 = vpop.f32.mrb[0].mxu0
  %v252 = vpop.f32.mrb[0].mxu0
  %v253 = vadd.f32 %v54, %v252
  %v254 = vpop.f32.mrb[0].mxu0
  %255 = vmatprep.mubr.bf16.mxu0 %v190
  %256 = vmatmul.mubr.bf16.gmra.mrb[0].mxu0 %v108
  %v257 = vpop.f32.mrb[0].mxu0
  %v258 = vadd.f32 %v54, %v257
  %v259 = vpop.f32.mrb[0].mxu0
  %v260 = vpop.f32.mrb[0].mxu0
  %v261 = vadd.f32 %v54, %v260
  %v262 = vpop.f32.mrb[0].mxu0
  %263 = vmatprep.mubr.bf16.mxu0 %v193
  %264 = vmatmul.mubr.bf16.gmra.mrb[0].mxu0 %v110
  %v265 = vpop.f32.mrb[0].mxu0
  %v266 = vadd.f32 %v54, %v265
  %v267 = vpop.f32.mrb[0].mxu0
  %v268 = vpop.f32.mrb[0].mxu0
  %v269 = vadd.f32 %v54, %v268
  %v270 = vpop.f32.mrb[0].mxu0
  %271 = vmatprep.mubr.bf16.mxu0 %v196
  %272 = vmatmul.mubr.bf16.gmra.mrb[0].mxu0 %v112
  %v273 = vpop.f32.mrb[0].mxu0
  %v274 = vadd.f32 %v54, %v273
  %v275 = vpop.f32.mrb[0].mxu0
  %v276 = vpop.f32.mrb[0].mxu0
  %v277 = vadd.f32 %v54, %v276
  %v278 = vpop.f32.mrb[0].mxu0
  %279 = vmatprep.mubr.bf16.mxu0 %v199
  %280 = vmatmul.mubr.bf16.gmra.mrb[0].mxu0 %v114
  %v281 = vpop.f32.mrb[0].mxu0
  %v282 = vadd.f32 %v54, %v281
  %v283 = vpop.f32.mrb[0].mxu0
  %v284 = vpop.f32.mrb[0].mxu0
  %v285 = vadd.f32 %v54, %v284
  %v286 = vpop.f32.mrb[0].mxu0
  %287 = vmatprep.mubr.bf16.mxu0 %v202
  %288 = vmatmul.mubr.bf16.gmra.mrb[0].mxu0 %v116
  %v289 = vpop.f32.mrb[0].mxu0
  %v290 = vadd.f32 %v54, %v289
  %v291 = vpop.f32.mrb[0].mxu0
  %v292 = vpop.f32.mrb[0].mxu0
  %v293 = vadd.f32 %v54, %v292
  %v294 = vpop.f32.mrb[0].mxu0
  %295 = vmatprep.mubr.bf16.mxu0 %v205
  %296 = vmatmul.mubr.bf16.gmra.mrb[0].mxu0 %v118
  %v297 = vpop.f32.mrb[0].mxu0
  %v298 = vadd.f32 %v54, %v297
  %v299 = vpop.f32.mrb[0].mxu0
  %v300 = vpop.f32.mrb[0].mxu0
  %v301 = vadd.f32 %v54, %v300
  %v302 = vpop.f32.mrb[0].mxu0
  %303 = vdwg.mxu0
  %v304 = vmax.f32 %v242, 0.0
  %v305 = vmax.f32 %v245, 0.0
  %v306 = vmax.f32 %v250, 0.0
  %v307 = vmax.f32 %v253, 0.0
  %v308 = vmax.f32 %v258, 0.0
  %v309 = vmax.f32 %v261, 0.0
  %v310 = vmax.f32 %v266, 0.0
  %v311 = vmax.f32 %v269, 0.0
  %v312 = vmax.f32 %v274, 0.0
  %v313 = vmax.f32 %v277, 0.0
  %v314 = vmax.f32 %v282, 0.0
  %v315 = vmax.f32 %v285, 0.0
  %v316 = vmax.f32 %v290, 0.0
  %v317 = vmax.f32 %v293, 0.0
  %v318 = vmax.f32 %v298, 0.0
  %v319 = vmax.f32 %v301, 0.0
  %v320 = vpack.c.bf16 %v305, %v304
  %v321 = vpack.c.bf16 %v307, %v306
  %v322 = vpack.c.bf16 %v309, %v308
  %v323 = vpack.c.bf16 %v311, %v310
  %v324 = vpack.c.bf16 %v313, %v312
  %v325 = vpack.c.bf16 %v315, %v314
  %v326 = vpack.c.bf16 %v317, %v316
  %v327 = vpack.c.bf16 %v319, %v318
  %v336 = vunpack.c.l.b16 %v320
  %v337 = vunpack.c.h.b16 %v320
  %v338 = vunpack.c.l.b16 %v321
  %v339 = vunpack.c.h.b16 %v321
  %v340 = vunpack.c.l.b16 %v322
  %v341 = vunpack.c.h.b16 %v322
  %v342 = vunpack.c.l.b16 %v323
  %v343 = vunpack.c.h.b16 %v323
  %v344 = vunpack.c.l.b16 %v324
  %v345 = vunpack.c.h.b16 %v324
  %v346 = vunpack.c.l.b16 %v325
  %v347 = vunpack.c.h.b16 %v325
  %v348 = vunpack.c.l.b16 %v326
  %v349 = vunpack.c.h.b16 %v326
  %v350 = vunpack.c.l.b16 %v327
  %v351 = vunpack.c.h.b16 %v327
  %v352 = vpack.c.b16 %v336, %v336
  %v353 = vpack.c.b16 %v337, %v337
  %v354 = vpack.c.b16 %v338, %v338
  %v355 = vpack.c.b16 %v339, %v339
  %v356 = vpack.c.b16 %v340, %v340
  %v357 = vpack.c.b16 %v341, %v341
  %v358 = vpack.c.b16 %v342, %v342
  %v359 = vpack.c.b16 %v343, %v343
  %v360 = vpack.c.b16 %v344, %v344
  %v361 = vpack.c.b16 %v345, %v345
  %v362 = vpack.c.b16 %v346, %v346
  %v363 = vpack.c.b16 %v347, %v347
  %v364 = vpack.c.b16 %v348, %v348
  %v365 = vpack.c.b16 %v349, %v349
  %v366 = vpack.c.b16 %v350, %v350
  %v367 = vpack.c.b16 %v351, %v351
  %384 = vst [vmem:[%s3] sm:$0xf] %v352
  %385 = vst [vmem:[%s3 + $0x4] sm:$0xf] %v353
  %386 = vst [vmem:[%s3 + $0x8] sm:$0xf] %v354
  %387 = vst [vmem:[%s3 + $0xc] sm:$0xf] %v355
  %388 = vst [vmem:[%s3 + $0x10] sm:$0xf] %v356
  %389 = vst [vmem:[%s3 + $0x14] sm:$0xf] %v357
  %390 = vst [vmem:[%s3 + $0x18] sm:$0xf] %v358
  %391 = vst [vmem:[%s3 + $0x1c] sm:$0xf] %v359
  %392 = vst [vmem:[%s3 + $0x20] sm:$0xf] %v360
  %393 = vst [vmem:[%s3 + $0x24] sm:$0xf] %v361
  %394 = vst [vmem:[%s3 + $0x28] sm:$0xf] %v362
  %395 = vst [vmem:[%s3 + $0x2c] sm:$0xf] %v363
  %396 = vst [vmem:[%s3 + $0x30] sm:$0xf] %v364
  %397 = vst [vmem:[%s3 + $0x34] sm:$0xf] %v365
  %398 = vst [vmem:[%s3 + $0x38] sm:$0xf] %v366
  %399 = vst [vmem:[%s3 + $0x3c] sm:$0xf] %v367
  // Predicated region
  $region14: #{resnet_mvm_forward.10} parent=0 // pred_check
    _
  $region15: #{resnet_mvm_forward.10} parent=0 // pred_check_branch
    %401 = sbr.rel (0) target = $region17
  $region16: #{resnet_mvm_forward.10} parent=0 // pred_region
    _
  $region17: #{resnet_mvm_forward.10} parent=0 // pred_fallthru
    _
  // Predicated region
  $region18: #{resnet_mvm_forward.10} parent=0 // pred_check
    _
  $region19: #{resnet_mvm_forward.10} parent=0 // pred_check_branch
    %403 = sbr.rel (0) target = $region21
  $region20: #{resnet_mvm_forward.10} parent=0 // pred_region
    _
  $region21: #{resnet_mvm_forward.10} parent=0 // pred_fallthru
    _

// kernel: resnet_mvm_forward.11
$region0: #{resnet_mvm_forward.11}
  #allocation0 [shape = 'u32[]', space=smem, size = 0x4, offset = 0x4, fixed_abs, tag = 'smem constant byte address 0x4 - core index']
  #allocation1 [shape = 'u32[144,128]{1,0:T(1,128)}', space=vmem, size = 0x12000, scoped, tag = 'internal scratch']
  %s0 = inlined_call_operand.vmem [shape: bf16[128,288], index: 0, kind: input, shape index: {}]
  %s1 = inlined_call_operand.vmem [shape: bf16[288,128], index: 1, kind: input, shape index: {}]
  %s2 = inlined_call_operand.vmem [shape: f32[1,128], index: 2, kind: input, shape index: {}]
  %s3 = inlined_call_operand.vmem [shape: bf16[128,128], index: 3, kind: input, shape index: {}]
  %s4 = inlined_call_operand.vmem [shape: bf16[128,128], index: 4, kind: output, shape index: {}]
  %s5 = sld [smem:[#allocation0]]
  $region26: #{resnet_mvm_forward.11} parent=0
    _
  %s7 = ssub.s32 1, %s5
  %s8 = scalar_select 0, %s7, %s5
  // Predicated region
  $region2: #{resnet_mvm_forward.11} parent=0 // pred_check
    _
  $region3: #{resnet_mvm_forward.11} parent=0 // pred_check_branch
    %10 = sbr.rel (0) target = $region5
  $region4: #{resnet_mvm_forward.11} parent=0 // pred_region
    _
  $region5: #{resnet_mvm_forward.11} parent=0 // pred_fallthru
    _
  // Predicated region
  $region6: #{resnet_mvm_forward.11} parent=0 // pred_check
    _
  $region7: #{resnet_mvm_forward.11} parent=0 // pred_check_branch
    %12 = sbr.rel (0) target = $region9
  $region8: #{resnet_mvm_forward.11} parent=0 // pred_region
    _
  $region9: #{resnet_mvm_forward.11} parent=0 // pred_fallthru
    _
  // Predicated region
  $region10: #{resnet_mvm_forward.11} parent=0 // pred_check
    _
  $region11: #{resnet_mvm_forward.11} parent=0 // pred_check_branch
    %14 = sbr.rel (0) target = $region13
  $region12: #{resnet_mvm_forward.11} parent=0 // pred_region
    _
  $region13: #{resnet_mvm_forward.11} parent=0 // pred_fallthru
    _
  // Predicated region
  $region14: #{resnet_mvm_forward.11} parent=0 // pred_check
    _
  $region15: #{resnet_mvm_forward.11} parent=0 // pred_check_branch
    %16 = sbr.rel (0) target = $region17
  $region16: #{resnet_mvm_forward.11} parent=0 // pred_region
    _
  $region17: #{resnet_mvm_forward.11} parent=0 // pred_fallthru
    _
  %v18 = vld [vmem:[%s0] sm:$0xff]
  %v19 = vld [vmem:[%s0 + $0x8] sm:$0xf]
  %v20 = vld [vmem:[%s0 + $0xc] sm:$0xff]
  %v21 = vld [vmem:[%s0 + $0x14] sm:$0xf]
  %v22 = vld [vmem:[%s0 + $0x18] sm:$0xff]
  %v23 = vld [vmem:[%s0 + $0x20] sm:$0xf]
  %v24 = vld [vmem:[%s0 + $0x24] sm:$0xff]
  %v25 = vld [vmem:[%s0 + $0x2c] sm:$0xf]
  %v26 = vld [vmem:[%s0 + $0x30] sm:$0xff]
  %v27 = vld [vmem:[%s0 + $0x38] sm:$0xf]
  %v28 = vld [vmem:[%s0 + $0x3c] sm:$0xff]
  %v29 = vld [vmem:[%s0 + $0x44] sm:$0xf]
  %v30 = vld [vmem:[%s0 + $0x48] sm:$0xff]
  %v31 = vld [vmem:[%s0 + $0x50] sm:$0xf]
  %v32 = vld [vmem:[%s0 + $0x54] sm:$0xff]
  %v33 = vld [vmem:[%s0 + $0x5c] sm:$0xf]
  %v34 = vld [vmem:[%s0 + $0x60] sm:$0xff]
  %v35 = vld [vmem:[%s0 + $0x68] sm:$0xf]
  %v36 = vld [vmem:[%s0 + $0x6c] sm:$0xff]
  %v37 = vld [vmem:[%s0 + $0x74] sm:$0xf]
  %v38 = vld [vmem:[%s0 + $0x78] sm:$0xff]
  %v39 = vld [vmem:[%s0 + $0x80] sm:$0xf]
  %v40 = vld [vmem:[%s0 + $0x84] sm:$0xff]
  %v41 = vld [vmem:[%s0 + $0x8c] sm:$0xf]
  %v42 = vld [vmem:[%s0 + $0x90] sm:$0xff]
  %v43 = vld [vmem:[%s0 + $0x98] sm:$0xf]
  %v44 = vld [vmem:[%s0 + $0x9c] sm:$0xff]
  %v45 = vld [vmem:[%s0 + $0xa4] sm:$0xf]
  %v46 = vld [vmem:[%s0 + $0xa8] sm:$0xff]
  %v47 = vld [vmem:[%s0 + $0xb0] sm:$0xf]
  %v48 = vld [vmem:[%s0 + $0xb4] sm:$0xff]
  %v49 = vld [vmem:[%s0 + $0xbc] sm:$0xf]
  %v50 = vld [vmem:[%s1] sm:$0xf]
  %v51 = vld [vmem:[%s1 + $0x4] sm:$0xf]
  %v52 = vld [vmem:[%s1 + $0x8] sm:$0xf]
  %v53 = vld [vmem:[%s1 + $0xc] sm:$0xf]
  %v54 = vld [vmem:[%s1 + $0x10] sm:$0xf]
  %v55 = vld [vmem:[%s1 + $0x14] sm:$0xf]
  %v56 = vld [vmem:[%s1 + $0x18] sm:$0xf]
  %v57 = vld [vmem:[%s1 + $0x1c] sm:$0xf]
  %v58 = vld [vmem:[%s1 + $0x20] sm:$0xf]
  %v59 = vld [vmem:[%s1 + $0x24] sm:$0xf]
  %v60 = vld [vmem:[%s1 + $0x28] sm:$0xf]
  %v61 = vld [vmem:[%s1 + $0x2c] sm:$0xf]
  %v62 = vld [vmem:[%s1 + $0x30] sm:$0xf]
  %v63 = vld [vmem:[%s1 + $0x34] sm:$0xf]
  %v64 = vld [vmem:[%s1 + $0x38] sm:$0xf]
  %v65 = vld [vmem:[%s1 + $0x3c] sm:$0xf]
  %v66 = vld [vmem:[%s1 + $0x40] sm:$0xf]
  %v67 = vld [vmem:[%s1 + $0x44] sm:$0xf]
  %v68 = vld [vmem:[%s1 + $0x48] sm:$0xf]
  %v69 = vld [vmem:[%s1 + $0x4c] sm:$0xf]
  %v70 = vld [vmem:[%s1 + $0x50] sm:$0xf]
  %v71 = vld [vmem:[%s1 + $0x54] sm:$0xf]
  %v72 = vld [vmem:[%s1 + $0x58] sm:$0xf]
  %v73 = vld [vmem:[%s1 + $0x5c] sm:$0xf]
  %v74 = vld [vmem:[%s1 + $0x60] sm:$0xf]
  %v75 = vld [vmem:[%s1 + $0x64] sm:$0xf]
  %v76 = vld [vmem:[%s1 + $0x68] sm:$0xf]
  %v77 = vld [vmem:[%s1 + $0x6c] sm:$0xf]
  %v78 = vld [vmem:[%s1 + $0x70] sm:$0xf]
  %v79 = vld [vmem:[%s1 + $0x74] sm:$0xf]
  %v80 = vld [vmem:[%s1 + $0x78] sm:$0xf]
  %v81 = vld [vmem:[%s1 + $0x7c] sm:$0xf]
  %v82 = vld [vmem:[%s1 + $0x80] sm:$0xf]
  %v83 = vld [vmem:[%s1 + $0x84] sm:$0xf]
  %v84 = vld [vmem:[%s1 + $0x88] sm:$0xf]
  %v85 = vld [vmem:[%s1 + $0x8c] sm:$0xf]
  %v86 = vld [vmem:[%s2] sm:$0x1]
  %v88 = vlaneseq
  %v89 = vshrl.u32 %v88, 7
  %v90 = vsub.s32 0, %v89
  %v91 = vrot.slane %v86, %v90
  %v125 = vunpack.c.l.b16 %v18
  %v126 = vunpack.c.h.b16 %v18
  %v127 = vunpack.c.l.b16 %v19
  %v128 = vunpack.c.l.b16 %v20
  %v129 = vunpack.c.h.b16 %v20
  %v130 = vunpack.c.l.b16 %v21
  %v131 = vunpack.c.l.b16 %v22
  %v132 = vunpack.c.h.b16 %v22
  %v133 = vunpack.c.l.b16 %v23
  %v134 = vunpack.c.l.b16 %v24
  %v135 = vunpack.c.h.b16 %v24
  %v136 = vunpack.c.l.b16 %v25
  %v137 = vunpack.c.l.b16 %v26
  %v138 = vunpack.c.h.b16 %v26
  %v139 = vunpack.c.l.b16 %v27
  %v140 = vunpack.c.l.b16 %v28
  %v141 = vunpack.c.h.b16 %v28
  %v142 = vunpack.c.l.b16 %v29
  %v143 = vunpack.c.l.b16 %v30
  %v144 = vunpack.c.h.b16 %v30
  %v145 = vunpack.c.l.b16 %v31
  %v146 = vunpack.c.l.b16 %v32
  %v147 = vunpack.c.h.b16 %v32
  %v148 = vunpack.c.l.b16 %v33
  %v149 = vunpack.c.l.b16 %v34
  %v150 = vunpack.c.h.b16 %v34
  %v151 = vunpack.c.l.b16 %v35
  %v152 = vunpack.c.l.b16 %v36
  %v153 = vunpack.c.h.b16 %v36
  %v154 = vunpack.c.l.b16 %v37
  %v155 = vunpack.c.l.b16 %v38
  %v156 = vunpack.c.h.b16 %v38
  %v157 = vunpack.c.l.b16 %v39
  %v158 = vunpack.c.l.b16 %v40
  %v159 = vunpack.c.h.b16 %v40
  %v160 = vunpack.c.l.b16 %v41
  %v161 = vunpack.c.l.b16 %v42
  %v162 = vunpack.c.h.b16 %v42
  %v163 = vunpack.c.l.b16 %v43
  %v164 = vunpack.c.l.b16 %v44
  %v165 = vunpack.c.h.b16 %v44
  %v166 = vunpack.c.l.b16 %v45
  %v167 = vunpack.c.l.b16 %v46
  %v168 = vunpack.c.h.b16 %v46
  %v169 = vunpack.c.l.b16 %v47
  %v170 = vunpack.c.l.b16 %v48
  %v171 = vunpack.c.h.b16 %v48
  %v172 = vunpack.c.l.b16 %v49
  %v173 = vpack.c.b16 %v128, %v125
  %v174 = vpack.c.b16 %v129, %v126
  %v175 = vpack.c.b16 %v130, %v127
  %v176 = vpack.c.b16 %v134, %v131
  %v177 = vpack.c.b16 %v135, %v132
  %v178 = vpack.c.b16 %v136, %v133
  %v179 = vpack.c.b16 %v140, %v137
  %v180 = vpack.c.b16 %v141, %v138
  %v181 = vpack.c.b16 %v142, %v139
  %v182 = vpack.c.b16 %v146, %v143
  %v183 = vpack.c.b16 %v147, %v144
  %v184 = vpack.c.b16 %v148, %v145
  %v185 = vpack.c.b16 %v152, %v149
  %v186 = vpack.c.b16 %v153, %v150
  %v187 = vpack.c.b16 %v154, %v151
  %v188 = vpack.c.b16 %v158, %v155
  %v189 = vpack.c.b16 %v159, %v156
  %v190 = vpack.c.b16 %v160, %v157
  %v191 = vpack.c.b16 %v164, %v161
  %v192 = vpack.c.b16 %v165, %v162
  %v193 = vpack.c.b16 %v166, %v163
  %v194 = vpack.c.b16 %v170, %v167
  %v195 = vpack.c.b16 %v171, %v168
  %v196 = vpack.c.b16 %v172, %v169
  %v249 = vunpack.c.l.b16 %v50
  %v250 = vunpack.c.l.b16 %v51
  %v251 = vunpack.c.l.b16 %v52
  %v252 = vunpack.c.l.b16 %v53
  %v253 = vunpack.c.l.b16 %v54
  %v254 = vunpack.c.l.b16 %v55
  %v255 = vunpack.c.l.b16 %v56
  %v256 = vunpack.c.l.b16 %v57
  %v257 = vunpack.c.l.b16 %v58
  %v258 = vunpack.c.l.b16 %v59
  %v259 = vunpack.c.l.b16 %v60
  %v260 = vunpack.c.l.b16 %v61
  %v261 = vunpack.c.l.b16 %v62
  %v262 = vunpack.c.l.b16 %v63
  %v263 = vunpack.c.l.b16 %v64
  %v264 = vunpack.c.l.b16 %v65
  %v265 = vunpack.c.l.b16 %v66
  %v266 = vunpack.c.l.b16 %v67
  %v267 = vunpack.c.l.b16 %v68
  %v268 = vunpack.c.l.b16 %v69
  %v269 = vunpack.c.l.b16 %v70
  %v270 = vunpack.c.l.b16 %v71
  %v271 = vunpack.c.l.b16 %v72
  %v272 = vunpack.c.l.b16 %v73
  %v273 = vunpack.c.l.b16 %v74
  %v274 = vunpack.c.l.b16 %v75
  %v275 = vunpack.c.l.b16 %v76
  %v276 = vunpack.c.l.b16 %v77
  %v277 = vunpack.c.l.b16 %v78
  %v278 = vunpack.c.l.b16 %v79
  %v279 = vunpack.c.l.b16 %v80
  %v280 = vunpack.c.l.b16 %v81
  %v281 = vunpack.c.l.b16 %v82
  %v282 = vunpack.c.l.b16 %v83
  %v283 = vunpack.c.l.b16 %v84
  %v284 = vunpack.c.l.b16 %v85
  %v285 = vpack.c.b16 %v250, %v249
  %v286 = vpack.c.b16 %v252, %v251
  %v287 = vpack.c.b16 %v254, %v253
  %v288 = vpack.c.b16 %v256, %v255
  %v289 = vpack.c.b16 %v258, %v257
  %v290 = vpack.c.b16 %v260, %v259
  %v291 = vpack.c.b16 %v262, %v261
  %v292 = vpack.c.b16 %v264, %v263
  %v293 = vpack.c.b16 %v266, %v265
  %v294 = vpack.c.b16 %v268, %v267
  %v295 = vpack.c.b16 %v270, %v269
  %v296 = vpack.c.b16 %v272, %v271
  %v297 = vpack.c.b16 %v274, %v273
  %v298 = vpack.c.b16 %v276, %v275
  %v299 = vpack.c.b16 %v278, %v277
  %v300 = vpack.c.b16 %v280, %v279
  %v301 = vpack.c.b16 %v282, %v281
  %v302 = vpack.c.b16 %v284, %v283
  %vm321 = vcmask 261120
  %v323 = vsel %vm321, %v175, 0
  %v326 = vsel %vm321, %v178, 0
  %v329 = vsel %vm321, %v181, 0
  %v332 = vsel %vm321, %v184, 0
  %v335 = vsel %vm321, %v187, 0
  %v338 = vsel %vm321, %v190, 0
  %v341 = vsel %vm321, %v193, 0
  %v344 = vsel %vm321, %v196, 0
  %346 = vmatprep.subr.bf16.mxu0 0
  %347 = vmatpush1.bf16.msra.mxu0 %v285
  %348 = vmatprep.subr.bf16.mxu0 0
  %349 = vmatpush1.bf16.msra.mxu0 %v286
  %350 = vmatprep.subr.bf16.mxu0 0
  %351 = vmatpush1.bf16.msra.mxu0 %v287
  %352 = vmatprep.subr.bf16.mxu0 0
  %353 = vmatpush1.bf16.msra.mxu0 %v288
  %354 = vmatprep.subr.bf16.mxu0 0
  %355 = vmatpush1.bf16.msra.mxu0 %v289
  %356 = vmatprep.subr.bf16.mxu0 0
  %357 = vmatpush1.bf16.msra.mxu0 %v290
  %358 = vmatprep.subr.bf16.mxu0 0
  %359 = vmatpush1.bf16.msra.mxu0 %v291
  %360 = vmatprep.subr.bf16.mxu0 0
  %361 = vmatpush1.bf16.msra.mxu0 %v292
  %362 = vmatprep.subr.bf16.mxu0 0
  %363 = vmatpush1.bf16.msra.mxu0 %v293
  %364 = vmatprep.subr.bf16.mxu0 0
  %365 = vmatpush1.bf16.msra.mxu0 %v294
  %366 = vmatprep.subr.bf16.mxu0 0
  %367 = vmatpush1.bf16.msra.mxu0 %v295
  %368 = vmatprep.subr.bf16.mxu0 0
  %369 = vmatpush1.bf16.msra.mxu0 %v296
  %370 = vmatprep.subr.bf16.mxu0 0
  %371 = vmatpush1.bf16.msra.mxu0 %v297
  %372 = vmatprep.subr.bf16.mxu0 0
  %373 = vmatpush1.bf16.msra.mxu0 %v298
  %374 = vmatprep.subr.bf16.mxu0 0
  %375 = vmatpush1.bf16.msra.mxu0 %v299
  %376 = vmatprep.subr.bf16.mxu0 0
  %377 = vmatpush1.bf16.msra.mxu0 %v300
  %378 = vmatprep.mubr.bf16.mxu0 %v174
  %379 = vmatmul.mubr.bf16.gmra.mrb[0].mxu0 %v173
  %v380 = vpop.f32.mrb[0].mxu0
  %v381 = vadd.f32 %v91, %v380
  %v382 = vpop.f32.mrb[0].mxu0
  %v383 = vpop.f32.mrb[0].mxu0
  %v384 = vadd.f32 %v91, %v383
  %v385 = vpop.f32.mrb[0].mxu0
  %386 = vmatprep.mubr.bf16.mxu0 %v177
  %387 = vmatmul.mubr.bf16.gmra.mrb[0].mxu0 %v176
  %v388 = vpop.f32.mrb[0].mxu0
  %v389 = vadd.f32 %v91, %v388
  %v390 = vpop.f32.mrb[0].mxu0
  %v391 = vpop.f32.mrb[0].mxu0
  %v392 = vadd.f32 %v91, %v391
  %v393 = vpop.f32.mrb[0].mxu0
  %394 = vmatprep.mubr.bf16.mxu0 %v180
  %395 = vmatmul.mubr.bf16.gmra.mrb[0].mxu0 %v179
  %v396 = vpop.f32.mrb[0].mxu0
  %v397 = vadd.f32 %v91, %v396
  %v398 = vpop.f32.mrb[0].mxu0
  %v399 = vpop.f32.mrb[0].mxu0
  %v400 = vadd.f32 %v91, %v399
  %v401 = vpop.f32.mrb[0].mxu0
  %402 = vmatprep.mubr.bf16.mxu0 %v183
  %403 = vmatmul.mubr.bf16.gmra.mrb[0].mxu0 %v182
  %v404 = vpop.f32.mrb[0].mxu0
  %v405 = vadd.f32 %v91, %v404
  %v406 = vpop.f32.mrb[0].mxu0
  %v407 = vpop.f32.mrb[0].mxu0
  %v408 = vadd.f32 %v91, %v407
  %v409 = vpop.f32.mrb[0].mxu0
  %410 = vmatprep.mubr.bf16.mxu0 %v186
  %411 = vmatmul.mubr.bf16.gmra.mrb[0].mxu0 %v185
  %v412 = vpop.f32.mrb[0].mxu0
  %v413 = vadd.f32 %v91, %v412
  %v414 = vpop.f32.mrb[0].mxu0
  %v415 = vpop.f32.mrb[0].mxu0
  %v416 = vadd.f32 %v91, %v415
  %v417 = vpop.f32.mrb[0].mxu0
  %418 = vmatprep.mubr.bf16.mxu0 %v189
  %419 = vmatmul.mubr.bf16.gmra.mrb[0].mxu0 %v188
  %v420 = vpop.f32.mrb[0].mxu0
  %v421 = vadd.f32 %v91, %v420
  %v422 = vpop.f32.mrb[0].mxu0
  %v423 = vpop.f32.mrb[0].mxu0
  %v424 = vadd.f32 %v91, %v423
  %v425 = vpop.f32.mrb[0].mxu0
  %426 = vmatprep.mubr.bf16.mxu0 %v192
  %427 = vmatmul.mubr.bf16.gmra.mrb[0].mxu0 %v191
  %v428 = vpop.f32.mrb[0].mxu0
  %v429 = vadd.f32 %v91, %v428
  %v430 = vpop.f32.mrb[0].mxu0
  %v431 = vpop.f32.mrb[0].mxu0
  %v432 = vadd.f32 %v91, %v431
  %v433 = vpop.f32.mrb[0].mxu0
  %434 = vmatprep.mubr.bf16.mxu0 %v195
  %435 = vmatmul.mubr.bf16.gmra.mrb[0].mxu0 %v194
  %v436 = vpop.f32.mrb[0].mxu0
  %v437 = vadd.f32 %v91, %v436
  %v438 = vpop.f32.mrb[0].mxu0
  %v439 = vpop.f32.mrb[0].mxu0
  %v440 = vadd.f32 %v91, %v439
  %v441 = vpop.f32.mrb[0].mxu0
  %442 = vdwg.mxu0
  %443 = vmatprep.subr.bf16.mxu0 0
  %444 = vmatpush1.bf16.msra.mxu0 %v301
  %445 = vmatprep.subr.bf16.mxu0 0
  %446 = vmatpush1.bf16.msra.mxu0 %v302
  %447 = vmatprep.subr.bf16.mxu0 0
  %448 = vmatpush1.bf16.msra.mxu0 0
  %449 = vmatprep.subr.bf16.mxu0 0
  %450 = vmatpush1.bf16.msra.mxu0 0
  %451 = vmatprep.subr.bf16.mxu0 0
  %452 = vmatpush1.bf16.msra.mxu0 0
  %453 = vmatprep.subr.bf16.mxu0 0
  %454 = vmatpush1.bf16.msra.mxu0 0
  %455 = vmatprep.subr.bf16.mxu0 0
  %456 = vmatpush1.bf16.msra.mxu0 0
  %457 = vmatprep.subr.bf16.mxu0 0
  %458 = vmatpush1.bf16.msra.mxu0 0
  %459 = vmatprep.subr.bf16.mxu0 0
  %460 = vmatpush1.bf16.msra.mxu0 0
  %461 = vmatprep.subr.bf16.mxu0 0
  %462 = vmatpush1.bf16.msra.mxu0 0
  %463 = vmatprep.subr.bf16.mxu0 0
  %464 = vmatpush1.bf16.msra.mxu0 0
  %465 = vmatprep.subr.bf16.mxu0 0
  %466 = vmatpush1.bf16.msra.mxu0 0
  %467 = vmatprep.subr.bf16.mxu0 0
  %468 = vmatpush1.bf16.msra.mxu0 0
  %469 = vmatprep.subr.bf16.mxu0 0
  %470 = vmatpush1.bf16.msra.mxu0 0
  %471 = vmatprep.subr.bf16.mxu0 0
  %472 = vmatpush1.bf16.msra.mxu0 0
  %473 = vmatprep.subr.bf16.mxu0 0
  %474 = vmatpush1.bf16.msra.mxu0 0
  %475 = vmatprep.mubr.bf16.mxu0 0
  %476 = vmatmul.mubr.bf16.gmra.mrb[0].mxu0 %v323
  %v477 = vpop.f32.mrb[0].mxu0
  %v478 = vadd.f32 %v381, %v477
  %v479 = vpop.f32.mrb[0].mxu0
  %v480 = vpop.f32.mrb[0].mxu0
  %v481 = vadd.f32 %v384, %v480
  %v482 = vpop.f32.mrb[0].mxu0
  %483 = vmatprep.mubr.bf16.mxu0 0
  %484 = vmatmul.mubr.bf16.gmra.mrb[0].mxu0 %v326
  %v485 = vpop.f32.mrb[0].mxu0
  %v486 = vadd.f32 %v389, %v485
  %v487 = vpop.f32.mrb[0].mxu0
  %v488 = vpop.f32.mrb[0].mxu0
  %v489 = vadd.f32 %v392, %v488
  %v490 = vpop.f32.mrb[0].mxu0
  %491 = vmatprep.mubr.bf16.mxu0 0
  %492 = vmatmul.mubr.bf16.gmra.mrb[0].mxu0 %v329
  %v493 = vpop.f32.mrb[0].mxu0
  %v494 = vadd.f32 %v397, %v493
  %v495 = vpop.f32.mrb[0].mxu0
  %v496 = vpop.f32.mrb[0].mxu0
  %v497 = vadd.f32 %v400, %v496
  %v498 = vpop.f32.mrb[0].mxu0
  %499 = vmatprep.mubr.bf16.mxu0 0
  %500 = vmatmul.mubr.bf16.gmra.mrb[0].mxu0 %v332
  %v501 = vpop.f32.mrb[0].mxu0
  %v502 = vadd.f32 %v405, %v501
  %v503 = vpop.f32.mrb[0].mxu0
  %v504 = vpop.f32.mrb[0].mxu0
  %v505 = vadd.f32 %v408, %v504
  %v506 = vpop.f32.mrb[0].mxu0
  %507 = vmatprep.mubr.bf16.mxu0 0
  %508 = vmatmul.mubr.bf16.gmra.mrb[0].mxu0 %v335
  %v509 = vpop.f32.mrb[0].mxu0
  %v510 = vadd.f32 %v413, %v509
  %v511 = vpop.f32.mrb[0].mxu0
  %v512 = vpop.f32.mrb[0].mxu0
  %v513 = vadd.f32 %v416, %v512
  %v514 = vpop.f32.mrb[0].mxu0
  %515 = vmatprep.mubr.bf16.mxu0 0
  %516 = vmatmul.mubr.bf16.gmra.mrb[0].mxu0 %v338
  %v517 = vpop.f32.mrb[0].mxu0
  %v518 = vadd.f32 %v421, %v517
  %v519 = vpop.f32.mrb[0].mxu0
  %v520 = vpop.f32.mrb[0].mxu0
  %v521 = vadd.f32 %v424, %v520
  %v522 = vpop.f32.mrb[0].mxu0
  %523 = vmatprep.mubr.bf16.mxu0 0
  %524 = vmatmul.mubr.bf16.gmra.mrb[0].mxu0 %v341
  %v525 = vpop.f32.mrb[0].mxu0
  %v526 = vadd.f32 %v429, %v525
  %v527 = vpop.f32.mrb[0].mxu0
  %v528 = vpop.f32.mrb[0].mxu0
  %v529 = vadd.f32 %v432, %v528
  %v530 = vpop.f32.mrb[0].mxu0
  %531 = vmatprep.mubr.bf16.mxu0 0
  %532 = vmatmul.mubr.bf16.gmra.mrb[0].mxu0 %v344
  %v533 = vpop.f32.mrb[0].mxu0
  %v534 = vadd.f32 %v437, %v533
  %v535 = vpop.f32.mrb[0].mxu0
  %v536 = vpop.f32.mrb[0].mxu0
  %v537 = vadd.f32 %v440, %v536
  %v538 = vpop.f32.mrb[0].mxu0
  %539 = vdwg.mxu0
  %v540 = vld [vmem:[%s3] sm:$0xf]
  %v541 = vld [vmem:[%s3 + $0x4] sm:$0xf]
  %v542 = vld [vmem:[%s3 + $0x8] sm:$0xf]
  %v543 = vld [vmem:[%s3 + $0xc] sm:$0xf]
  %v544 = vld [vmem:[%s3 + $0x10] sm:$0xf]
  %v545 = vld [vmem:[%s3 + $0x14] sm:$0xf]
  %v546 = vld [vmem:[%s3 + $0x18] sm:$0xf]
  %v547 = vld [vmem:[%s3 + $0x1c] sm:$0xf]
  %v548 = vld [vmem:[%s3 + $0x20] sm:$0xf]
  %v549 = vld [vmem:[%s3 + $0x24] sm:$0xf]
  %v550 = vld [vmem:[%s3 + $0x28] sm:$0xf]
  %v551 = vld [vmem:[%s3 + $0x2c] sm:$0xf]
  %v552 = vld [vmem:[%s3 + $0x30] sm:$0xf]
  %v553 = vld [vmem:[%s3 + $0x34] sm:$0xf]
  %v554 = vld [vmem:[%s3 + $0x38] sm:$0xf]
  %v555 = vld [vmem:[%s3 + $0x3c] sm:$0xf]
  %v556 = vunpack.c.l.bf16 %v540
  %v557 = vunpack.c.l.bf16 %v541
  %v558 = vunpack.c.l.bf16 %v542
  %v559 = vunpack.c.l.bf16 %v543
  %v560 = vunpack.c.l.bf16 %v544
  %v561 = vunpack.c.l.bf16 %v545
  %v562 = vunpack.c.l.bf16 %v546
  %v563 = vunpack.c.l.bf16 %v547
  %v564 = vunpack.c.l.bf16 %v548
  %v565 = vunpack.c.l.bf16 %v549
  %v566 = vunpack.c.l.bf16 %v550
  %v567 = vunpack.c.l.bf16 %v551
  %v568 = vunpack.c.l.bf16 %v552
  %v569 = vunpack.c.l.bf16 %v553
  %v570 = vunpack.c.l.bf16 %v554
  %v571 = vunpack.c.l.bf16 %v555
  %v572 = vadd.f32 %v478, %v556
  %v573 = vadd.f32 %v481, %v557
  %v574 = vadd.f32 %v486, %v558
  %v575 = vadd.f32 %v489, %v559
  %v576 = vadd.f32 %v494, %v560
  %v577 = vadd.f32 %v497, %v561
  %v578 = vadd.f32 %v502, %v562
  %v579 = vadd.f32 %v505, %v563
  %v580 = vadd.f32 %v510, %v564
  %v581 = vadd.f32 %v513, %v565
  %v582 = vadd.f32 %v518, %v566
  %v583 = vadd.f32 %v521, %v567
  %v584 = vadd.f32 %v526, %v568
  %v585 = vadd.f32 %v529, %v569
  %v586 = vadd.f32 %v534, %v570
  %v587 = vadd.f32 %v537, %v571
  %v588 = vmax.f32 %v572, 0.0
  %v589 = vmax.f32 %v573, 0.0
  %v590 = vmax.f32 %v574, 0.0
  %v591 = vmax.f32 %v575, 0.0
  %v592 = vmax.f32 %v576, 0.0
  %v593 = vmax.f32 %v577, 0.0
  %v594 = vmax.f32 %v578, 0.0
  %v595 = vmax.f32 %v579, 0.0
  %v596 = vmax.f32 %v580, 0.0
  %v597 = vmax.f32 %v581, 0.0
  %v598 = vmax.f32 %v582, 0.0
  %v599 = vmax.f32 %v583, 0.0
  %v600 = vmax.f32 %v584, 0.0
  %v601 = vmax.f32 %v585, 0.0
  %v602 = vmax.f32 %v586, 0.0
  %v603 = vmax.f32 %v587, 0.0
  %v604 = vpack.c.bf16 %v589, %v588
  %v605 = vpack.c.bf16 %v591, %v590
  %v606 = vpack.c.bf16 %v593, %v592
  %v607 = vpack.c.bf16 %v595, %v594
  %v608 = vpack.c.bf16 %v597, %v596
  %v609 = vpack.c.bf16 %v599, %v598
  %v610 = vpack.c.bf16 %v601, %v600
  %v611 = vpack.c.bf16 %v603, %v602
  %v620 = vunpack.c.l.b16 %v604
  %v621 = vunpack.c.h.b16 %v604
  %v622 = vunpack.c.l.b16 %v605
  %v623 = vunpack.c.h.b16 %v605
  %v624 = vunpack.c.l.b16 %v606
  %v625 = vunpack.c.h.b16 %v606
  %v626 = vunpack.c.l.b16 %v607
  %v627 = vunpack.c.h.b16 %v607
  %v628 = vunpack.c.l.b16 %v608
  %v629 = vunpack.c.h.b16 %v608
  %v630 = vunpack.c.l.b16 %v609
  %v631 = vunpack.c.h.b16 %v609
  %v632 = vunpack.c.l.b16 %v610
  %v633 = vunpack.c.h.b16 %v610
  %v634 = vunpack.c.l.b16 %v611
  %v635 = vunpack.c.h.b16 %v611
  %v636 = vpack.c.b16 %v620, %v620
  %v637 = vpack.c.b16 %v621, %v621
  %v638 = vpack.c.b16 %v622, %v622
  %v639 = vpack.c.b16 %v623, %v623
  %v640 = vpack.c.b16 %v624, %v624
  %v641 = vpack.c.b16 %v625, %v625
  %v642 = vpack.c.b16 %v626, %v626
  %v643 = vpack.c.b16 %v627, %v627
  %v644 = vpack.c.b16 %v628, %v628
  %v645 = vpack.c.b16 %v629, %v629
  %v646 = vpack.c.b16 %v630, %v630
  %v647 = vpack.c.b16 %v631, %v631
  %v648 = vpack.c.b16 %v632, %v632
  %v649 = vpack.c.b16 %v633, %v633
  %v650 = vpack.c.b16 %v634, %v634
  %v651 = vpack.c.b16 %v635, %v635
  %668 = vst [vmem:[%s4] sm:$0xf] %v636
  %669 = vst [vmem:[%s4 + $0x4] sm:$0xf] %v637
  %670 = vst [vmem:[%s4 + $0x8] sm:$0xf] %v638
  %671 = vst [vmem:[%s4 + $0xc] sm:$0xf] %v639
  %672 = vst [vmem:[%s4 + $0x10] sm:$0xf] %v640
  %673 = vst [vmem:[%s4 + $0x14] sm:$0xf] %v641
  %674 = vst [vmem:[%s4 + $0x18] sm:$0xf] %v642
  %675 = vst [vmem:[%s4 + $0x1c] sm:$0xf] %v643
  %676 = vst [vmem:[%s4 + $0x20] sm:$0xf] %v644
  %677 = vst [vmem:[%s4 + $0x24] sm:$0xf] %v645
  %678 = vst [vmem:[%s4 + $0x28] sm:$0xf] %v646
  %679 = vst [vmem:[%s4 + $0x2c] sm:$0xf] %v647
  %680 = vst [vmem:[%s4 + $0x30] sm:$0xf] %v648
  %681 = vst [vmem:[%s4 + $0x34] sm:$0xf] %v649
  %682 = vst [vmem:[%s4 + $0x38] sm:$0xf] %v650
  %683 = vst [vmem:[%s4 + $0x3c] sm:$0xf] %v651
  // Predicated region
  $region18: #{resnet_mvm_forward.11} parent=0 // pred_check
    _
  $region19: #{resnet_mvm_forward.11} parent=0 // pred_check_branch
    %685 = sbr.rel (0) target = $region21
  $region20: #{resnet_mvm_forward.11} parent=0 // pred_region
    _
  $region21: #{resnet_mvm_forward.11} parent=0 // pred_fallthru
    _
  // Predicated region
  $region22: #{resnet_mvm_forward.11} parent=0 // pred_check
    _
  $region23: #{resnet_mvm_forward.11} parent=0 // pred_check_branch
    %687 = sbr.rel (0) target = $region25
  $region24: #{resnet_mvm_forward.11} parent=0 // pred_region
    _
  $region25: #{resnet_mvm_forward.11} parent=0 // pred_fallthru
    _

// kernel: resnet_mvm_forward.12
$region0: #{resnet_mvm_forward.12}
  #allocation0 [shape = 'u32[]', space=smem, size = 0x4, offset = 0x4, fixed_abs, tag = 'smem constant byte address 0x4 - core index']
  #allocation1 [shape = 'u32[144,128]{1,0:T(1,128)}', space=vmem, size = 0x12000, scoped, tag = 'internal scratch']
  %s0 = inlined_call_operand.vmem [shape: bf16[32,288], index: 0, kind: input, shape index: {}]
  %s1 = inlined_call_operand.vmem [shape: bf16[288,128], index: 1, kind: input, shape index: {}]
  %s2 = inlined_call_operand.vmem [shape: f32[1,128], index: 2, kind: input, shape index: {}]
  %s3 = inlined_call_operand.vmem [shape: bf16[32,128], index: 3, kind: output, shape index: {}]
  %s4 = sld [smem:[#allocation0]]
  $region22: #{resnet_mvm_forward.12} parent=0
    _
  %s6 = ssub.s32 1, %s4
  %s7 = scalar_select 0, %s6, %s4
  // Predicated region
  $region2: #{resnet_mvm_forward.12} parent=0 // pred_check
    _
  $region3: #{resnet_mvm_forward.12} parent=0 // pred_check_branch
    %9 = sbr.rel (0) target = $region5
  $region4: #{resnet_mvm_forward.12} parent=0 // pred_region
    _
  $region5: #{resnet_mvm_forward.12} parent=0 // pred_fallthru
    _
  // Predicated region
  $region6: #{resnet_mvm_forward.12} parent=0 // pred_check
    _
  $region7: #{resnet_mvm_forward.12} parent=0 // pred_check_branch
    %11 = sbr.rel (0) target = $region9
  $region8: #{resnet_mvm_forward.12} parent=0 // pred_region
    _
  $region9: #{resnet_mvm_forward.12} parent=0 // pred_fallthru
    _
  // Predicated region
  $region10: #{resnet_mvm_forward.12} parent=0 // pred_check
    _
  $region11: #{resnet_mvm_forward.12} parent=0 // pred_check_branch
    %13 = sbr.rel (0) target = $region13
  $region12: #{resnet_mvm_forward.12} parent=0 // pred_region
    _
  $region13: #{resnet_mvm_forward.12} parent=0 // pred_fallthru
    _
  %v15 = vld [vmem:[%s0] sm:$0xff]
  %v16 = vld [vmem:[%s0 + $0x8] sm:$0xf]
  %v17 = vld [vmem:[%s0 + $0xc] sm:$0xff]
  %v18 = vld [vmem:[%s0 + $0x14] sm:$0xf]
  %v19 = vld [vmem:[%s0 + $0x18] sm:$0xff]
  %v20 = vld [vmem:[%s0 + $0x20] sm:$0xf]
  %v21 = vld [vmem:[%s0 + $0x24] sm:$0xff]
  %v22 = vld [vmem:[%s0 + $0x2c] sm:$0xf]
  %v23 = vld [vmem:[%s1] sm:$0xf]
  %v24 = vld [vmem:[%s1 + $0x4] sm:$0xf]
  %v25 = vld [vmem:[%s1 + $0x8] sm:$0xf]
  %v26 = vld [vmem:[%s1 + $0xc] sm:$0xf]
  %v27 = vld [vmem:[%s1 + $0x10] sm:$0xf]
  %v28 = vld [vmem:[%s1 + $0x14] sm:$0xf]
  %v29 = vld [vmem:[%s1 + $0x18] sm:$0xf]
  %v30 = vld [vmem:[%s1 + $0x1c] sm:$0xf]
  %v31 = vld [vmem:[%s1 + $0x20] sm:$0xf]
  %v32 = vld [vmem:[%s1 + $0x24] sm:$0xf]
  %v33 = vld [vmem:[%s1 + $0x28] sm:$0xf]
  %v34 = vld [vmem:[%s1 + $0x2c] sm:$0xf]
  %v35 = vld [vmem:[%s1 + $0x30] sm:$0xf]
  %v36 = vld [vmem:[%s1 + $0x34] sm:$0xf]
  %v37 = vld [vmem:[%s1 + $0x38] sm:$0xf]
  %v38 = vld [vmem:[%s1 + $0x3c] sm:$0xf]
  %v39 = vld [vmem:[%s1 + $0x40] sm:$0xf]
  %v40 = vld [vmem:[%s1 + $0x44] sm:$0xf]
  %v41 = vld [vmem:[%s1 + $0x48] sm:$0xf]
  %v42 = vld [vmem:[%s1 + $0x4c] sm:$0xf]
  %v43 = vld [vmem:[%s1 + $0x50] sm:$0xf]
  %v44 = vld [vmem:[%s1 + $0x54] sm:$0xf]
  %v45 = vld [vmem:[%s1 + $0x58] sm:$0xf]
  %v46 = vld [vmem:[%s1 + $0x5c] sm:$0xf]
  %v47 = vld [vmem:[%s1 + $0x60] sm:$0xf]
  %v48 = vld [vmem:[%s1 + $0x64] sm:$0xf]
  %v49 = vld [vmem:[%s1 + $0x68] sm:$0xf]
  %v50 = vld [vmem:[%s1 + $0x6c] sm:$0xf]
  %v51 = vld [vmem:[%s1 + $0x70] sm:$0xf]
  %v52 = vld [vmem:[%s1 + $0x74] sm:$0xf]
  %v53 = vld [vmem:[%s1 + $0x78] sm:$0xf]
  %v54 = vld [vmem:[%s1 + $0x7c] sm:$0xf]
  %v55 = vld [vmem:[%s1 + $0x80] sm:$0xf]
  %v56 = vld [vmem:[%s1 + $0x84] sm:$0xf]
  %v57 = vld [vmem:[%s1 + $0x88] sm:$0xf]
  %v58 = vld [vmem:[%s1 + $0x8c] sm:$0xf]
  %v59 = vld [vmem:[%s2] sm:$0x1]
  %v61 = vlaneseq
  %v62 = vshrl.u32 %v61, 7
  %v63 = vsub.s32 0, %v62
  %v64 = vrot.slane %v59, %v63
  %v74 = vunpack.c.l.b16 %v15
  %v75 = vunpack.c.h.b16 %v15
  %v76 = vunpack.c.l.b16 %v16
  %v77 = vunpack.c.l.b16 %v17
  %v78 = vunpack.c.h.b16 %v17
  %v79 = vunpack.c.l.b16 %v18
  %v80 = vunpack.c.l.b16 %v19
  %v81 = vunpack.c.h.b16 %v19
  %v82 = vunpack.c.l.b16 %v20
  %v83 = vunpack.c.l.b16 %v21
  %v84 = vunpack.c.h.b16 %v21
  %v85 = vunpack.c.l.b16 %v22
  %v86 = vpack.c.b16 %v77, %v74
  %v87 = vpack.c.b16 %v78, %v75
  %v88 = vpack.c.b16 %v79, %v76
  %v89 = vpack.c.b16 %v83, %v80
  %v90 = vpack.c.b16 %v84, %v81
  %v91 = vpack.c.b16 %v85, %v82
  %v132 = vunpack.c.l.b16 %v23
  %v133 = vunpack.c.l.b16 %v24
  %v134 = vunpack.c.l.b16 %v25
  %v135 = vunpack.c.l.b16 %v26
  %v136 = vunpack.c.l.b16 %v27
  %v137 = vunpack.c.l.b16 %v28
  %v138 = vunpack.c.l.b16 %v29
  %v139 = vunpack.c.l.b16 %v30
  %v140 = vunpack.c.l.b16 %v31
  %v141 = vunpack.c.l.b16 %v32
  %v142 = vunpack.c.l.b16 %v33
  %v143 = vunpack.c.l.b16 %v34
  %v144 = vunpack.c.l.b16 %v35
  %v145 = vunpack.c.l.b16 %v36
  %v146 = vunpack.c.l.b16 %v37
  %v147 = vunpack.c.l.b16 %v38
  %v148 = vunpack.c.l.b16 %v39
  %v149 = vunpack.c.l.b16 %v40
  %v150 = vunpack.c.l.b16 %v41
  %v151 = vunpack.c.l.b16 %v42
  %v152 = vunpack.c.l.b16 %v43
  %v153 = vunpack.c.l.b16 %v44
  %v154 = vunpack.c.l.b16 %v45
  %v155 = vunpack.c.l.b16 %v46
  %v156 = vunpack.c.l.b16 %v47
  %v157 = vunpack.c.l.b16 %v48
  %v158 = vunpack.c.l.b16 %v49
  %v159 = vunpack.c.l.b16 %v50
  %v160 = vunpack.c.l.b16 %v51
  %v161 = vunpack.c.l.b16 %v52
  %v162 = vunpack.c.l.b16 %v53
  %v163 = vunpack.c.l.b16 %v54
  %v164 = vunpack.c.l.b16 %v55
  %v165 = vunpack.c.l.b16 %v56
  %v166 = vunpack.c.l.b16 %v57
  %v167 = vunpack.c.l.b16 %v58
  %v168 = vpack.c.b16 %v133, %v132
  %v169 = vpack.c.b16 %v135, %v134
  %v170 = vpack.c.b16 %v137, %v136
  %v171 = vpack.c.b16 %v139, %v138
  %v172 = vpack.c.b16 %v141, %v140
  %v173 = vpack.c.b16 %v143, %v142
  %v174 = vpack.c.b16 %v145, %v144
  %v175 = vpack.c.b16 %v147, %v146
  %v176 = vpack.c.b16 %v149, %v148
  %v177 = vpack.c.b16 %v151, %v150
  %v178 = vpack.c.b16 %v153, %v152
  %v179 = vpack.c.b16 %v155, %v154
  %v180 = vpack.c.b16 %v157, %v156
  %v181 = vpack.c.b16 %v159, %v158
  %v182 = vpack.c.b16 %v161, %v160
  %v183 = vpack.c.b16 %v163, %v162
  %v184 = vpack.c.b16 %v165, %v164
  %v185 = vpack.c.b16 %v167, %v166
  %vm204 = vcmask 261120
  %v206 = vsel %vm204, %v88, 0
  %v209 = vsel %vm204, %v91, 0
  %211 = vmatprep.subr.bf16.mxu0 0
  %212 = vmatpush1.bf16.msra.mxu0 %v168
  %213 = vmatprep.subr.bf16.mxu0 0
  %214 = vmatpush1.bf16.msra.mxu0 %v169
  %215 = vmatprep.subr.bf16.mxu0 0
  %216 = vmatpush1.bf16.msra.mxu0 %v170
  %217 = vmatprep.subr.bf16.mxu0 0
  %218 = vmatpush1.bf16.msra.mxu0 %v171
  %219 = vmatprep.subr.bf16.mxu0 0
  %220 = vmatpush1.bf16.msra.mxu0 %v172
  %221 = vmatprep.subr.bf16.mxu0 0
  %222 = vmatpush1.bf16.msra.mxu0 %v173
  %223 = vmatprep.subr.bf16.mxu0 0
  %224 = vmatpush1.bf16.msra.mxu0 %v174
  %225 = vmatprep.subr.bf16.mxu0 0
  %226 = vmatpush1.bf16.msra.mxu0 %v175
  %227 = vmatprep.subr.bf16.mxu0 0
  %228 = vmatpush1.bf16.msra.mxu0 %v176
  %229 = vmatprep.subr.bf16.mxu0 0
  %230 = vmatpush1.bf16.msra.mxu0 %v177
  %231 = vmatprep.subr.bf16.mxu0 0
  %232 = vmatpush1.bf16.msra.mxu0 %v178
  %233 = vmatprep.subr.bf16.mxu0 0
  %234 = vmatpush1.bf16.msra.mxu0 %v179
  %235 = vmatprep.subr.bf16.mxu0 0
  %236 = vmatpush1.bf16.msra.mxu0 %v180
  %237 = vmatprep.subr.bf16.mxu0 0
  %238 = vmatpush1.bf16.msra.mxu0 %v181
  %239 = vmatprep.subr.bf16.mxu0 0
  %240 = vmatpush1.bf16.msra.mxu0 %v182
  %241 = vmatprep.subr.bf16.mxu0 0
  %242 = vmatpush1.bf16.msra.mxu0 %v183
  %243 = vmatprep.mubr.bf16.mxu0 %v87
  %244 = vmatmul.mubr.bf16.gmra.mrb[0].mxu0 %v86
  %v245 = vpop.f32.mrb[0].mxu0
  %v246 = vadd.f32 %v64, %v245
  %v247 = vpop.f32.mrb[0].mxu0
  %v248 = vpop.f32.mrb[0].mxu0
  %v249 = vadd.f32 %v64, %v248
  %v250 = vpop.f32.mrb[0].mxu0
  %251 = vmatprep.mubr.bf16.mxu0 %v90
  %252 = vmatmul.mubr.bf16.gmra.mrb[0].mxu0 %v89
  %v253 = vpop.f32.mrb[0].mxu0
  %v254 = vadd.f32 %v64, %v253
  %v255 = vpop.f32.mrb[0].mxu0
  %v256 = vpop.f32.mrb[0].mxu0
  %v257 = vadd.f32 %v64, %v256
  %v258 = vpop.f32.mrb[0].mxu0
  %259 = vdwg.mxu0
  %260 = vmatprep.subr.bf16.mxu0 0
  %261 = vmatpush1.bf16.msra.mxu0 %v184
  %262 = vmatprep.subr.bf16.mxu0 0
  %263 = vmatpush1.bf16.msra.mxu0 %v185
  %264 = vmatprep.subr.bf16.mxu0 0
  %265 = vmatpush1.bf16.msra.mxu0 0
  %266 = vmatprep.subr.bf16.mxu0 0
  %267 = vmatpush1.bf16.msra.mxu0 0
  %268 = vmatprep.subr.bf16.mxu0 0
  %269 = vmatpush1.bf16.msra.mxu0 0
  %270 = vmatprep.subr.bf16.mxu0 0
  %271 = vmatpush1.bf16.msra.mxu0 0
  %272 = vmatprep.subr.bf16.mxu0 0
  %273 = vmatpush1.bf16.msra.mxu0 0
  %274 = vmatprep.subr.bf16.mxu0 0
  %275 = vmatpush1.bf16.msra.mxu0 0
  %276 = vmatprep.subr.bf16.mxu0 0
  %277 = vmatpush1.bf16.msra.mxu0 0
  %278 = vmatprep.subr.bf16.mxu0 0
  %279 = vmatpush1.bf16.msra.mxu0 0
  %280 = vmatprep.subr.bf16.mxu0 0
  %281 = vmatpush1.bf16.msra.mxu0 0
  %282 = vmatprep.subr.bf16.mxu0 0
  %283 = vmatpush1.bf16.msra.mxu0 0
  %284 = vmatprep.subr.bf16.mxu0 0
  %285 = vmatpush1.bf16.msra.mxu0 0
  %286 = vmatprep.subr.bf16.mxu0 0
  %287 = vmatpush1.bf16.msra.mxu0 0
  %288 = vmatprep.subr.bf16.mxu0 0
  %289 = vmatpush1.bf16.msra.mxu0 0
  %290 = vmatprep.subr.bf16.mxu0 0
  %291 = vmatpush1.bf16.msra.mxu0 0
  %292 = vmatprep.mubr.bf16.mxu0 0
  %293 = vmatmul.mubr.bf16.gmra.mrb[0].mxu0 %v206
  %v294 = vpop.f32.mrb[0].mxu0
  %v295 = vadd.f32 %v246, %v294
  %v296 = vpop.f32.mrb[0].mxu0
  %v297 = vpop.f32.mrb[0].mxu0
  %v298 = vadd.f32 %v249, %v297
  %v299 = vpop.f32.mrb[0].mxu0
  %300 = vmatprep.mubr.bf16.mxu0 0
  %301 = vmatmul.mubr.bf16.gmra.mrb[0].mxu0 %v209
  %v302 = vpop.f32.mrb[0].mxu0
  %v303 = vadd.f32 %v254, %v302
  %v304 = vpop.f32.mrb[0].mxu0
  %v305 = vpop.f32.mrb[0].mxu0
  %v306 = vadd.f32 %v257, %v305
  %v307 = vpop.f32.mrb[0].mxu0
  %308 = vdwg.mxu0
  %v309 = vmax.f32 %v295, 0.0
  %v310 = vmax.f32 %v298, 0.0
  %v311 = vmax.f32 %v303, 0.0
  %v312 = vmax.f32 %v306, 0.0
  %v313 = vpack.c.bf16 %v310, %v309
  %v314 = vpack.c.bf16 %v312, %v311
  %v317 = vunpack.c.l.b16 %v313
  %v318 = vunpack.c.h.b16 %v313
  %v319 = vunpack.c.l.b16 %v314
  %v320 = vunpack.c.h.b16 %v314
  %v321 = vpack.c.b16 %v317, %v317
  %v322 = vpack.c.b16 %v318, %v318
  %v323 = vpack.c.b16 %v319, %v319
  %v324 = vpack.c.b16 %v320, %v320
  %329 = vst [vmem:[%s3] sm:$0xf] %v321
  %330 = vst [vmem:[%s3 + $0x4] sm:$0xf] %v322
  %331 = vst [vmem:[%s3 + $0x8] sm:$0xf] %v323
  %332 = vst [vmem:[%s3 + $0xc] sm:$0xf] %v324
  // Predicated region
  $region14: #{resnet_mvm_forward.12} parent=0 // pred_check
    _
  $region15: #{resnet_mvm_forward.12} parent=0 // pred_check_branch
    %334 = sbr.rel (0) target = $region17
  $region16: #{resnet_mvm_forward.12} parent=0 // pred_region
    _
  $region17: #{resnet_mvm_forward.12} parent=0 // pred_fallthru
    _
  // Predicated region
  $region18: #{resnet_mvm_forward.12} parent=0 // pred_check
    _
  $region19: #{resnet_mvm_forward.12} parent=0 // pred_check_branch
    %336 = sbr.rel (0) target = $region21
  $region20: #{resnet_mvm_forward.12} parent=0 // pred_region
    _
  $region21: #{resnet_mvm_forward.12} parent=0 // pred_fallthru
    _

// kernel: resnet_mvm_forward.13
$region0: #{resnet_mvm_forward.13}
  #allocation0 [shape = 'u32[]', space=smem, size = 0x4, offset = 0x4, fixed_abs, tag = 'smem constant byte address 0x4 - core index']
  #allocation1 [shape = 'u32[144,128]{1,0:T(1,128)}', space=vmem, size = 0x12000, scoped, tag = 'internal scratch']
  %s0 = inlined_call_operand.vmem [shape: bf16[32,576], index: 0, kind: input, shape index: {}]
  %s1 = inlined_call_operand.vmem [shape: bf16[576,128], index: 1, kind: input, shape index: {}]
  %s2 = inlined_call_operand.vmem [shape: f32[1,128], index: 2, kind: input, shape index: {}]
  %s3 = inlined_call_operand.vmem [shape: bf16[32,128], index: 3, kind: input, shape index: {}]
  %s4 = inlined_call_operand.vmem [shape: bf16[32,128], index: 4, kind: output, shape index: {}]
  %s5 = sld [smem:[#allocation0]]
  $region26: #{resnet_mvm_forward.13} parent=0
    _
  %s7 = ssub.s32 1, %s5
  %s8 = scalar_select 0, %s7, %s5
  // Predicated region
  $region2: #{resnet_mvm_forward.13} parent=0 // pred_check
    _
  $region3: #{resnet_mvm_forward.13} parent=0 // pred_check_branch
    %10 = sbr.rel (0) target = $region5
  $region4: #{resnet_mvm_forward.13} parent=0 // pred_region
    _
  $region5: #{resnet_mvm_forward.13} parent=0 // pred_fallthru
    _
  // Predicated region
  $region6: #{resnet_mvm_forward.13} parent=0 // pred_check
    _
  $region7: #{resnet_mvm_forward.13} parent=0 // pred_check_branch
    %12 = sbr.rel (0) target = $region9
  $region8: #{resnet_mvm_forward.13} parent=0 // pred_region
    _
  $region9: #{resnet_mvm_forward.13} parent=0 // pred_fallthru
    _
  // Predicated region
  $region10: #{resnet_mvm_forward.13} parent=0 // pred_check
    _
  $region11: #{resnet_mvm_forward.13} parent=0 // pred_check_branch
    %14 = sbr.rel (0) target = $region13
  $region12: #{resnet_mvm_forward.13} parent=0 // pred_region
    _
  $region13: #{resnet_mvm_forward.13} parent=0 // pred_fallthru
    _
  // Predicated region
  $region14: #{resnet_mvm_forward.13} parent=0 // pred_check
    _
  $region15: #{resnet_mvm_forward.13} parent=0 // pred_check_branch
    %16 = sbr.rel (0) target = $region17
  $region16: #{resnet_mvm_forward.13} parent=0 // pred_region
    _
  $region17: #{resnet_mvm_forward.13} parent=0 // pred_fallthru
    _
  %v18 = vld [vmem:[%s0] sm:$0xff]
  %v19 = vld [vmem:[%s0 + $0x8] sm:$0xff]
  %v20 = vld [vmem:[%s0 + $0x10] sm:$0xf]
  %v21 = vld [vmem:[%s0 + $0x14] sm:$0xff]
  %v22 = vld [vmem:[%s0 + $0x1c] sm:$0xff]
  %v23 = vld [vmem:[%s0 + $0x24] sm:$0xf]
  %v24 = vld [vmem:[%s0 + $0x28] sm:$0xff]
  %v25 = vld [vmem:[%s0 + $0x30] sm:$0xff]
  %v26 = vld [vmem:[%s0 + $0x38] sm:$0xf]
  %v27 = vld [vmem:[%s0 + $0x3c] sm:$0xff]
  %v28 = vld [vmem:[%s0 + $0x44] sm:$0xff]
  %v29 = vld [vmem:[%s0 + $0x4c] sm:$0xf]
  %v30 = vld [vmem:[%s1] sm:$0xf]
  %v31 = vld [vmem:[%s1 + $0x4] sm:$0xf]
  %v32 = vld [vmem:[%s1 + $0x8] sm:$0xf]
  %v33 = vld [vmem:[%s1 + $0xc] sm:$0xf]
  %v34 = vld [vmem:[%s1 + $0x10] sm:$0xf]
  %v35 = vld [vmem:[%s1 + $0x14] sm:$0xf]
  %v36 = vld [vmem:[%s1 + $0x18] sm:$0xf]
  %v37 = vld [vmem:[%s1 + $0x1c] sm:$0xf]
  %v38 = vld [vmem:[%s1 + $0x20] sm:$0xf]
  %v39 = vld [vmem:[%s1 + $0x24] sm:$0xf]
  %v40 = vld [vmem:[%s1 + $0x28] sm:$0xf]
  %v41 = vld [vmem:[%s1 + $0x2c] sm:$0xf]
  %v42 = vld [vmem:[%s1 + $0x30] sm:$0xf]
  %v43 = vld [vmem:[%s1 + $0x34] sm:$0xf]
  %v44 = vld [vmem:[%s1 + $0x38] sm:$0xf]
  %v45 = vld [vmem:[%s1 + $0x3c] sm:$0xf]
  %v46 = vld [vmem:[%s1 + $0x40] sm:$0xf]
  %v47 = vld [vmem:[%s1 + $0x44] sm:$0xf]
  %v48 = vld [vmem:[%s1 + $0x48] sm:$0xf]
  %v49 = vld [vmem:[%s1 + $0x4c] sm:$0xf]
  %v50 = vld [vmem:[%s1 + $0x50] sm:$0xf]
  %v51 = vld [vmem:[%s1 + $0x54] sm:$0xf]
  %v52 = vld [vmem:[%s1 + $0x58] sm:$0xf]
  %v53 = vld [vmem:[%s1 + $0x5c] sm:$0xf]
  %v54 = vld [vmem:[%s1 + $0x60] sm:$0xf]
  %v55 = vld [vmem:[%s1 + $0x64] sm:$0xf]
  %v56 = vld [vmem:[%s1 + $0x68] sm:$0xf]
  %v57 = vld [vmem:[%s1 + $0x6c] sm:$0xf]
  %v58 = vld [vmem:[%s1 + $0x70] sm:$0xf]
  %v59 = vld [vmem:[%s1 + $0x74] sm:$0xf]
  %v60 = vld [vmem:[%s1 + $0x78] sm:$0xf]
  %v61 = vld [vmem:[%s1 + $0x7c] sm:$0xf]
  %v62 = vld [vmem:[%s1 + $0x80] sm:$0xf]
  %v63 = vld [vmem:[%s1 + $0x84] sm:$0xf]
  %v64 = vld [vmem:[%s1 + $0x88] sm:$0xf]
  %v65 = vld [vmem:[%s1 + $0x8c] sm:$0xf]
  %v66 = vld [vmem:[%s1 + $0x90] sm:$0xf]
  %v67 = vld [vmem:[%s1 + $0x94] sm:$0xf]
  %v68 = vld [vmem:[%s1 + $0x98] sm:$0xf]
  %v69 = vld [vmem:[%s1 + $0x9c] sm:$0xf]
  %v70 = vld [vmem:[%s1 + $0xa0] sm:$0xf]
  %v71 = vld [vmem:[%s1 + $0xa4] sm:$0xf]
  %v72 = vld [vmem:[%s1 + $0xa8] sm:$0xf]
  %v73 = vld [vmem:[%s1 + $0xac] sm:$0xf]
  %v74 = vld [vmem:[%s1 + $0xb0] sm:$0xf]
  %v75 = vld [vmem:[%s1 + $0xb4] sm:$0xf]
  %v76 = vld [vmem:[%s1 + $0xb8] sm:$0xf]
  %v77 = vld [vmem:[%s1 + $0xbc] sm:$0xf]
  %v78 = vld [vmem:[%s1 + $0xc0] sm:$0xf]
  %v79 = vld [vmem:[%s1 + $0xc4] sm:$0xf]
  %v80 = vld [vmem:[%s1 + $0xc8] sm:$0xf]
  %v81 = vld [vmem:[%s1 + $0xcc] sm:$0xf]
  %v82 = vld [vmem:[%s1 + $0xd0] sm:$0xf]
  %v83 = vld [vmem:[%s1 + $0xd4] sm:$0xf]
  %v84 = vld [vmem:[%s1 + $0xd8] sm:$0xf]
  %v85 = vld [vmem:[%s1 + $0xdc] sm:$0xf]
  %v86 = vld [vmem:[%s1 + $0xe0] sm:$0xf]
  %v87 = vld [vmem:[%s1 + $0xe4] sm:$0xf]
  %v88 = vld [vmem:[%s1 + $0xe8] sm:$0xf]
  %v89 = vld [vmem:[%s1 + $0xec] sm:$0xf]
  %v90 = vld [vmem:[%s1 + $0xf0] sm:$0xf]
  %v91 = vld [vmem:[%s1 + $0xf4] sm:$0xf]
  %v92 = vld [vmem:[%s1 + $0xf8] sm:$0xf]
  %v93 = vld [vmem:[%s1 + $0xfc] sm:$0xf]
  %v94 = vld [vmem:[%s1 + $0x100] sm:$0xf]
  %v95 = vld [vmem:[%s1 + $0x104] sm:$0xf]
  %v96 = vld [vmem:[%s1 + $0x108] sm:$0xf]
  %v97 = vld [vmem:[%s1 + $0x10c] sm:$0xf]
  %v98 = vld [vmem:[%s1 + $0x110] sm:$0xf]
  %v99 = vld [vmem:[%s1 + $0x114] sm:$0xf]
  %v100 = vld [vmem:[%s1 + $0x118] sm:$0xf]
  %v101 = vld [vmem:[%s1 + $0x11c] sm:$0xf]
  %v102 = vld [vmem:[%s2] sm:$0x1]
  %v104 = vlaneseq
  %v105 = vshrl.u32 %v104, 7
  %v106 = vsub.s32 0, %v105
  %v107 = vrot.slane %v102, %v106
  %v121 = vunpack.c.l.b16 %v18
  %v122 = vunpack.c.h.b16 %v18
  %v123 = vunpack.c.l.b16 %v19
  %v124 = vunpack.c.h.b16 %v19
  %v125 = vunpack.c.l.b16 %v20
  %v126 = vunpack.c.l.b16 %v21
  %v127 = vunpack.c.h.b16 %v21
  %v128 = vunpack.c.l.b16 %v22
  %v129 = vunpack.c.h.b16 %v22
  %v130 = vunpack.c.l.b16 %v23
  %v131 = vunpack.c.l.b16 %v24
  %v132 = vunpack.c.h.b16 %v24
  %v133 = vunpack.c.l.b16 %v25
  %v134 = vunpack.c.h.b16 %v25
  %v135 = vunpack.c.l.b16 %v26
  %v136 = vunpack.c.l.b16 %v27
  %v137 = vunpack.c.h.b16 %v27
  %v138 = vunpack.c.l.b16 %v28
  %v139 = vunpack.c.h.b16 %v28
  %v140 = vunpack.c.l.b16 %v29
  %v141 = vpack.c.b16 %v126, %v121
  %v142 = vpack.c.b16 %v127, %v122
  %v143 = vpack.c.b16 %v128, %v123
  %v144 = vpack.c.b16 %v129, %v124
  %v145 = vpack.c.b16 %v130, %v125
  %v146 = vpack.c.b16 %v136, %v131
  %v147 = vpack.c.b16 %v137, %v132
  %v148 = vpack.c.b16 %v138, %v133
  %v149 = vpack.c.b16 %v139, %v134
  %v150 = vpack.c.b16 %v140, %v135
  %v231 = vunpack.c.l.b16 %v30
  %v232 = vunpack.c.l.b16 %v31
  %v233 = vunpack.c.l.b16 %v32
  %v234 = vunpack.c.l.b16 %v33
  %v235 = vunpack.c.l.b16 %v34
  %v236 = vunpack.c.l.b16 %v35
  %v237 = vunpack.c.l.b16 %v36
  %v238 = vunpack.c.l.b16 %v37
  %v239 = vunpack.c.l.b16 %v38
  %v240 = vunpack.c.l.b16 %v39
  %v241 = vunpack.c.l.b16 %v40
  %v242 = vunpack.c.l.b16 %v41
  %v243 = vunpack.c.l.b16 %v42
  %v244 = vunpack.c.l.b16 %v43
  %v245 = vunpack.c.l.b16 %v44
  %v246 = vunpack.c.l.b16 %v45
  %v247 = vunpack.c.l.b16 %v46
  %v248 = vunpack.c.l.b16 %v47
  %v249 = vunpack.c.l.b16 %v48
  %v250 = vunpack.c.l.b16 %v49
  %v251 = vunpack.c.l.b16 %v50
  %v252 = vunpack.c.l.b16 %v51
  %v253 = vunpack.c.l.b16 %v52
  %v254 = vunpack.c.l.b16 %v53
  %v255 = vunpack.c.l.b16 %v54
  %v256 = vunpack.c.l.b16 %v55
  %v257 = vunpack.c.l.b16 %v56
  %v258 = vunpack.c.l.b16 %v57
  %v259 = vunpack.c.l.b16 %v58
  %v260 = vunpack.c.l.b16 %v59
  %v261 = vunpack.c.l.b16 %v60
  %v262 = vunpack.c.l.b16 %v61
  %v263 = vunpack.c.l.b16 %v62
  %v264 = vunpack.c.l.b16 %v63
  %v265 = vunpack.c.l.b16 %v64
  %v266 = vunpack.c.l.b16 %v65
  %v267 = vunpack.c.l.b16 %v66
  %v268 = vunpack.c.l.b16 %v67
  %v269 = vunpack.c.l.b16 %v68
  %v270 = vunpack.c.l.b16 %v69
  %v271 = vunpack.c.l.b16 %v70
  %v272 = vunpack.c.l.b16 %v71
  %v273 = vunpack.c.l.b16 %v72
  %v274 = vunpack.c.l.b16 %v73
  %v275 = vunpack.c.l.b16 %v74
  %v276 = vunpack.c.l.b16 %v75
  %v277 = vunpack.c.l.b16 %v76
  %v278 = vunpack.c.l.b16 %v77
  %v279 = vunpack.c.l.b16 %v78
  %v280 = vunpack.c.l.b16 %v79
  %v281 = vunpack.c.l.b16 %v80
  %v282 = vunpack.c.l.b16 %v81
  %v283 = vunpack.c.l.b16 %v82
  %v284 = vunpack.c.l.b16 %v83
  %v285 = vunpack.c.l.b16 %v84
  %v286 = vunpack.c.l.b16 %v85
  %v287 = vunpack.c.l.b16 %v86
  %v288 = vunpack.c.l.b16 %v87
  %v289 = vunpack.c.l.b16 %v88
  %v290 = vunpack.c.l.b16 %v89
  %v291 = vunpack.c.l.b16 %v90
  %v292 = vunpack.c.l.b16 %v91
  %v293 = vunpack.c.l.b16 %v92
  %v294 = vunpack.c.l.b16 %v93
  %v295 = vunpack.c.l.b16 %v94
  %v296 = vunpack.c.l.b16 %v95
  %v297 = vunpack.c.l.b16 %v96
  %v298 = vunpack.c.l.b16 %v97
  %v299 = vunpack.c.l.b16 %v98
  %v300 = vunpack.c.l.b16 %v99
  %v301 = vunpack.c.l.b16 %v100
  %v302 = vunpack.c.l.b16 %v101
  %v303 = vpack.c.b16 %v232, %v231
  %v304 = vpack.c.b16 %v234, %v233
  %v305 = vpack.c.b16 %v236, %v235
  %v306 = vpack.c.b16 %v238, %v237
  %v307 = vpack.c.b16 %v240, %v239
  %v308 = vpack.c.b16 %v242, %v241
  %v309 = vpack.c.b16 %v244, %v243
  %v310 = vpack.c.b16 %v246, %v245
  %v311 = vpack.c.b16 %v248, %v247
  %v312 = vpack.c.b16 %v250, %v249
  %v313 = vpack.c.b16 %v252, %v251
  %v314 = vpack.c.b16 %v254, %v253
  %v315 = vpack.c.b16 %v256, %v255
  %v316 = vpack.c.b16 %v258, %v257
  %v317 = vpack.c.b16 %v260, %v259
  %v318 = vpack.c.b16 %v262, %v261
  %v319 = vpack.c.b16 %v264, %v263
  %v320 = vpack.c.b16 %v266, %v265
  %v321 = vpack.c.b16 %v268, %v267
  %v322 = vpack.c.b16 %v270, %v269
  %v323 = vpack.c.b16 %v272, %v271
  %v324 = vpack.c.b16 %v274, %v273
  %v325 = vpack.c.b16 %v276, %v275
  %v326 = vpack.c.b16 %v278, %v277
  %v327 = vpack.c.b16 %v280, %v279
  %v328 = vpack.c.b16 %v282, %v281
  %v329 = vpack.c.b16 %v284, %v283
  %v330 = vpack.c.b16 %v286, %v285
  %v331 = vpack.c.b16 %v288, %v287
  %v332 = vpack.c.b16 %v290, %v289
  %v333 = vpack.c.b16 %v292, %v291
  %v334 = vpack.c.b16 %v294, %v293
  %v335 = vpack.c.b16 %v296, %v295
  %v336 = vpack.c.b16 %v298, %v297
  %v337 = vpack.c.b16 %v300, %v299
  %v338 = vpack.c.b16 %v302, %v301
  %vm375 = vcmask 523264
  %v377 = vsel %vm375, %v145, 0
  %v380 = vsel %vm375, %v150, 0
  %382 = vmatprep.subr.bf16.mxu0 0
  %383 = vmatpush1.bf16.msra.mxu0 %v303
  %384 = vmatprep.subr.bf16.mxu0 0
  %385 = vmatpush1.bf16.msra.mxu0 %v304
  %386 = vmatprep.subr.bf16.mxu0 0
  %387 = vmatpush1.bf16.msra.mxu0 %v305
  %388 = vmatprep.subr.bf16.mxu0 0
  %389 = vmatpush1.bf16.msra.mxu0 %v306
  %390 = vmatprep.subr.bf16.mxu0 0
  %391 = vmatpush1.bf16.msra.mxu0 %v307
  %392 = vmatprep.subr.bf16.mxu0 0
  %393 = vmatpush1.bf16.msra.mxu0 %v308
  %394 = vmatprep.subr.bf16.mxu0 0
  %395 = vmatpush1.bf16.msra.mxu0 %v309
  %396 = vmatprep.subr.bf16.mxu0 0
  %397 = vmatpush1.bf16.msra.mxu0 %v310
  %398 = vmatprep.subr.bf16.mxu0 0
  %399 = vmatpush1.bf16.msra.mxu0 %v311
  %400 = vmatprep.subr.bf16.mxu0 0
  %401 = vmatpush1.bf16.msra.mxu0 %v312
  %402 = vmatprep.subr.bf16.mxu0 0
  %403 = vmatpush1.bf16.msra.mxu0 %v313
  %404 = vmatprep.subr.bf16.mxu0 0
  %405 = vmatpush1.bf16.msra.mxu0 %v314
  %406 = vmatprep.subr.bf16.mxu0 0
  %407 = vmatpush1.bf16.msra.mxu0 %v315
  %408 = vmatprep.subr.bf16.mxu0 0
  %409 = vmatpush1.bf16.msra.mxu0 %v316
  %410 = vmatprep.subr.bf16.mxu0 0
  %411 = vmatpush1.bf16.msra.mxu0 %v317
  %412 = vmatprep.subr.bf16.mxu0 0
  %413 = vmatpush1.bf16.msra.mxu0 %v318
  %414 = vmatprep.mubr.bf16.mxu0 %v142
  %415 = vmatmul.mubr.bf16.gmra.mrb[0].mxu0 %v141
  %v416 = vpop.f32.mrb[0].mxu0
  %v417 = vadd.f32 %v107, %v416
  %v418 = vpop.f32.mrb[0].mxu0
  %v419 = vpop.f32.mrb[0].mxu0
  %v420 = vadd.f32 %v107, %v419
  %v421 = vpop.f32.mrb[0].mxu0
  %422 = vmatprep.mubr.bf16.mxu0 %v147
  %423 = vmatmul.mubr.bf16.gmra.mrb[0].mxu0 %v146
  %v424 = vpop.f32.mrb[0].mxu0
  %v425 = vadd.f32 %v107, %v424
  %v426 = vpop.f32.mrb[0].mxu0
  %v427 = vpop.f32.mrb[0].mxu0
  %v428 = vadd.f32 %v107, %v427
  %v429 = vpop.f32.mrb[0].mxu0
  %430 = vdwg.mxu0
  %431 = vmatprep.subr.bf16.mxu0 0
  %432 = vmatpush1.bf16.msra.mxu0 %v319
  %433 = vmatprep.subr.bf16.mxu0 0
  %434 = vmatpush1.bf16.msra.mxu0 %v320
  %435 = vmatprep.subr.bf16.mxu0 0
  %436 = vmatpush1.bf16.msra.mxu0 %v321
  %437 = vmatprep.subr.bf16.mxu0 0
  %438 = vmatpush1.bf16.msra.mxu0 %v322
  %439 = vmatprep.subr.bf16.mxu0 0
  %440 = vmatpush1.bf16.msra.mxu0 %v323
  %441 = vmatprep.subr.bf16.mxu0 0
  %442 = vmatpush1.bf16.msra.mxu0 %v324
  %443 = vmatprep.subr.bf16.mxu0 0
  %444 = vmatpush1.bf16.msra.mxu0 %v325
  %445 = vmatprep.subr.bf16.mxu0 0
  %446 = vmatpush1.bf16.msra.mxu0 %v326
  %447 = vmatprep.subr.bf16.mxu0 0
  %448 = vmatpush1.bf16.msra.mxu0 %v327
  %449 = vmatprep.subr.bf16.mxu0 0
  %450 = vmatpush1.bf16.msra.mxu0 %v328
  %451 = vmatprep.subr.bf16.mxu0 0
  %452 = vmatpush1.bf16.msra.mxu0 %v329
  %453 = vmatprep.subr.bf16.mxu0 0
  %454 = vmatpush1.bf16.msra.mxu0 %v330
  %455 = vmatprep.subr.bf16.mxu0 0
  %456 = vmatpush1.bf16.msra.mxu0 %v331
  %457 = vmatprep.subr.bf16.mxu0 0
  %458 = vmatpush1.bf16.msra.mxu0 %v332
  %459 = vmatprep.subr.bf16.mxu0 0
  %460 = vmatpush1.bf16.msra.mxu0 %v333
  %461 = vmatprep.subr.bf16.mxu0 0
  %462 = vmatpush1.bf16.msra.mxu0 %v334
  %463 = vmatprep.mubr.bf16.mxu0 %v144
  %464 = vmatmul.mubr.bf16.gmra.mrb[0].mxu0 %v143
  %v465 = vpop.f32.mrb[0].mxu0
  %v466 = vadd.f32 %v417, %v465
  %v467 = vpop.f32.mrb[0].mxu0
  %v468 = vpop.f32.mrb[0].mxu0
  %v469 = vadd.f32 %v420, %v468
  %v470 = vpop.f32.mrb[0].mxu0
  %471 = vmatprep.mubr.bf16.mxu0 %v149
  %472 = vmatmul.mubr.bf16.gmra.mrb[0].mxu0 %v148
  %v473 = vpop.f32.mrb[0].mxu0
  %v474 = vadd.f32 %v425, %v473
  %v475 = vpop.f32.mrb[0].mxu0
  %v476 = vpop.f32.mrb[0].mxu0
  %v477 = vadd.f32 %v428, %v476
  %v478 = vpop.f32.mrb[0].mxu0
  %479 = vdwg.mxu0
  %480 = vmatprep.subr.bf16.mxu0 0
  %481 = vmatpush1.bf16.msra.mxu0 %v335
  %482 = vmatprep.subr.bf16.mxu0 0
  %483 = vmatpush1.bf16.msra.mxu0 %v336
  %484 = vmatprep.subr.bf16.mxu0 0
  %485 = vmatpush1.bf16.msra.mxu0 %v337
  %486 = vmatprep.subr.bf16.mxu0 0
  %487 = vmatpush1.bf16.msra.mxu0 %v338
  %488 = vmatprep.subr.bf16.mxu0 0
  %489 = vmatpush1.bf16.msra.mxu0 0
  %490 = vmatprep.subr.bf16.mxu0 0
  %491 = vmatpush1.bf16.msra.mxu0 0
  %492 = vmatprep.subr.bf16.mxu0 0
  %493 = vmatpush1.bf16.msra.mxu0 0
  %494 = vmatprep.subr.bf16.mxu0 0
  %495 = vmatpush1.bf16.msra.mxu0 0
  %496 = vmatprep.subr.bf16.mxu0 0
  %497 = vmatpush1.bf16.msra.mxu0 0
  %498 = vmatprep.subr.bf16.mxu0 0
  %499 = vmatpush1.bf16.msra.mxu0 0
  %500 = vmatprep.subr.bf16.mxu0 0
  %501 = vmatpush1.bf16.msra.mxu0 0
  %502 = vmatprep.subr.bf16.mxu0 0
  %503 = vmatpush1.bf16.msra.mxu0 0
  %504 = vmatprep.subr.bf16.mxu0 0
  %505 = vmatpush1.bf16.msra.mxu0 0
  %506 = vmatprep.subr.bf16.mxu0 0
  %507 = vmatpush1.bf16.msra.mxu0 0
  %508 = vmatprep.subr.bf16.mxu0 0
  %509 = vmatpush1.bf16.msra.mxu0 0
  %510 = vmatprep.subr.bf16.mxu0 0
  %511 = vmatpush1.bf16.msra.mxu0 0
  %512 = vmatprep.mubr.bf16.mxu0 0
  %513 = vmatmul.mubr.bf16.gmra.mrb[0].mxu0 %v377
  %v514 = vpop.f32.mrb[0].mxu0
  %v515 = vadd.f32 %v466, %v514
  %v516 = vpop.f32.mrb[0].mxu0
  %v517 = vpop.f32.mrb[0].mxu0
  %v518 = vadd.f32 %v469, %v517
  %v519 = vpop.f32.mrb[0].mxu0
  %520 = vmatprep.mubr.bf16.mxu0 0
  %521 = vmatmul.mubr.bf16.gmra.mrb[0].mxu0 %v380
  %v522 = vpop.f32.mrb[0].mxu0
  %v523 = vadd.f32 %v474, %v522
  %v524 = vpop.f32.mrb[0].mxu0
  %v525 = vpop.f32.mrb[0].mxu0
  %v526 = vadd.f32 %v477, %v525
  %v527 = vpop.f32.mrb[0].mxu0
  %528 = vdwg.mxu0
  %v529 = vld [vmem:[%s3] sm:$0xf]
  %v530 = vld [vmem:[%s3 + $0x4] sm:$0xf]
  %v531 = vld [vmem:[%s3 + $0x8] sm:$0xf]
  %v532 = vld [vmem:[%s3 + $0xc] sm:$0xf]
  %v533 = vunpack.c.l.bf16 %v529
  %v534 = vunpack.c.l.bf16 %v530
  %v535 = vunpack.c.l.bf16 %v531
  %v536 = vunpack.c.l.bf16 %v532
  %v537 = vadd.f32 %v515, %v533
  %v538 = vadd.f32 %v518, %v534
  %v539 = vadd.f32 %v523, %v535
  %v540 = vadd.f32 %v526, %v536
  %v541 = vmax.f32 %v537, 0.0
  %v542 = vmax.f32 %v538, 0.0
  %v543 = vmax.f32 %v539, 0.0
  %v544 = vmax.f32 %v540, 0.0
  %v545 = vpack.c.bf16 %v542, %v541
  %v546 = vpack.c.bf16 %v544, %v543
  %v549 = vunpack.c.l.b16 %v545
  %v550 = vunpack.c.h.b16 %v545
  %v551 = vunpack.c.l.b16 %v546
  %v552 = vunpack.c.h.b16 %v546
  %v553 = vpack.c.b16 %v549, %v549
  %v554 = vpack.c.b16 %v550, %v550
  %v555 = vpack.c.b16 %v551, %v551
  %v556 = vpack.c.b16 %v552, %v552
  %561 = vst [vmem:[%s4] sm:$0xf] %v553
  %562 = vst [vmem:[%s4 + $0x4] sm:$0xf] %v554
  %563 = vst [vmem:[%s4 + $0x8] sm:$0xf] %v555
  %564 = vst [vmem:[%s4 + $0xc] sm:$0xf] %v556
  // Predicated region
  $region18: #{resnet_mvm_forward.13} parent=0 // pred_check
    _
  $region19: #{resnet_mvm_forward.13} parent=0 // pred_check_branch
    %566 = sbr.rel (0) target = $region21
  $region20: #{resnet_mvm_forward.13} parent=0 // pred_region
    _
  $region21: #{resnet_mvm_forward.13} parent=0 // pred_fallthru
    _
  // Predicated region
  $region22: #{resnet_mvm_forward.13} parent=0 // pred_check
    _
  $region23: #{resnet_mvm_forward.13} parent=0 // pred_check_branch
    %568 = sbr.rel (0) target = $region25
  $region24: #{resnet_mvm_forward.13} parent=0 // pred_region
    _
  $region25: #{resnet_mvm_forward.13} parent=0 // pred_fallthru
    _

</llo_original>
